<compile_context>
chip_gen: v7x
topology: tpu7x:2x2x1
jax: 0.10.0
libtpu: 0.0.40
codegen_flags: <defaults>
</compile_context>

<pallas_src>
import jax
import jax.numpy as jnp
import numpy as np
from jax.experimental import pallas as pl
from jax.experimental.pallas import tpu as pltpu

BN_EPS = 1e-5
POOL_KS = (5, 9, 13)   # SPP kernel sizes; cascade below relies on 5 -> 9 -> 13


# ---------------------------------------------------------------------------
# Fused SPP kernel: cv1 (+BN+SiLU) -> pool5 cascade -> cv2 (+BN+SiLU)
# ---------------------------------------------------------------------------
def _spp_fused_kernel(x_ref, w1_ref, b1_ref, w2_ref, b2_ref, o_ref,
                      hpad_ref, wpad_ref):
    # x_ref : (1, H, W, C1)  bf16  NHWC input block (one image)
    # w1_ref: (C1, c_)       bf16  cv1 weight, BN scale folded in
    # b1_ref: (1, c_)        f32   cv1 folded BN bias
    # w2_ref: (4, c_, C2)    bf16  cv2 weight split per concat branch, BN folded
    # b2_ref: (1, C2)        f32   cv2 folded BN bias
    # o_ref : (1, H, W, C2)  f32
    # hpad_ref: (H+4, W, c_) f32 scratch (H-axis -inf padding, reused)
    # wpad_ref: (H, W+4, c_) f32 scratch (W-axis -inf padding, reused)
    h = hpad_ref.shape[0] - 4
    w = wpad_ref.shape[1] - 4
    c1 = x_ref.shape[-1]
    c_ = w1_ref.shape[1]
    c2 = o_ref.shape[-1]
    hw = h * w

    # ---- cv1: 1x1 conv (per-pixel matmul) + folded-BN bias + SiLU ----------
    x = x_ref[0].reshape(hw, c1)                                     # bf16
    y = jnp.dot(x, w1_ref[...], preferred_element_type=jnp.float32)  # (HW, c_)
    y = y + b1_ref[...]
    y = y * jax.nn.sigmoid(y)                                        # SiLU, f32

    # ---- -inf borders of the reused pooling scratch (interior rewritten
    #      every cascade stage; borders stay -inf, written once) -------------
    hpad_ref[0:2, :, :] = jnp.full((2, w, c_), -jnp.inf, jnp.float32)
    hpad_ref[h + 2:h + 4, :, :] = jnp.full((2, w, c_), -jnp.inf, jnp.float32)
    wpad_ref[:, 0:2, :] = jnp.full((h, 2, c_), -jnp.inf, jnp.float32)
    wpad_ref[:, w + 2:w + 4, :] = jnp.full((h, 2, c_), -jnp.inf, jnp.float32)

    def pool5(src):
        """k=5, stride-1, SAME max pool (separable, -inf padded, tree max)."""
        hpad_ref[2:h + 2, :, :] = src
        a = jnp.maximum(hpad_ref[0:h, :, :], hpad_ref[1:h + 1, :, :])
        b = jnp.maximum(hpad_ref[2:h + 2, :, :], hpad_ref[3:h + 3, :, :])
        t = jnp.maximum(jnp.maximum(a, b), hpad_ref[4:h + 4, :, :])
        wpad_ref[:, 2:w + 2, :] = t
        a = jnp.maximum(wpad_ref[:, 0:w, :], wpad_ref[:, 1:w + 1, :])
        b = jnp.maximum(wpad_ref[:, 2:w + 2, :], wpad_ref[:, 3:w + 3, :])
        return jnp.maximum(jnp.maximum(a, b), wpad_ref[:, 4:w + 4, :])

    # ---- cv2 fused over the 4 concat branches (no 4c_ tensor anywhere),
    #      interleaved with the SPPF cascade (pool5 cascade == k=5/9/13) -----
    def mm(branch_flat, i):
        return jnp.dot(branch_flat.astype(jnp.bfloat16), w2_ref[i],
                       preferred_element_type=jnp.float32)           # (HW, C2)

    acc = mm(y, 0)
    p = y.reshape(h, w, c_)
    for i in range(1, len(POOL_KS) + 1):
        p = pool5(p)                       # p5, p9, p13 successively
        acc = acc + mm(p.reshape(hw, c_), i)

    z = acc + b2_ref[...]
    z = z * jax.nn.sigmoid(z)
    o_ref[0] = z.reshape(h, w, c2).astype(o_ref.dtype)


def spp_fused_nhwc(x_nhwc, w1, b1, w2, b2):
    """(N, H, W, C1) bf16 -> (N, H, W, C2) f32, whole SPP per grid step."""
    n, h, w, c1 = x_nhwc.shape
    c_ = w1.shape[1]
    c2 = w2.shape[2]
    return pl.pallas_call(
        _spp_fused_kernel,
        out_shape=jax.ShapeDtypeStruct((n, h, w, c2), jnp.float32),
        grid=(n,),
        in_specs=[
            pl.BlockSpec((1, h, w, c1), lambda b: (b, 0, 0, 0)),
            pl.BlockSpec((c1, c_), lambda b: (0, 0)),
            pl.BlockSpec((1, c_), lambda b: (0, 0)),
            pl.BlockSpec((4, c_, c2), lambda b: (0, 0, 0)),
            pl.BlockSpec((1, c2), lambda b: (0, 0)),
        ],
        out_specs=pl.BlockSpec((1, h, w, c2), lambda b: (b, 0, 0, 0)),
        scratch_shapes=[
            pltpu.VMEM((h + 4, w, c_), jnp.float32),   # H-axis padded scratch
            pltpu.VMEM((h, w + 4, c_), jnp.float32),   # W-axis padded scratch
        ],
        compiler_params=pltpu.CompilerParams(
            dimension_semantics=("parallel",),
            # Headroom for real YOLO SPP shapes (~30 MiB live); within v7x's
            # 64 MiB physical VMEM.
            vmem_limit_bytes=64 * 1024 * 1024,
        ),
    )(x_nhwc, w1, b1, w2, b2)


# ---------------------------------------------------------------------------
# SPP forward (wrapper glue: layout + cast only)
# ---------------------------------------------------------------------------
@jax.jit
def spp_forward(x_nchw, params):
    # Transpose + bf16 cast fuse in XLA; halves the kernel's input DMA.
    x = jnp.transpose(x_nchw, (0, 2, 3, 1)).astype(jnp.bfloat16)   # NCHW->NHWC
    z = spp_fused_nhwc(x, params["w1"], params["b1"], params["w2"], params["b2"])
    return jnp.transpose(z, (0, 3, 1, 2))                          # NHWC->NCHW


# ---------------------------------------------------------------------------
# Deterministic parameter construction (raw f32, BN in eval mode) and the
# kernel-side preparation (fold BN scale into weights, cast to bf16, split w2).
# ---------------------------------------------------------------------------
def make_params(c1, c2, key):
    c_ = c1 // 2
    c_cat = c_ * (len(POOL_KS) + 1)
    ks = jax.random.split(key, 4)

    def bn(k, c):
        kg, kb, km, kv = jax.random.split(k, 4)
        gamma = 1.0 + 0.1 * jax.random.normal(kg, (c,), jnp.float32)
        beta = 0.1 * jax.random.normal(kb, (c,), jnp.float32)
        mean = 0.1 * jax.random.normal(km, (c,), jnp.float32)
        var = 1.0 + 0.5 * jnp.abs(jax.random.normal(kv, (c,), jnp.float32))
        scale = gamma / jnp.sqrt(var + BN_EPS)
        bias = beta - mean * scale
        return scale.reshape(1, c), bias.reshape(1, c)

    # torch conv weight (cout, cin, 1, 1) == matmul weight (cin, cout) here.
    w1 = 0.2 * jax.random.normal(ks[0], (c1, c_), jnp.float32)
    w2 = 0.2 * jax.random.normal(ks[1], (c_cat, c2), jnp.float32)
    s1, b1 = bn(ks[2], c_)
    s2, b2 = bn(ks[3], c2)
    return {"w1": w1, "s1": s1, "b1": b1, "w2": w2, "s2": s2, "b2": b2}


def prepare_kernel_params(raw):
    c_ = raw["w1"].shape[1]
    c2 = raw["w2"].shape[1]
    w1 = (raw["w1"] * raw["s1"]).astype(jnp.bfloat16)              # (C1, c_)
    w2 = (raw["w2"] * raw["s2"]).astype(jnp.bfloat16)              # (4c_, C2)
    w2 = w2.reshape(len(POOL_KS) + 1, c_, c2)                      # (4, c_, C2)
    return {"w1": w1, "b1": raw["b1"], "w2": w2, "b2": raw["b2"]}


# ---------------------------------------------------------------------------
# Pure-JAX f32 reference (independent k=5/9/13 pools — checks the cascade too)
# ---------------------------------------------------------------------------
def _ref_maxpool_nhwc(x, k):
    p = k // 2
    _, h, w, _ = x.shape
    xp = jnp.pad(x, ((0, 0), (p, p), (p, p), (0, 0)), constant_values=-jnp.inf)
    out = jnp.full_like(x, -jnp.inf)
    for di in range(k):
        for dj in range(k):
            out = jnp.maximum(out, xp[:, di:di + h, dj:dj + w, :])
    return out


def ref_spp(x_nchw, raw):
    x = jnp.transpose(x_nchw, (0, 2, 3, 1))
    y = jnp.einsum("nhwc,cd->nhwd", x, raw["w1"])
    y = y * raw["s1"][0] + raw["b1"][0]
    y = y * jax.nn.sigmoid(y)
    cat = jnp.concatenate([y] + [_ref_maxpool_nhwc(y, k) for k in POOL_KS], -1)
    z = jnp.einsum("nhwc,cd->nhwd", cat, raw["w2"])
    z = z * raw["s2"][0] + raw["b2"][0]
    z = z * jax.nn.sigmoid(z)
    return jnp.transpose(z, (0, 3, 1, 2))


if __name__ == "__main__":
    key = jax.random.PRNGKey(0)
    kx, kp = jax.random.split(key)

    N, C1, H, W = 2, 4, 16, 16      # c_ = 2, concat channels = 8
    C2 = 8
    x = jax.random.normal(kx, (N, C1, H, W), jnp.float32)
    raw = make_params(C1, C2, kp)
    kparams = prepare_kernel_params(raw)

    out = jax.block_until_ready(spp_forward(x, kparams))
    assert out.shape == (N, C2, H, W), out.shape

    ref = jax.block_until_ready(ref_spp(x, raw))
    # bf16 matmul operands (f32 accumulation / epilogue) -> relaxed tolerance.
    np.testing.assert_allclose(np.asarray(out), np.asarray(ref),
                               rtol=5e-2, atol=5e-2)
    print("KERNEL_OK")
</pallas_src>

<mosaic_0001>
module attributes {stable_mosaic.version = 11 : i64} {
  func.func @_spp_fused_kernel(%arg0: i32, %arg1: memref<1x16x16x4xbf16, #tpu.memory_space<vmem>>, %arg2: memref<4x2xbf16, #tpu.memory_space<vmem>>, %arg3: memref<1x2xf32, #tpu.memory_space<vmem>>, %arg4: memref<4x2x8xbf16, #tpu.memory_space<vmem>>, %arg5: memref<1x8xf32, #tpu.memory_space<vmem>>, %arg6: memref<1x16x16x8xf32, #tpu.memory_space<vmem>>, %arg7: memref<20x16x2xf32, #tpu.memory_space<vmem>>, %arg8: memref<16x20x2xf32, #tpu.memory_space<vmem>>) attributes {dimension_semantics = [#tpu.dimension_semantics<parallel>], iteration_bounds = array<i64: 2>, scalar_prefetch = 0 : i64, scratch_operands = 2 : i64, tpu.core_type = #tpu.core_type<tc>, window_params = [{transform_indices = @transform_0, window_bounds = array<i64: 1, 16, 16, 4>}, {pipeline_mode = #tpu.pipeline_mode<synchronous>, transform_indices = @transform_1, window_bounds = array<i64: 4, 2>}, {pipeline_mode = #tpu.pipeline_mode<synchronous>, transform_indices = @transform_2, window_bounds = array<i64: 1, 2>}, {pipeline_mode = #tpu.pipeline_mode<synchronous>, transform_indices = @transform_3, window_bounds = array<i64: 4, 2, 8>}, {pipeline_mode = #tpu.pipeline_mode<synchronous>, transform_indices = @transform_4, window_bounds = array<i64: 1, 8>}, {transform_indices = @transform_5, window_bounds = array<i64: 1, 16, 16, 8>}]} {
    %c0 = arith.constant 0 : index
    %c0_0 = arith.constant 0 : index
    %c0_1 = arith.constant 0 : index
    %c0_2 = arith.constant 0 : index
    %0 = vector.load %arg1[%c0, %c0_0, %c0_1, %c0_2] : memref<1x16x16x4xbf16, #tpu.memory_space<vmem>>, vector<1x16x16x4xbf16>
    %1 = vector.shape_cast %0 : vector<1x16x16x4xbf16> to vector<16x16x4xbf16>
    %2 = vector.shape_cast %1 : vector<16x16x4xbf16> to vector<256x4xbf16>
    %c0_3 = arith.constant 0 : index
    %c0_4 = arith.constant 0 : index
    %3 = vector.load %arg2[%c0_3, %c0_4] : memref<4x2xbf16, #tpu.memory_space<vmem>>, vector<4x2xbf16>
    %cst = arith.constant dense<0.000000e+00> : vector<256x2xf32>
    %4 = tpu.matmul %2, %3, %cst {dimension_numbers = #tpu.dot_dimension_numbers<[1], [0], [0], [1], [0, 0, 1, 1], [], []>} : vector<256x4xbf16>, vector<4x2xbf16>, vector<256x2xf32> -> vector<256x2xf32>
    %c0_5 = arith.constant 0 : index
    %c0_6 = arith.constant 0 : index
    %5 = vector.load %arg3[%c0_5, %c0_6] : memref<1x2xf32, #tpu.memory_space<vmem>>, vector<1x2xf32>
    %6 = vector.broadcast %5 : vector<1x2xf32> to vector<256x2xf32>
    %7 = arith.addf %4, %6 : vector<256x2xf32>
    %8 = arith.negf %7 : vector<256x2xf32>
    %9 = math.exp %8 : vector<256x2xf32>
    %cst_7 = arith.constant 1.000000e+00 : f32
    %10 = vector.broadcast %cst_7 : f32 to vector<256x2xf32>
    %11 = arith.addf %10, %9 : vector<256x2xf32>
    %12 = arith.divf %10, %11 : vector<256x2xf32>
    %13 = arith.mulf %7, %12 : vector<256x2xf32>
    %cst_8 = arith.constant 0xFF800000 : f32
    %14 = vector.broadcast %cst_8 : f32 to vector<2x16x2xf32>
    %c0_9 = arith.constant 0 : index
    %c0_10 = arith.constant 0 : index
    %c0_11 = arith.constant 0 : index
    %15 = vector.load %arg7[%c0_9, %c0_10, %c0_11] : memref<20x16x2xf32, #tpu.memory_space<vmem>>, vector<2x16x2xf32>
    tpu.vector_store %arg7[%c0_9, %c0_10, %c0_11], %14 {strides = array<i32>} : memref<20x16x2xf32, #tpu.memory_space<vmem>>, vector<2x16x2xf32>,
    %cst_12 = arith.constant 0xFF800000 : f32
    %16 = vector.broadcast %cst_12 : f32 to vector<2x16x2xf32>
    %c18 = arith.constant 18 : index
    %c0_13 = arith.constant 0 : index
    %c0_14 = arith.constant 0 : index
    %17 = vector.load %arg7[%c18, %c0_13, %c0_14] : memref<20x16x2xf32, #tpu.memory_space<vmem>>, vector<2x16x2xf32>
    tpu.vector_store %arg7[%c18, %c0_13, %c0_14], %16 {strides = array<i32>} : memref<20x16x2xf32, #tpu.memory_space<vmem>>, vector<2x16x2xf32>,
    %cst_15 = arith.constant 0xFF800000 : f32
    %18 = vector.broadcast %cst_15 : f32 to vector<16x2x2xf32>
    %c0_16 = arith.constant 0 : index
    %c0_17 = arith.constant 0 : index
    %c0_18 = arith.constant 0 : index
    %19 = vector.load %arg8[%c0_16, %c0_17, %c0_18] : memref<16x20x2xf32, #tpu.memory_space<vmem>>, vector<16x2x2xf32>
    tpu.vector_store %arg8[%c0_16, %c0_17, %c0_18], %18 {strides = array<i32>} : memref<16x20x2xf32, #tpu.memory_space<vmem>>, vector<16x2x2xf32>,
    %cst_19 = arith.constant 0xFF800000 : f32
    %20 = vector.broadcast %cst_19 : f32 to vector<16x2x2xf32>
    %c0_20 = arith.constant 0 : index
    %c18_21 = arith.constant 18 : index
    %c0_22 = arith.constant 0 : index
    %21 = vector.load %arg8[%c0_20, %c18_21, %c0_22] : memref<16x20x2xf32, #tpu.memory_space<vmem>>, vector<16x2x2xf32>
    tpu.vector_store %arg8[%c0_20, %c18_21, %c0_22], %20 {strides = array<i32>} : memref<16x20x2xf32, #tpu.memory_space<vmem>>, vector<16x2x2xf32>,
    %22 = arith.truncf %13 : vector<256x2xf32> to vector<256x2xbf16>
    %c0_23 = arith.constant 0 : index
    %c0_24 = arith.constant 0 : index
    %c0_25 = arith.constant 0 : index
    %23 = vector.load %arg4[%c0_23, %c0_24, %c0_25] : memref<4x2x8xbf16, #tpu.memory_space<vmem>>, vector<1x2x8xbf16>
    %24 = vector.shape_cast %23 : vector<1x2x8xbf16> to vector<2x8xbf16>
    %cst_26 = arith.constant dense<0.000000e+00> : vector<256x8xf32>
    %25 = tpu.matmul %22, %24, %cst_26 {dimension_numbers = #tpu.dot_dimension_numbers<[1], [0], [0], [1], [0, 0, 1, 1], [], []>} : vector<256x2xbf16>, vector<2x8xbf16>, vector<256x8xf32> -> vector<256x8xf32>
    %26 = vector.shape_cast %13 : vector<256x2xf32> to vector<16x16x2xf32>
    %c2 = arith.constant 2 : index
    %c0_27 = arith.constant 0 : index
    %c0_28 = arith.constant 0 : index
    %27 = vector.load %arg7[%c2, %c0_27, %c0_28] : memref<20x16x2xf32, #tpu.memory_space<vmem>>, vector<16x16x2xf32>
    tpu.vector_store %arg7[%c2, %c0_27, %c0_28], %26 {strides = array<i32>} : memref<20x16x2xf32, #tpu.memory_space<vmem>>, vector<16x16x2xf32>,
    %c0_29 = arith.constant 0 : index
    %c0_30 = arith.constant 0 : index
    %c0_31 = arith.constant 0 : index
    %28 = vector.load %arg7[%c0_29, %c0_30, %c0_31] : memref<20x16x2xf32, #tpu.memory_space<vmem>>, vector<16x16x2xf32>
    %c1 = arith.constant 1 : index
    %c0_32 = arith.constant 0 : index
    %c0_33 = arith.constant 0 : index
    %29 = vector.load %arg7[%c1, %c0_32, %c0_33] : memref<20x16x2xf32, #tpu.memory_space<vmem>>, vector<16x16x2xf32>
    %30 = arith.maximumf %28, %29 : vector<16x16x2xf32>
    %c2_34 = arith.constant 2 : index
    %c0_35 = arith.constant 0 : index
    %c0_36 = arith.constant 0 : index
    %31 = vector.load %arg7[%c2_34, %c0_35, %c0_36] : memref<20x16x2xf32, #tpu.memory_space<vmem>>, vector<16x16x2xf32>
    %c3 = arith.constant 3 : index
    %c0_37 = arith.constant 0 : index
    %c0_38 = arith.constant 0 : index
    %32 = vector.load %arg7[%c3, %c0_37, %c0_38] : memref<20x16x2xf32, #tpu.memory_space<vmem>>, vector<16x16x2xf32>
    %33 = arith.maximumf %31, %32 : vector<16x16x2xf32>
    %34 = arith.maximumf %30, %33 : vector<16x16x2xf32>
    %c4 = arith.constant 4 : index
    %c0_39 = arith.constant 0 : index
    %c0_40 = arith.constant 0 : index
    %35 = vector.load %arg7[%c4, %c0_39, %c0_40] : memref<20x16x2xf32, #tpu.memory_space<vmem>>, vector<16x16x2xf32>
    %36 = arith.maximumf %34, %35 : vector<16x16x2xf32>
    %c0_41 = arith.constant 0 : index
    %c2_42 = arith.constant 2 : index
    %c0_43 = arith.constant 0 : index
    %37 = vector.load %arg8[%c0_41, %c2_42, %c0_43] : memref<16x20x2xf32, #tpu.memory_space<vmem>>, vector<16x16x2xf32>
    tpu.vector_store %arg8[%c0_41, %c2_42, %c0_43], %36 {strides = array<i32>} : memref<16x20x2xf32, #tpu.memory_space<vmem>>, vector<16x16x2xf32>,
    %c0_44 = arith.constant 0 : index
    %c0_45 = arith.constant 0 : index
    %c0_46 = arith.constant 0 : index
    %38 = vector.load %arg8[%c0_44, %c0_45, %c0_46] : memref<16x20x2xf32, #tpu.memory_space<vmem>>, vector<16x16x2xf32>
    %c0_47 = arith.constant 0 : index
    %c1_48 = arith.constant 1 : index
    %c0_49 = arith.constant 0 : index
    %39 = vector.load %arg8[%c0_47, %c1_48, %c0_49] : memref<16x20x2xf32, #tpu.memory_space<vmem>>, vector<16x16x2xf32>
    %40 = arith.maximumf %38, %39 : vector<16x16x2xf32>
    %c0_50 = arith.constant 0 : index
    %c2_51 = arith.constant 2 : index
    %c0_52 = arith.constant 0 : index
    %41 = vector.load %arg8[%c0_50, %c2_51, %c0_52] : memref<16x20x2xf32, #tpu.memory_space<vmem>>, vector<16x16x2xf32>
    %c0_53 = arith.constant 0 : index
    %c3_54 = arith.constant 3 : index
    %c0_55 = arith.constant 0 : index
    %42 = vector.load %arg8[%c0_53, %c3_54, %c0_55] : memref<16x20x2xf32, #tpu.memory_space<vmem>>, vector<16x16x2xf32>
    %43 = arith.maximumf %41, %42 : vector<16x16x2xf32>
    %44 = arith.maximumf %40, %43 : vector<16x16x2xf32>
    %c0_56 = arith.constant 0 : index
    %c4_57 = arith.constant 4 : index
    %c0_58 = arith.constant 0 : index
    %45 = vector.load %arg8[%c0_56, %c4_57, %c0_58] : memref<16x20x2xf32, #tpu.memory_space<vmem>>, vector<16x16x2xf32>
    %46 = arith.maximumf %44, %45 : vector<16x16x2xf32>
    %47 = vector.shape_cast %46 : vector<16x16x2xf32> to vector<256x2xf32>
    %48 = arith.truncf %47 : vector<256x2xf32> to vector<256x2xbf16>
    %c1_59 = arith.constant 1 : index
    %c0_60 = arith.constant 0 : index
    %c0_61 = arith.constant 0 : index
    %49 = vector.load %arg4[%c1_59, %c0_60, %c0_61] : memref<4x2x8xbf16, #tpu.memory_space<vmem>>, vector<1x2x8xbf16>
    %50 = vector.shape_cast %49 : vector<1x2x8xbf16> to vector<2x8xbf16>
    %cst_62 = arith.constant dense<0.000000e+00> : vector<256x8xf32>
    %51 = tpu.matmul %48, %50, %cst_62 {dimension_numbers = #tpu.dot_dimension_numbers<[1], [0], [0], [1], [0, 0, 1, 1], [], []>} : vector<256x2xbf16>, vector<2x8xbf16>, vector<256x8xf32> -> vector<256x8xf32>
    %52 = arith.addf %25, %51 : vector<256x8xf32>
    %c2_63 = arith.constant 2 : index
    %c0_64 = arith.constant 0 : index
    %c0_65 = arith.constant 0 : index
    %53 = vector.load %arg7[%c2_63, %c0_64, %c0_65] : memref<20x16x2xf32, #tpu.memory_space<vmem>>, vector<16x16x2xf32>
    tpu.vector_store %arg7[%c2_63, %c0_64, %c0_65], %46 {strides = array<i32>} : memref<20x16x2xf32, #tpu.memory_space<vmem>>, vector<16x16x2xf32>,
    %c0_66 = arith.constant 0 : index
    %c0_67 = arith.constant 0 : index
    %c0_68 = arith.constant 0 : index
    %54 = vector.load %arg7[%c0_66, %c0_67, %c0_68] : memref<20x16x2xf32, #tpu.memory_space<vmem>>, vector<16x16x2xf32>
    %c1_69 = arith.constant 1 : index
    %c0_70 = arith.constant 0 : index
    %c0_71 = arith.constant 0 : index
    %55 = vector.load %arg7[%c1_69, %c0_70, %c0_71] : memref<20x16x2xf32, #tpu.memory_space<vmem>>, vector<16x16x2xf32>
    %56 = arith.maximumf %54, %55 : vector<16x16x2xf32>
    %c2_72 = arith.constant 2 : index
    %c0_73 = arith.constant 0 : index
    %c0_74 = arith.constant 0 : index
    %57 = vector.load %arg7[%c2_72, %c0_73, %c0_74] : memref<20x16x2xf32, #tpu.memory_space<vmem>>, vector<16x16x2xf32>
    %c3_75 = arith.constant 3 : index
    %c0_76 = arith.constant 0 : index
    %c0_77 = arith.constant 0 : index
    %58 = vector.load %arg7[%c3_75, %c0_76, %c0_77] : memref<20x16x2xf32, #tpu.memory_space<vmem>>, vector<16x16x2xf32>
    %59 = arith.maximumf %57, %58 : vector<16x16x2xf32>
    %60 = arith.maximumf %56, %59 : vector<16x16x2xf32>
    %c4_78 = arith.constant 4 : index
    %c0_79 = arith.constant 0 : index
    %c0_80 = arith.constant 0 : index
    %61 = vector.load %arg7[%c4_78, %c0_79, %c0_80] : memref<20x16x2xf32, #tpu.memory_space<vmem>>, vector<16x16x2xf32>
    %62 = arith.maximumf %60, %61 : vector<16x16x2xf32>
    %c0_81 = arith.constant 0 : index
    %c2_82 = arith.constant 2 : index
    %c0_83 = arith.constant 0 : index
    %63 = vector.load %arg8[%c0_81, %c2_82, %c0_83] : memref<16x20x2xf32, #tpu.memory_space<vmem>>, vector<16x16x2xf32>
    tpu.vector_store %arg8[%c0_81, %c2_82, %c0_83], %62 {strides = array<i32>} : memref<16x20x2xf32, #tpu.memory_space<vmem>>, vector<16x16x2xf32>,
    %c0_84 = arith.constant 0 : index
    %c0_85 = arith.constant 0 : index
    %c0_86 = arith.constant 0 : index
    %64 = vector.load %arg8[%c0_84, %c0_85, %c0_86] : memref<16x20x2xf32, #tpu.memory_space<vmem>>, vector<16x16x2xf32>
    %c0_87 = arith.constant 0 : index
    %c1_88 = arith.constant 1 : index
    %c0_89 = arith.constant 0 : index
    %65 = vector.load %arg8[%c0_87, %c1_88, %c0_89] : memref<16x20x2xf32, #tpu.memory_space<vmem>>, vector<16x16x2xf32>
    %66 = arith.maximumf %64, %65 : vector<16x16x2xf32>
    %c0_90 = arith.constant 0 : index
    %c2_91 = arith.constant 2 : index
    %c0_92 = arith.constant 0 : index
    %67 = vector.load %arg8[%c0_90, %c2_91, %c0_92] : memref<16x20x2xf32, #tpu.memory_space<vmem>>, vector<16x16x2xf32>
    %c0_93 = arith.constant 0 : index
    %c3_94 = arith.constant 3 : index
    %c0_95 = arith.constant 0 : index
    %68 = vector.load %arg8[%c0_93, %c3_94, %c0_95] : memref<16x20x2xf32, #tpu.memory_space<vmem>>, vector<16x16x2xf32>
    %69 = arith.maximumf %67, %68 : vector<16x16x2xf32>
    %70 = arith.maximumf %66, %69 : vector<16x16x2xf32>
    %c0_96 = arith.constant 0 : index
    %c4_97 = arith.constant 4 : index
    %c0_98 = arith.constant 0 : index
    %71 = vector.load %arg8[%c0_96, %c4_97, %c0_98] : memref<16x20x2xf32, #tpu.memory_space<vmem>>, vector<16x16x2xf32>
    %72 = arith.maximumf %70, %71 : vector<16x16x2xf32>
    %73 = vector.shape_cast %72 : vector<16x16x2xf32> to vector<256x2xf32>
    %74 = arith.truncf %73 : vector<256x2xf32> to vector<256x2xbf16>
    %c2_99 = arith.constant 2 : index
    %c0_100 = arith.constant 0 : index
    %c0_101 = arith.constant 0 : index
    %75 = vector.load %arg4[%c2_99, %c0_100, %c0_101] : memref<4x2x8xbf16, #tpu.memory_space<vmem>>, vector<1x2x8xbf16>
    %76 = vector.shape_cast %75 : vector<1x2x8xbf16> to vector<2x8xbf16>
    %cst_102 = arith.constant dense<0.000000e+00> : vector<256x8xf32>
    %77 = tpu.matmul %74, %76, %cst_102 {dimension_numbers = #tpu.dot_dimension_numbers<[1], [0], [0], [1], [0, 0, 1, 1], [], []>} : vector<256x2xbf16>, vector<2x8xbf16>, vector<256x8xf32> -> vector<256x8xf32>
    %78 = arith.addf %52, %77 : vector<256x8xf32>
    %c2_103 = arith.constant 2 : index
    %c0_104 = arith.constant 0 : index
    %c0_105 = arith.constant 0 : index
    %79 = vector.load %arg7[%c2_103, %c0_104, %c0_105] : memref<20x16x2xf32, #tpu.memory_space<vmem>>, vector<16x16x2xf32>
    tpu.vector_store %arg7[%c2_103, %c0_104, %c0_105], %72 {strides = array<i32>} : memref<20x16x2xf32, #tpu.memory_space<vmem>>, vector<16x16x2xf32>,
    %c0_106 = arith.constant 0 : index
    %c0_107 = arith.constant 0 : index
    %c0_108 = arith.constant 0 : index
    %80 = vector.load %arg7[%c0_106, %c0_107, %c0_108] : memref<20x16x2xf32, #tpu.memory_space<vmem>>, vector<16x16x2xf32>
    %c1_109 = arith.constant 1 : index
    %c0_110 = arith.constant 0 : index
    %c0_111 = arith.constant 0 : index
    %81 = vector.load %arg7[%c1_109, %c0_110, %c0_111] : memref<20x16x2xf32, #tpu.memory_space<vmem>>, vector<16x16x2xf32>
    %82 = arith.maximumf %80, %81 : vector<16x16x2xf32>
    %c2_112 = arith.constant 2 : index
    %c0_113 = arith.constant 0 : index
    %c0_114 = arith.constant 0 : index
    %83 = vector.load %arg7[%c2_112, %c0_113, %c0_114] : memref<20x16x2xf32, #tpu.memory_space<vmem>>, vector<16x16x2xf32>
    %c3_115 = arith.constant 3 : index
    %c0_116 = arith.constant 0 : index
    %c0_117 = arith.constant 0 : index
    %84 = vector.load %arg7[%c3_115, %c0_116, %c0_117] : memref<20x16x2xf32, #tpu.memory_space<vmem>>, vector<16x16x2xf32>
    %85 = arith.maximumf %83, %84 : vector<16x16x2xf32>
    %86 = arith.maximumf %82, %85 : vector<16x16x2xf32>
    %c4_118 = arith.constant 4 : index
    %c0_119 = arith.constant 0 : index
    %c0_120 = arith.constant 0 : index
    %87 = vector.load %arg7[%c4_118, %c0_119, %c0_120] : memref<20x16x2xf32, #tpu.memory_space<vmem>>, vector<16x16x2xf32>
    %88 = arith.maximumf %86, %87 : vector<16x16x2xf32>
    %c0_121 = arith.constant 0 : index
    %c2_122 = arith.constant 2 : index
    %c0_123 = arith.constant 0 : index
    %89 = vector.load %arg8[%c0_121, %c2_122, %c0_123] : memref<16x20x2xf32, #tpu.memory_space<vmem>>, vector<16x16x2xf32>
    tpu.vector_store %arg8[%c0_121, %c2_122, %c0_123], %88 {strides = array<i32>} : memref<16x20x2xf32, #tpu.memory_space<vmem>>, vector<16x16x2xf32>,
    %c0_124 = arith.constant 0 : index
    %c0_125 = arith.constant 0 : index
    %c0_126 = arith.constant 0 : index
    %90 = vector.load %arg8[%c0_124, %c0_125, %c0_126] : memref<16x20x2xf32, #tpu.memory_space<vmem>>, vector<16x16x2xf32>
    %c0_127 = arith.constant 0 : index
    %c1_128 = arith.constant 1 : index
    %c0_129 = arith.constant 0 : index
    %91 = vector.load %arg8[%c0_127, %c1_128, %c0_129] : memref<16x20x2xf32, #tpu.memory_space<vmem>>, vector<16x16x2xf32>
    %92 = arith.maximumf %90, %91 : vector<16x16x2xf32>
    %c0_130 = arith.constant 0 : index
    %c2_131 = arith.constant 2 : index
    %c0_132 = arith.constant 0 : index
    %93 = vector.load %arg8[%c0_130, %c2_131, %c0_132] : memref<16x20x2xf32, #tpu.memory_space<vmem>>, vector<16x16x2xf32>
    %c0_133 = arith.constant 0 : index
    %c3_134 = arith.constant 3 : index
    %c0_135 = arith.constant 0 : index
    %94 = vector.load %arg8[%c0_133, %c3_134, %c0_135] : memref<16x20x2xf32, #tpu.memory_space<vmem>>, vector<16x16x2xf32>
    %95 = arith.maximumf %93, %94 : vector<16x16x2xf32>
    %96 = arith.maximumf %92, %95 : vector<16x16x2xf32>
    %c0_136 = arith.constant 0 : index
    %c4_137 = arith.constant 4 : index
    %c0_138 = arith.constant 0 : index
    %97 = vector.load %arg8[%c0_136, %c4_137, %c0_138] : memref<16x20x2xf32, #tpu.memory_space<vmem>>, vector<16x16x2xf32>
    %98 = arith.maximumf %96, %97 : vector<16x16x2xf32>
    %99 = vector.shape_cast %98 : vector<16x16x2xf32> to vector<256x2xf32>
    %100 = arith.truncf %99 : vector<256x2xf32> to vector<256x2xbf16>
    %c3_139 = arith.constant 3 : index
    %c0_140 = arith.constant 0 : index
    %c0_141 = arith.constant 0 : index
    %101 = vector.load %arg4[%c3_139, %c0_140, %c0_141] : memref<4x2x8xbf16, #tpu.memory_space<vmem>>, vector<1x2x8xbf16>
    %102 = vector.shape_cast %101 : vector<1x2x8xbf16> to vector<2x8xbf16>
    %cst_142 = arith.constant dense<0.000000e+00> : vector<256x8xf32>
    %103 = tpu.matmul %100, %102, %cst_142 {dimension_numbers = #tpu.dot_dimension_numbers<[1], [0], [0], [1], [0, 0, 1, 1], [], []>} : vector<256x2xbf16>, vector<2x8xbf16>, vector<256x8xf32> -> vector<256x8xf32>
    %104 = arith.addf %78, %103 : vector<256x8xf32>
    %c0_143 = arith.constant 0 : index
    %c0_144 = arith.constant 0 : index
    %105 = vector.load %arg5[%c0_143, %c0_144] : memref<1x8xf32, #tpu.memory_space<vmem>>, vector<1x8xf32>
    %106 = vector.broadcast %105 : vector<1x8xf32> to vector<256x8xf32>
    %107 = arith.addf %104, %106 : vector<256x8xf32>
    %108 = arith.negf %107 : vector<256x8xf32>
    %109 = math.exp %108 : vector<256x8xf32>
    %cst_145 = arith.constant 1.000000e+00 : f32
    %110 = vector.broadcast %cst_145 : f32 to vector<256x8xf32>
    %111 = arith.addf %110, %109 : vector<256x8xf32>
    %112 = arith.divf %110, %111 : vector<256x8xf32>
    %113 = arith.mulf %107, %112 : vector<256x8xf32>
    %114 = vector.shape_cast %113 : vector<256x8xf32> to vector<16x16x8xf32>
    %c0_146 = arith.constant 0 : index
    %c0_147 = arith.constant 0 : index
    %c0_148 = arith.constant 0 : index
    %c0_149 = arith.constant 0 : index
    %115 = vector.load %arg6[%c0_146, %c0_147, %c0_148, %c0_149] : memref<1x16x16x8xf32, #tpu.memory_space<vmem>>, vector<1x16x16x8xf32>
    %116 = vector.shape_cast %115 : vector<1x16x16x8xf32> to vector<16x16x8xf32>
    %117 = vector.shape_cast %114 : vector<16x16x8xf32> to vector<1x16x16x8xf32>
    tpu.vector_store %arg6[%c0_146, %c0_147, %c0_148, %c0_149], %117 {strides = array<i32>} : memref<1x16x16x8xf32, #tpu.memory_space<vmem>>, vector<1x16x16x8xf32>,
    return
  }
  func.func @transform_0(%arg0: i32) -> (i32, i32, i32, i32) {
    %c0_i32 = arith.constant 0 : i32
    %c0_i32_0 = arith.constant 0 : i32
    %c0_i32_1 = arith.constant 0 : i32
    %c0_i32_2 = arith.constant 0 : i32
    return %arg0, %c0_i32, %c0_i32_0, %c0_i32_1 : i32, i32, i32, i32
  }
  func.func @transform_1(%arg0: i32) -> (i32, i32) {
    %c0_i32 = arith.constant 0 : i32
    %c0_i32_0 = arith.constant 0 : i32
    %c0_i32_1 = arith.constant 0 : i32
    return %c0_i32, %c0_i32_0 : i32, i32
  }
  func.func @transform_2(%arg0: i32) -> (i32, i32) {
    %c0_i32 = arith.constant 0 : i32
    %c0_i32_0 = arith.constant 0 : i32
    %c0_i32_1 = arith.constant 0 : i32
    return %c0_i32, %c0_i32_0 : i32, i32
  }
  func.func @transform_3(%arg0: i32) -> (i32, i32, i32) {
    %c0_i32 = arith.constant 0 : i32
    %c0_i32_0 = arith.constant 0 : i32
    %c0_i32_1 = arith.constant 0 : i32
    %c0_i32_2 = arith.constant 0 : i32
    return %c0_i32, %c0_i32_0, %c0_i32_1 : i32, i32, i32
  }
  func.func @transform_4(%arg0: i32) -> (i32, i32) {
    %c0_i32 = arith.constant 0 : i32
    %c0_i32_0 = arith.constant 0 : i32
    %c0_i32_1 = arith.constant 0 : i32
    return %c0_i32, %c0_i32_0 : i32, i32
  }
  func.func @transform_5(%arg0: i32) -> (i32, i32, i32, i32) {
    %c0_i32 = arith.constant 0 : i32
    %c0_i32_0 = arith.constant 0 : i32
    %c0_i32_1 = arith.constant 0 : i32
    %c0_i32_2 = arith.constant 0 : i32
    return %arg0, %c0_i32, %c0_i32_0, %c0_i32_1 : i32, i32, i32, i32
  }
}

</mosaic_0001>

<llo_original>
// kernel: spp_forward.1
$region0: #{spp_forward.1}
  #allocation0 [shape = 'u32[]', space=smem, size = 0x4, offset = 0x4, fixed_abs, tag = 'smem constant byte address 0x4 - core index']
  #allocation1 [shape = 'u32[144,128]{1,0:T(1,128)}', space=vmem, size = 0x12000, scoped, tag = 'internal scratch']
  #allocation2 [shape = 'f32[20,16,2]{2,1,0:T(8,128)}', space=vmem, size = 0x28000, scoped, tag = 'scratch operand']
  #allocation3 [shape = 'f32[16,20,2]{2,1,0:T(8,128)}', space=vmem, size = 0x30000, scoped, tag = 'scratch operand']
  %s0 = inlined_call_operand.hbm [shape: bf16[2,16,16,4], index: 0, kind: input, shape index: {}]
  %s1 = inlined_call_operand.hbm [shape: bf16[4,2], index: 1, kind: input, shape index: {}]
  %s2 = inlined_call_operand.hbm [shape: f32[1,2], index: 2, kind: input, shape index: {}]
  %s3 = inlined_call_operand.hbm [shape: bf16[4,2,8], index: 3, kind: input, shape index: {}]
  %s4 = inlined_call_operand.hbm [shape: f32[1,8], index: 4, kind: input, shape index: {}]
  %s5 = inlined_call_operand.hbm [shape: f32[2,16,16,8], index: 5, kind: output, shape index: {}]
  %s6 = sld [smem:[#allocation0]]
  $region73: #{spp_forward.1} parent=0
    _
  %s8 = ssub.s32 1, %s6
  %s9 = scalar_select 0, %s8, %s6
  $region1: #{spp_forward.1} parent=0
    #allocation4 [shape = 'u8[131072]{0}', space=vmem, size = 0x20000, scoped, tag = 'input window, operand 0']
    #allocation5 [shape = 's32[2]{0}', space=sflag, size = 0x8, scoped, tag = 'scoped memory for spp_forward.1']
    #allocation6 [shape = 's32[2]{0}', space=sflag, size = 0x8, scoped, tag = 'scoped memory for spp_forward.1']
    #allocation7 [shape = 'u8[1024]{0}', space=vmem, size = 0x400, scoped, tag = 'input window, operand 1, single buffered']
    #allocation8 [shape = 's32[1]{0}', space=sflag, size = 0x4, scoped, tag = 'scoped memory for spp_forward.1']
    #allocation9 [shape = 'u8[512]{0}', space=vmem, size = 0x400, scoped, tag = 'input window, operand 2, single buffered']
    #allocation10 [shape = 'u8[2048]{0}', space=vmem, size = 0x800, scoped, tag = 'input window, operand 3, single buffered']
    #allocation11 [shape = 's32[1]{0}', space=sflag, size = 0x4, scoped, tag = 'scoped memory for spp_forward.1']
    #allocation12 [shape = 'u8[512]{0}', space=vmem, size = 0x400, scoped, tag = 'input window, operand 4, single buffered']
    #allocation13 [shape = 'u8[262144]{0}', space=vmem, size = 0x40000, scoped, tag = 'output window, operand 0']
    %10 = vsyncpa [#allocation5], 0
    %s11 = scalar_lea.sflag [#allocation5], 1
    %12 = vsyncpa %s11, 0
    %13 = vsyncpa [#allocation8], 0
    %14 = vsyncpa [#allocation11], 0
    %15 = vsyncpa [#allocation6], 0
    %s16 = scalar_lea.sflag [#allocation6], 1
    %17 = vsyncpa %s16, 0
    loop: start=0, step=1, limit=4
    $region2: #{spp_forward.1} parent=1 // loop_pre_header
      _
    $region3: #{spp_forward.1} parent=1 // loop_header
      %s19 = sphi 0, %s23
      %p20 = scmp.ge.s32.totalorder %s19, 4
      %s29 = sphi 0, %s31
      %s32 = sphi 0, %s29
      %s33 = sphi 0, %s32
      %s49 = sphi 0, %s33
      %s53 = sphi 0, %s53
      %s55 = sphi 0, %s53
      %s56 = sphi 0, %s55
      %s70 = sphi 0, %s56
      %s74 = sphi 0, %s74
      %s76 = sphi 0, %s74
      %s77 = sphi 0, %s76
      %s91 = sphi 0, %s77
      %s95 = sphi 0, %s95
      %s97 = sphi 0, %s95
      %s98 = sphi 0, %s97
      %s112 = sphi 0, %s98
      %s116 = sphi 0, %s116
      %s118 = sphi 0, %s116
      %s119 = sphi 0, %s118
      %s133 = sphi 0, %s119
      %s139 = sphi 0, %s141
      %s142 = sphi 0, %s139
      %s143 = sphi 0, %s142
      %s159 = sphi 0, %s143
    $region4: #{spp_forward.1} parent=1 // loop_header_branch
      %22 = sbr.rel (%p20) target = $region8
    $region5: #{spp_forward.1} parent=1 // loop_body
      %s24 = ssub.s32 %s19, 1
      %s25 = ssub.s32 %s19, 2
      %s26 = sadd.s32 %s19, 1
      %s27 = ssub.s32 %s19, %s26
      %p28 = scmp.eq.s32.totalorder %s27, 0
      %s30 = sadd.s32 %s29, 1
      %s31 = scalar_select %p28, %s29, %s30
      %p34 = pneg %p28
      %p35 = scmp.eq.s32.totalorder %s19, 1
      %p36 = por %p34, %p35
      %p37 = scmp.ne.s32.totalorder %s29, %s32
      %p38 = scmp.eq.s32.totalorder %s19, 0
      %p39 = por %p37, %p38
      %p40 = scmp.ne.s32.totalorder %s29, %s32
      %p41 = scmp.eq.s32.totalorder %s24, 1
      %p42 = por %p40, %p41
      %p43 = scmp.ne.s32.totalorder %s32, %s33
      %p44 = scmp.eq.s32.totalorder %s24, 0
      %p45 = por %p43, %p44
      %p46 = scmp.ne.s32.totalorder %s32, %s33
      %p47 = scmp.eq.s32.totalorder %s25, 1
      %p48 = por %p46, %p47
      %p50 = scmp.ne.s32.totalorder %s33, %s49
      %p51 = scmp.eq.s32.totalorder %s25, 0
      %p52 = por %p50, %p51
      %s54 = sadd.s32 %s53, 1
      %p57 = scmp.eq.s32.totalorder %s19, 1
      %p58 = scmp.ne.s32.totalorder %s53, %s55
      %p59 = scmp.eq.s32.totalorder %s19, 0
      %p60 = por %p58, %p59
      %p61 = scmp.ne.s32.totalorder %s53, %s55
      %p62 = scmp.eq.s32.totalorder %s24, 1
      %p63 = por %p61, %p62
      %p64 = scmp.ne.s32.totalorder %s55, %s56
      %p65 = scmp.eq.s32.totalorder %s24, 0
      %p66 = por %p64, %p65
      %p67 = scmp.ne.s32.totalorder %s55, %s56
      %p68 = scmp.eq.s32.totalorder %s25, 1
      %p69 = por %p67, %p68
      %p71 = scmp.ne.s32.totalorder %s56, %s70
      %p72 = scmp.eq.s32.totalorder %s25, 0
      %p73 = por %p71, %p72
      %s75 = sadd.s32 %s74, 1
      %p78 = scmp.eq.s32.totalorder %s19, 1
      %p79 = scmp.ne.s32.totalorder %s74, %s76
      %p80 = scmp.eq.s32.totalorder %s19, 0
      %p81 = por %p79, %p80
      %p82 = scmp.ne.s32.totalorder %s74, %s76
      %p83 = scmp.eq.s32.totalorder %s24, 1
      %p84 = por %p82, %p83
      %p85 = scmp.ne.s32.totalorder %s76, %s77
      %p86 = scmp.eq.s32.totalorder %s24, 0
      %p87 = por %p85, %p86
      %p88 = scmp.ne.s32.totalorder %s76, %s77
      %p89 = scmp.eq.s32.totalorder %s25, 1
      %p90 = por %p88, %p89
      %p92 = scmp.ne.s32.totalorder %s77, %s91
      %p93 = scmp.eq.s32.totalorder %s25, 0
      %p94 = por %p92, %p93
      %s96 = sadd.s32 %s95, 1
      %p99 = scmp.eq.s32.totalorder %s19, 1
      %p100 = scmp.ne.s32.totalorder %s95, %s97
      %p101 = scmp.eq.s32.totalorder %s19, 0
      %p102 = por %p100, %p101
      %p103 = scmp.ne.s32.totalorder %s95, %s97
      %p104 = scmp.eq.s32.totalorder %s24, 1
      %p105 = por %p103, %p104
      %p106 = scmp.ne.s32.totalorder %s97, %s98
      %p107 = scmp.eq.s32.totalorder %s24, 0
      %p108 = por %p106, %p107
      %p109 = scmp.ne.s32.totalorder %s97, %s98
      %p110 = scmp.eq.s32.totalorder %s25, 1
      %p111 = por %p109, %p110
      %p113 = scmp.ne.s32.totalorder %s98, %s112
      %p114 = scmp.eq.s32.totalorder %s25, 0
      %p115 = por %p113, %p114
      %s117 = sadd.s32 %s116, 1
      %p120 = scmp.eq.s32.totalorder %s19, 1
      %p121 = scmp.ne.s32.totalorder %s116, %s118
      %p122 = scmp.eq.s32.totalorder %s19, 0
      %p123 = por %p121, %p122
      %p124 = scmp.ne.s32.totalorder %s116, %s118
      %p125 = scmp.eq.s32.totalorder %s24, 1
      %p126 = por %p124, %p125
      %p127 = scmp.ne.s32.totalorder %s118, %s119
      %p128 = scmp.eq.s32.totalorder %s24, 0
      %p129 = por %p127, %p128
      %p130 = scmp.ne.s32.totalorder %s118, %s119
      %p131 = scmp.eq.s32.totalorder %s25, 1
      %p132 = por %p130, %p131
      %p134 = scmp.ne.s32.totalorder %s119, %s133
      %p135 = scmp.eq.s32.totalorder %s25, 0
      %p136 = por %p134, %p135
      %s137 = ssub.s32 %s19, %s26
      %p138 = scmp.eq.s32.totalorder %s137, 0
      %s140 = sadd.s32 %s139, 1
      %s141 = scalar_select %p138, %s139, %s140
      %p144 = pneg %p138
      %p145 = scmp.eq.s32.totalorder %s19, 1
      %p146 = por %p144, %p145
      %p147 = scmp.ne.s32.totalorder %s139, %s142
      %p148 = scmp.eq.s32.totalorder %s19, 0
      %p149 = por %p147, %p148
      %p150 = scmp.ne.s32.totalorder %s139, %s142
      %p151 = scmp.eq.s32.totalorder %s24, 1
      %p152 = por %p150, %p151
      %p153 = scmp.ne.s32.totalorder %s142, %s143
      %p154 = scmp.eq.s32.totalorder %s24, 0
      %p155 = por %p153, %p154
      %p156 = scmp.ne.s32.totalorder %s142, %s143
      %p157 = scmp.eq.s32.totalorder %s25, 1
      %p158 = por %p156, %p157
      %p160 = scmp.ne.s32.totalorder %s143, %s159
      %p161 = scmp.eq.s32.totalorder %s25, 0
      %p162 = por %p160, %p161
      %p163 = scmp.le.s32.totalorder 1, %s19
      %p164 = scmp.lt.s32.totalorder %s19, 3
      %p165 = pnand %p163, %p164
      %p166 = pneg %p165
      // Predicated region
      $region9: #{spp_forward.1} parent=5 // pred_check
        _
      $region10: #{spp_forward.1} parent=5 // pred_check_branch
        %168 = sbr.rel (%p165) target = $region12
      $region11: #{spp_forward.1} parent=5 // pred_region
        %s169 = ssub.s32 %s19, 1
        // Predicated region
        $region13: #{spp_forward.1} parent=11 // pred_check
          %p170 = pneg %p66
        $region14: #{spp_forward.1} parent=11 // pred_check_branch
          %172 = sbr.rel (%p170) target = $region16
        $region15: #{spp_forward.1} parent=11 // pred_region
          %s174 = ssub.s32 32, 32
          %175 = vsyncadd [#allocation8], %s174
          %s177 = sshll.u32 [#allocation7], 4
          %s178 = int_to_ptr.vmem [resolvable:$true] %s177
          %180 = dma.hbm_to_vmem [thread:$0]  %s1, 32, %s178, [#allocation8]
        $region16: #{spp_forward.1} parent=11 // pred_fallthru
          _
        // Predicated region
        $region17: #{spp_forward.1} parent=11 // pred_check
          %p181 = pneg %p87
        $region18: #{spp_forward.1} parent=11 // pred_check_branch
          %183 = sbr.rel (%p181) target = $region20
        $region19: #{spp_forward.1} parent=11 // pred_region
          %s185 = ssub.s32 16, 16
          %186 = vsyncadd [#allocation8], %s185
          %s188 = sshll.u32 [#allocation9], 4
          %s189 = int_to_ptr.vmem [resolvable:$true] %s188
          %191 = dma.hbm_to_vmem [thread:$0]  %s2, 16, %s189, [#allocation8]
        $region20: #{spp_forward.1} parent=11 // pred_fallthru
          _
        // Predicated region
        $region21: #{spp_forward.1} parent=11 // pred_check
          %p192 = pneg %p108
        $region22: #{spp_forward.1} parent=11 // pred_check_branch
          %194 = sbr.rel (%p192) target = $region24
        $region23: #{spp_forward.1} parent=11 // pred_region
          %s196 = ssub.s32 64, 64
          %197 = vsyncadd [#allocation11], %s196
          %s198 = sshll.u32 [#allocation10], 4
          %s199 = int_to_ptr.vmem [resolvable:$true] %s198
          %204 = dma.hbm_to_vmem [thread:$0]  %s3, 64, %s199, [#allocation11], 16, 16, 1
        $region24: #{spp_forward.1} parent=11 // pred_fallthru
          _
        // Predicated region
        $region25: #{spp_forward.1} parent=11 // pred_check
          %p205 = pneg %p129
        $region26: #{spp_forward.1} parent=11 // pred_check_branch
          %207 = sbr.rel (%p205) target = $region28
        $region27: #{spp_forward.1} parent=11 // pred_region
          %s209 = ssub.s32 16, 16
          %210 = vsyncadd [#allocation11], %s209
          %s212 = sshll.u32 [#allocation12], 4
          %s213 = int_to_ptr.vmem [resolvable:$true] %s212
          %215 = dma.hbm_to_vmem [thread:$0]  %s4, 16, %s213, [#allocation11]
        $region28: #{spp_forward.1} parent=11 // pred_fallthru
          _
      $region12: #{spp_forward.1} parent=5 // pred_fallthru
        _
      %p216 = scmp.lt.s32.totalorder %s19, 2
      // Predicated region
      $region29: #{spp_forward.1} parent=5 // pred_check
        %p217 = pneg %p216
      $region30: #{spp_forward.1} parent=5 // pred_check_branch
        %219 = sbr.rel (%p217) target = $region32
      $region31: #{spp_forward.1} parent=5 // pred_region
        // Predicated region
        $region33: #{spp_forward.1} parent=31 // pred_check
          %p220 = pneg %p39
        $region34: #{spp_forward.1} parent=31 // pred_check_branch
          %222 = sbr.rel (%p220) target = $region36
        $region35: #{spp_forward.1} parent=31 // pred_region
          %s223 = sand.u32 %s29, 1
          %s224 = scalar_lea.sflag [#allocation5], %s223
          %s225 = sand.u32 %s29, 1
          %s226 = smul.addr %s225, 128
          %s227 = scalar_lea.vmem [#allocation4], %s226
          %s229 = ssub.s32 2048, 2048
          %230 = vsyncadd %s224, %s229
          %s231 = smul.addr %s19, 32
          %s232 = smul.addr %s231, 64
          %s233 = scalar_lea.hbm %s0, %s232
          %s234 = sshll.u32 %s227, 4
          %s235 = int_to_ptr.vmem [resolvable:$true] %s234
          %240 = dma.hbm_to_vmem [thread:$0]  %s233, 2048, %s235, %s224, 64, 64, 4
        $region36: #{spp_forward.1} parent=31 // pred_fallthru
          _
      $region32: #{spp_forward.1} parent=5 // pred_fallthru
        _
      %p241 = scmp.le.s32.totalorder 1, %s19
      %p242 = scmp.lt.s32.totalorder %s19, 3
      %p243 = pnand %p241, %p242
      %p244 = pneg %p243
      // Predicated region
      $region37: #{spp_forward.1} parent=5 // pred_check
        _
      $region38: #{spp_forward.1} parent=5 // pred_check_branch
        %246 = sbr.rel (%p243) target = $region40
      $region39: #{spp_forward.1} parent=5 // pred_region
        %s247 = ssub.s32 %s19, 1
        %s248 = sand.u32 %s32, 1
        %s249 = scalar_lea.sflag [#allocation5], %s248
        %s250 = sand.u32 %s32, 1
        %s251 = smul.addr %s250, 128
        %s252 = scalar_lea.vmem [#allocation4], %s251
        // Predicated region
        $region41: #{spp_forward.1} parent=39 // pred_check
          %p253 = pneg %p45
        $region42: #{spp_forward.1} parent=39 // pred_check_branch
          %255 = sbr.rel (%p253) target = $region44
        $region43: #{spp_forward.1} parent=39 // pred_region
          %256 = dma.done %s249, 2048
        $region44: #{spp_forward.1} parent=39 // pred_fallthru
          _
        // Predicated region
        $region45: #{spp_forward.1} parent=39 // pred_check
          %p257 = pneg %p66
        $region46: #{spp_forward.1} parent=39 // pred_check_branch
          %259 = sbr.rel (%p257) target = $region48
        $region47: #{spp_forward.1} parent=39 // pred_region
          %260 = dma.done [#allocation8], 32
        $region48: #{spp_forward.1} parent=39 // pred_fallthru
          _
        // Predicated region
        $region49: #{spp_forward.1} parent=39 // pred_check
          %p261 = pneg %p87
        $region50: #{spp_forward.1} parent=39 // pred_check_branch
          %263 = sbr.rel (%p261) target = $region52
        $region51: #{spp_forward.1} parent=39 // pred_region
          %264 = dma.done [#allocation8], 16
        $region52: #{spp_forward.1} parent=39 // pred_fallthru
          _
        // Predicated region
        $region53: #{spp_forward.1} parent=39 // pred_check
          %p265 = pneg %p108
        $region54: #{spp_forward.1} parent=39 // pred_check_branch
          %267 = sbr.rel (%p265) target = $region56
        $region55: #{spp_forward.1} parent=39 // pred_region
          %268 = dma.done [#allocation11], 64
        $region56: #{spp_forward.1} parent=39 // pred_fallthru
          _
        // Predicated region
        $region57: #{spp_forward.1} parent=39 // pred_check
          %p269 = pneg %p129
        $region58: #{spp_forward.1} parent=39 // pred_check_branch
          %271 = sbr.rel (%p269) target = $region60
        $region59: #{spp_forward.1} parent=39 // pred_region
          %272 = dma.done [#allocation11], 16
        $region60: #{spp_forward.1} parent=39 // pred_fallthru
          _
        %s273 = sand.u32 %s32, 1
        %s274 = scalar_lea.sflag [#allocation5], %s273
        %s275 = sand.u32 %s32, 1
        %s276 = smul.addr %s275, 128
        %s277 = scalar_lea.vmem [#allocation4], %s276
        %p278 = pneg %p45
        %p279 = pneg %p42
        %p280 = pneg %p66
        %p281 = pneg %p63
        %p282 = pneg %p87
        %p283 = pneg %p84
        %p284 = pneg %p108
        %p285 = pneg %p105
        %p286 = pneg %p129
        %p287 = pneg %p126
        %p288 = pneg %p155
        %p289 = pneg %p152
        %s290 = sand.u32 %s142, 1
        %s291 = scalar_lea.sflag [#allocation6], %s290
        %s292 = sand.u32 %s142, 1
        %s293 = smul.addr %s292, 256
        %s294 = scalar_lea.vmem [#allocation13], %s293
        %v296 = vld [vmem:[%s252] sm:$0xf]
        %v297 = vld [vmem:[%s252 + $0x4] sm:$0xf]
        %v298 = vld [vmem:[%s252 + $0x8] sm:$0xf]
        %v299 = vld [vmem:[%s252 + $0xc] sm:$0xf]
        %v300 = vld [vmem:[%s252 + $0x10] sm:$0xf]
        %v301 = vld [vmem:[%s252 + $0x14] sm:$0xf]
        %v302 = vld [vmem:[%s252 + $0x18] sm:$0xf]
        %v303 = vld [vmem:[%s252 + $0x1c] sm:$0xf]
        %v304 = vld [vmem:[%s252 + $0x20] sm:$0xf]
        %v305 = vld [vmem:[%s252 + $0x24] sm:$0xf]
        %v306 = vld [vmem:[%s252 + $0x28] sm:$0xf]
        %v307 = vld [vmem:[%s252 + $0x2c] sm:$0xf]
        %v308 = vld [vmem:[%s252 + $0x30] sm:$0xf]
        %v309 = vld [vmem:[%s252 + $0x34] sm:$0xf]
        %v310 = vld [vmem:[%s252 + $0x38] sm:$0xf]
        %v311 = vld [vmem:[%s252 + $0x3c] sm:$0xf]
        %v312 = vld [vmem:[%s252 + $0x40] sm:$0xf]
        %v313 = vld [vmem:[%s252 + $0x44] sm:$0xf]
        %v314 = vld [vmem:[%s252 + $0x48] sm:$0xf]
        %v315 = vld [vmem:[%s252 + $0x4c] sm:$0xf]
        %v316 = vld [vmem:[%s252 + $0x50] sm:$0xf]
        %v317 = vld [vmem:[%s252 + $0x54] sm:$0xf]
        %v318 = vld [vmem:[%s252 + $0x58] sm:$0xf]
        %v319 = vld [vmem:[%s252 + $0x5c] sm:$0xf]
        %v320 = vld [vmem:[%s252 + $0x60] sm:$0xf]
        %v321 = vld [vmem:[%s252 + $0x64] sm:$0xf]
        %v322 = vld [vmem:[%s252 + $0x68] sm:$0xf]
        %v323 = vld [vmem:[%s252 + $0x6c] sm:$0xf]
        %v324 = vld [vmem:[%s252 + $0x70] sm:$0xf]
        %v325 = vld [vmem:[%s252 + $0x74] sm:$0xf]
        %v326 = vld [vmem:[%s252 + $0x78] sm:$0xf]
        %v327 = vld [vmem:[%s252 + $0x7c] sm:$0xf]
        %v328 = vld [vmem:[#allocation7] sm:$0x3]
        %v329 = vld [vmem:[#allocation9] sm:$0x1]
        %v331 = vlaneseq
        %v332 = vshrl.u32 %v331, 7
        %v333 = vsub.s32 0, %v332
        %v334 = vrot.slane %v329, %v333
        %v368 = vunpack.c.l.b16 %v296
        %v369 = vunpack.c.l.b16 %v297
        %v370 = vunpack.c.l.b16 %v298
        %v371 = vunpack.c.l.b16 %v299
        %v372 = vunpack.c.l.b16 %v300
        %v373 = vunpack.c.l.b16 %v301
        %v374 = vunpack.c.l.b16 %v302
        %v375 = vunpack.c.l.b16 %v303
        %v376 = vunpack.c.l.b16 %v304
        %v377 = vunpack.c.l.b16 %v305
        %v378 = vunpack.c.l.b16 %v306
        %v379 = vunpack.c.l.b16 %v307
        %v380 = vunpack.c.l.b16 %v308
        %v381 = vunpack.c.l.b16 %v309
        %v382 = vunpack.c.l.b16 %v310
        %v383 = vunpack.c.l.b16 %v311
        %v384 = vunpack.c.l.b16 %v312
        %v385 = vunpack.c.l.b16 %v313
        %v386 = vunpack.c.l.b16 %v314
        %v387 = vunpack.c.l.b16 %v315
        %v388 = vunpack.c.l.b16 %v316
        %v389 = vunpack.c.l.b16 %v317
        %v390 = vunpack.c.l.b16 %v318
        %v391 = vunpack.c.l.b16 %v319
        %v392 = vunpack.c.l.b16 %v320
        %v393 = vunpack.c.l.b16 %v321
        %v394 = vunpack.c.l.b16 %v322
        %v395 = vunpack.c.l.b16 %v323
        %v396 = vunpack.c.l.b16 %v324
        %v397 = vunpack.c.l.b16 %v325
        %v398 = vunpack.c.l.b16 %v326
        %v399 = vunpack.c.l.b16 %v327
        %v400 = vpack.c.b16 %v369, %v368
        %v401 = vpack.c.b16 %v371, %v370
        %v402 = vpack.c.b16 %v373, %v372
        %v403 = vpack.c.b16 %v375, %v374
        %v404 = vpack.c.b16 %v377, %v376
        %v405 = vpack.c.b16 %v379, %v378
        %v406 = vpack.c.b16 %v381, %v380
        %v407 = vpack.c.b16 %v383, %v382
        %v408 = vpack.c.b16 %v385, %v384
        %v409 = vpack.c.b16 %v387, %v386
        %v410 = vpack.c.b16 %v389, %v388
        %v411 = vpack.c.b16 %v391, %v390
        %v412 = vpack.c.b16 %v393, %v392
        %v413 = vpack.c.b16 %v395, %v394
        %v414 = vpack.c.b16 %v397, %v396
        %v415 = vpack.c.b16 %v399, %v398
        %vm416 = vcmask 31744
        %v418 = vsel %vm416, %v400, 0
        %v421 = vsel %vm416, %v401, 0
        %v424 = vsel %vm416, %v402, 0
        %v427 = vsel %vm416, %v403, 0
        %v430 = vsel %vm416, %v404, 0
        %v433 = vsel %vm416, %v405, 0
        %v436 = vsel %vm416, %v406, 0
        %v439 = vsel %vm416, %v407, 0
        %v442 = vsel %vm416, %v408, 0
        %v445 = vsel %vm416, %v409, 0
        %v448 = vsel %vm416, %v410, 0
        %v451 = vsel %vm416, %v411, 0
        %v454 = vsel %vm416, %v412, 0
        %v457 = vsel %vm416, %v413, 0
        %v460 = vsel %vm416, %v414, 0
        %v463 = vsel %vm416, %v415, 0
        %vm465 = vcmask 1041408
        %v467 = vsel %vm465, %v328, 0
        %469 = vmatprep.subr.bf16.mxu0 0
        %470 = vmatpush1.bf16.msra.mxu0 %v467
        %471 = vmatprep.subr.bf16.mxu0 0
        %472 = vmatpush1.bf16.msra.mxu0 0
        %473 = vmatprep.subr.bf16.mxu0 0
        %474 = vmatpush1.bf16.msra.mxu0 0
        %475 = vmatprep.subr.bf16.mxu0 0
        %476 = vmatpush1.bf16.msra.mxu0 0
        %477 = vmatprep.subr.bf16.mxu0 0
        %478 = vmatpush1.bf16.msra.mxu0 0
        %479 = vmatprep.subr.bf16.mxu0 0
        %480 = vmatpush1.bf16.msra.mxu0 0
        %481 = vmatprep.subr.bf16.mxu0 0
        %482 = vmatpush1.bf16.msra.mxu0 0
        %483 = vmatprep.subr.bf16.mxu0 0
        %484 = vmatpush1.bf16.msra.mxu0 0
        %485 = vmatprep.subr.bf16.mxu0 0
        %486 = vmatpush1.bf16.msra.mxu0 0
        %487 = vmatprep.subr.bf16.mxu0 0
        %488 = vmatpush1.bf16.msra.mxu0 0
        %489 = vmatprep.subr.bf16.mxu0 0
        %490 = vmatpush1.bf16.msra.mxu0 0
        %491 = vmatprep.subr.bf16.mxu0 0
        %492 = vmatpush1.bf16.msra.mxu0 0
        %493 = vmatprep.subr.bf16.mxu0 0
        %494 = vmatpush1.bf16.msra.mxu0 0
        %495 = vmatprep.subr.bf16.mxu0 0
        %496 = vmatpush1.bf16.msra.mxu0 0
        %497 = vmatprep.subr.bf16.mxu0 0
        %498 = vmatpush1.bf16.msra.mxu0 0
        %499 = vmatprep.subr.bf16.mxu0 0
        %500 = vmatpush1.bf16.msra.mxu0 0
        %501 = vmatprep.mubr.bf16.mxu0 0
        %502 = vmatmul.mubr.bf16.gmra.mrb[0].mxu0 %v418
        %v503 = vpop.f32.mrb[0].mxu0
        %v504 = vadd.f32 %v334, %v503
        %v505 = vpop.f32.mrb[0].mxu0
        %v506 = vpop.f32.mrb[0].mxu0
        %v507 = vadd.f32 %v334, %v506
        %v508 = vpop.f32.mrb[0].mxu0
        %509 = vmatprep.mubr.bf16.mxu0 0
        %510 = vmatmul.mubr.bf16.gmra.mrb[0].mxu0 %v421
        %v511 = vpop.f32.mrb[0].mxu0
        %v512 = vadd.f32 %v334, %v511
        %v513 = vpop.f32.mrb[0].mxu0
        %v514 = vpop.f32.mrb[0].mxu0
        %v515 = vadd.f32 %v334, %v514
        %v516 = vpop.f32.mrb[0].mxu0
        %517 = vmatprep.mubr.bf16.mxu0 0
        %518 = vmatmul.mubr.bf16.gmra.mrb[0].mxu0 %v424
        %v519 = vpop.f32.mrb[0].mxu0
        %v520 = vadd.f32 %v334, %v519
        %v521 = vpop.f32.mrb[0].mxu0
        %v522 = vpop.f32.mrb[0].mxu0
        %v523 = vadd.f32 %v334, %v522
        %v524 = vpop.f32.mrb[0].mxu0
        %525 = vmatprep.mubr.bf16.mxu0 0
        %526 = vmatmul.mubr.bf16.gmra.mrb[0].mxu0 %v427
        %v527 = vpop.f32.mrb[0].mxu0
        %v528 = vadd.f32 %v334, %v527
        %v529 = vpop.f32.mrb[0].mxu0
        %v530 = vpop.f32.mrb[0].mxu0
        %v531 = vadd.f32 %v334, %v530
        %v532 = vpop.f32.mrb[0].mxu0
        %533 = vmatprep.mubr.bf16.mxu0 0
        %534 = vmatmul.mubr.bf16.gmra.mrb[0].mxu0 %v430
        %v535 = vpop.f32.mrb[0].mxu0
        %v536 = vadd.f32 %v334, %v535
        %v537 = vpop.f32.mrb[0].mxu0
        %v538 = vpop.f32.mrb[0].mxu0
        %v539 = vadd.f32 %v334, %v538
        %v540 = vpop.f32.mrb[0].mxu0
        %541 = vmatprep.mubr.bf16.mxu0 0
        %542 = vmatmul.mubr.bf16.gmra.mrb[0].mxu0 %v433
        %v543 = vpop.f32.mrb[0].mxu0
        %v544 = vadd.f32 %v334, %v543
        %v545 = vpop.f32.mrb[0].mxu0
        %v546 = vpop.f32.mrb[0].mxu0
        %v547 = vadd.f32 %v334, %v546
        %v548 = vpop.f32.mrb[0].mxu0
        %549 = vmatprep.mubr.bf16.mxu0 0
        %550 = vmatmul.mubr.bf16.gmra.mrb[0].mxu0 %v436
        %v551 = vpop.f32.mrb[0].mxu0
        %v552 = vadd.f32 %v334, %v551
        %v553 = vpop.f32.mrb[0].mxu0
        %v554 = vpop.f32.mrb[0].mxu0
        %v555 = vadd.f32 %v334, %v554
        %v556 = vpop.f32.mrb[0].mxu0
        %557 = vmatprep.mubr.bf16.mxu0 0
        %558 = vmatmul.mubr.bf16.gmra.mrb[0].mxu0 %v439
        %v559 = vpop.f32.mrb[0].mxu0
        %v560 = vadd.f32 %v334, %v559
        %v561 = vpop.f32.mrb[0].mxu0
        %v562 = vpop.f32.mrb[0].mxu0
        %v563 = vadd.f32 %v334, %v562
        %v564 = vpop.f32.mrb[0].mxu0
        %565 = vmatprep.mubr.bf16.mxu0 0
        %566 = vmatmul.mubr.bf16.gmra.mrb[0].mxu0 %v442
        %v567 = vpop.f32.mrb[0].mxu0
        %v568 = vadd.f32 %v334, %v567
        %v569 = vpop.f32.mrb[0].mxu0
        %v570 = vpop.f32.mrb[0].mxu0
        %v571 = vadd.f32 %v334, %v570
        %v572 = vpop.f32.mrb[0].mxu0
        %573 = vmatprep.mubr.bf16.mxu0 0
        %574 = vmatmul.mubr.bf16.gmra.mrb[0].mxu0 %v445
        %v575 = vpop.f32.mrb[0].mxu0
        %v576 = vadd.f32 %v334, %v575
        %v577 = vpop.f32.mrb[0].mxu0
        %v578 = vpop.f32.mrb[0].mxu0
        %v579 = vadd.f32 %v334, %v578
        %v580 = vpop.f32.mrb[0].mxu0
        %581 = vmatprep.mubr.bf16.mxu0 0
        %582 = vmatmul.mubr.bf16.gmra.mrb[0].mxu0 %v448
        %v583 = vpop.f32.mrb[0].mxu0
        %v584 = vadd.f32 %v334, %v583
        %v585 = vpop.f32.mrb[0].mxu0
        %v586 = vpop.f32.mrb[0].mxu0
        %v587 = vadd.f32 %v334, %v586
        %v588 = vpop.f32.mrb[0].mxu0
        %589 = vmatprep.mubr.bf16.mxu0 0
        %590 = vmatmul.mubr.bf16.gmra.mrb[0].mxu0 %v451
        %v591 = vpop.f32.mrb[0].mxu0
        %v592 = vadd.f32 %v334, %v591
        %v593 = vpop.f32.mrb[0].mxu0
        %v594 = vpop.f32.mrb[0].mxu0
        %v595 = vadd.f32 %v334, %v594
        %v596 = vpop.f32.mrb[0].mxu0
        %597 = vmatprep.mubr.bf16.mxu0 0
        %598 = vmatmul.mubr.bf16.gmra.mrb[0].mxu0 %v454
        %v599 = vpop.f32.mrb[0].mxu0
        %v600 = vadd.f32 %v334, %v599
        %v601 = vpop.f32.mrb[0].mxu0
        %v602 = vpop.f32.mrb[0].mxu0
        %v603 = vadd.f32 %v334, %v602
        %v604 = vpop.f32.mrb[0].mxu0
        %605 = vmatprep.mubr.bf16.mxu0 0
        %606 = vmatmul.mubr.bf16.gmra.mrb[0].mxu0 %v457
        %v607 = vpop.f32.mrb[0].mxu0
        %v608 = vadd.f32 %v334, %v607
        %v609 = vpop.f32.mrb[0].mxu0
        %v610 = vpop.f32.mrb[0].mxu0
        %v611 = vadd.f32 %v334, %v610
        %v612 = vpop.f32.mrb[0].mxu0
        %613 = vmatprep.mubr.bf16.mxu0 0
        %614 = vmatmul.mubr.bf16.gmra.mrb[0].mxu0 %v460
        %v615 = vpop.f32.mrb[0].mxu0
        %v616 = vadd.f32 %v334, %v615
        %v617 = vpop.f32.mrb[0].mxu0
        %v618 = vpop.f32.mrb[0].mxu0
        %v619 = vadd.f32 %v334, %v618
        %v620 = vpop.f32.mrb[0].mxu0
        %621 = vmatprep.mubr.bf16.mxu0 0
        %622 = vmatmul.mubr.bf16.gmra.mrb[0].mxu0 %v463
        %v623 = vpop.f32.mrb[0].mxu0
        %v624 = vadd.f32 %v334, %v623
        %v625 = vpop.f32.mrb[0].mxu0
        %v626 = vpop.f32.mrb[0].mxu0
        %v627 = vadd.f32 %v334, %v626
        %v628 = vpop.f32.mrb[0].mxu0
        %629 = vdwg.mxu0
        %v630 = vxor.u32 %v504, 2147483648
        %v631 = vxor.u32 %v507, 2147483648
        %v632 = vxor.u32 %v512, 2147483648
        %v633 = vxor.u32 %v515, 2147483648
        %v634 = vxor.u32 %v520, 2147483648
        %v635 = vxor.u32 %v523, 2147483648
        %v636 = vxor.u32 %v528, 2147483648
        %v637 = vxor.u32 %v531, 2147483648
        %v638 = vxor.u32 %v536, 2147483648
        %v639 = vxor.u32 %v539, 2147483648
        %v640 = vxor.u32 %v544, 2147483648
        %v641 = vxor.u32 %v547, 2147483648
        %v642 = vxor.u32 %v552, 2147483648
        %v643 = vxor.u32 %v555, 2147483648
        %v644 = vxor.u32 %v560, 2147483648
        %v645 = vxor.u32 %v563, 2147483648
        %v646 = vxor.u32 %v568, 2147483648
        %v647 = vxor.u32 %v571, 2147483648
        %v648 = vxor.u32 %v576, 2147483648
        %v649 = vxor.u32 %v579, 2147483648
        %v650 = vxor.u32 %v584, 2147483648
        %v651 = vxor.u32 %v587, 2147483648
        %v652 = vxor.u32 %v592, 2147483648
        %v653 = vxor.u32 %v595, 2147483648
        %v654 = vxor.u32 %v600, 2147483648
        %v655 = vxor.u32 %v603, 2147483648
        %v656 = vxor.u32 %v608, 2147483648
        %v657 = vxor.u32 %v611, 2147483648
        %v658 = vxor.u32 %v616, 2147483648
        %v659 = vxor.u32 %v619, 2147483648
        %v660 = vxor.u32 %v624, 2147483648
        %v661 = vxor.u32 %v627, 2147483648
        %v662 = vmul.f32 %v630, 1.442695
        %v663 = vpow.pop %v662
        %v664 = vmul.f32 %v631, 1.442695
        %v665 = vpow.pop %v664
        %v666 = vmul.f32 %v632, 1.442695
        %v667 = vpow.pop %v666
        %v668 = vmul.f32 %v633, 1.442695
        %v669 = vpow.pop %v668
        %v670 = vmul.f32 %v634, 1.442695
        %v671 = vpow.pop %v670
        %v672 = vmul.f32 %v635, 1.442695
        %v673 = vpow.pop %v672
        %v674 = vmul.f32 %v636, 1.442695
        %v675 = vpow.pop %v674
        %v676 = vmul.f32 %v637, 1.442695
        %v677 = vpow.pop %v676
        %v678 = vmul.f32 %v638, 1.442695
        %v679 = vpow.pop %v678
        %v680 = vmul.f32 %v639, 1.442695
        %v681 = vpow.pop %v680
        %v682 = vmul.f32 %v640, 1.442695
        %v683 = vpow.pop %v682
        %v684 = vmul.f32 %v641, 1.442695
        %v685 = vpow.pop %v684
        %v686 = vmul.f32 %v642, 1.442695
        %v687 = vpow.pop %v686
        %v688 = vmul.f32 %v643, 1.442695
        %v689 = vpow.pop %v688
        %v690 = vmul.f32 %v644, 1.442695
        %v691 = vpow.pop %v690
        %v692 = vmul.f32 %v645, 1.442695
        %v693 = vpow.pop %v692
        %v694 = vmul.f32 %v646, 1.442695
        %v695 = vpow.pop %v694
        %v696 = vmul.f32 %v647, 1.442695
        %v697 = vpow.pop %v696
        %v698 = vmul.f32 %v648, 1.442695
        %v699 = vpow.pop %v698
        %v700 = vmul.f32 %v649, 1.442695
        %v701 = vpow.pop %v700
        %v702 = vmul.f32 %v650, 1.442695
        %v703 = vpow.pop %v702
        %v704 = vmul.f32 %v651, 1.442695
        %v705 = vpow.pop %v704
        %v706 = vmul.f32 %v652, 1.442695
        %v707 = vpow.pop %v706
        %v708 = vmul.f32 %v653, 1.442695
        %v709 = vpow.pop %v708
        %v710 = vmul.f32 %v654, 1.442695
        %v711 = vpow.pop %v710
        %v712 = vmul.f32 %v655, 1.442695
        %v713 = vpow.pop %v712
        %v714 = vmul.f32 %v656, 1.442695
        %v715 = vpow.pop %v714
        %v716 = vmul.f32 %v657, 1.442695
        %v717 = vpow.pop %v716
        %v718 = vmul.f32 %v658, 1.442695
        %v719 = vpow.pop %v718
        %v720 = vmul.f32 %v659, 1.442695
        %v721 = vpow.pop %v720
        %v722 = vmul.f32 %v660, 1.442695
        %v723 = vpow.pop %v722
        %v724 = vmul.f32 %v661, 1.442695
        %v725 = vpow.pop %v724
        %v726 = vadd.f32 %v663, 1.0
        %v727 = vadd.f32 %v665, 1.0
        %v728 = vadd.f32 %v667, 1.0
        %v729 = vadd.f32 %v669, 1.0
        %v730 = vadd.f32 %v671, 1.0
        %v731 = vadd.f32 %v673, 1.0
        %v732 = vadd.f32 %v675, 1.0
        %v733 = vadd.f32 %v677, 1.0
        %v734 = vadd.f32 %v679, 1.0
        %v735 = vadd.f32 %v681, 1.0
        %v736 = vadd.f32 %v683, 1.0
        %v737 = vadd.f32 %v685, 1.0
        %v738 = vadd.f32 %v687, 1.0
        %v739 = vadd.f32 %v689, 1.0
        %v740 = vadd.f32 %v691, 1.0
        %v741 = vadd.f32 %v693, 1.0
        %v742 = vadd.f32 %v695, 1.0
        %v743 = vadd.f32 %v697, 1.0
        %v744 = vadd.f32 %v699, 1.0
        %v745 = vadd.f32 %v701, 1.0
        %v746 = vadd.f32 %v703, 1.0
        %v747 = vadd.f32 %v705, 1.0
        %v748 = vadd.f32 %v707, 1.0
        %v749 = vadd.f32 %v709, 1.0
        %v750 = vadd.f32 %v711, 1.0
        %v751 = vadd.f32 %v713, 1.0
        %v752 = vadd.f32 %v715, 1.0
        %v753 = vadd.f32 %v717, 1.0
        %v754 = vadd.f32 %v719, 1.0
        %v755 = vadd.f32 %v721, 1.0
        %v756 = vadd.f32 %v723, 1.0
        %v757 = vadd.f32 %v725, 1.0
        %v758 = vrcp.pop %v726
        %v759 = vmul.f32 1.0, %v758
        %v760 = vrcp.pop %v727
        %v761 = vmul.f32 1.0, %v760
        %v762 = vrcp.pop %v728
        %v763 = vmul.f32 1.0, %v762
        %v764 = vrcp.pop %v729
        %v765 = vmul.f32 1.0, %v764
        %v766 = vrcp.pop %v730
        %v767 = vmul.f32 1.0, %v766
        %v768 = vrcp.pop %v731
        %v769 = vmul.f32 1.0, %v768
        %v770 = vrcp.pop %v732
        %v771 = vmul.f32 1.0, %v770
        %v772 = vrcp.pop %v733
        %v773 = vmul.f32 1.0, %v772
        %v774 = vrcp.pop %v734
        %v775 = vmul.f32 1.0, %v774
        %v776 = vrcp.pop %v735
        %v777 = vmul.f32 1.0, %v776
        %v778 = vrcp.pop %v736
        %v779 = vmul.f32 1.0, %v778
        %v780 = vrcp.pop %v737
        %v781 = vmul.f32 1.0, %v780
        %v782 = vrcp.pop %v738
        %v783 = vmul.f32 1.0, %v782
        %v784 = vrcp.pop %v739
        %v785 = vmul.f32 1.0, %v784
        %v786 = vrcp.pop %v740
        %v787 = vmul.f32 1.0, %v786
        %v788 = vrcp.pop %v741
        %v789 = vmul.f32 1.0, %v788
        %v790 = vrcp.pop %v742
        %v791 = vmul.f32 1.0, %v790
        %v792 = vrcp.pop %v743
        %v793 = vmul.f32 1.0, %v792
        %v794 = vrcp.pop %v744
        %v795 = vmul.f32 1.0, %v794
        %v796 = vrcp.pop %v745
        %v797 = vmul.f32 1.0, %v796
        %v798 = vrcp.pop %v746
        %v799 = vmul.f32 1.0, %v798
        %v800 = vrcp.pop %v747
        %v801 = vmul.f32 1.0, %v800
        %v802 = vrcp.pop %v748
        %v803 = vmul.f32 1.0, %v802
        %v804 = vrcp.pop %v749
        %v805 = vmul.f32 1.0, %v804
        %v806 = vrcp.pop %v750
        %v807 = vmul.f32 1.0, %v806
        %v808 = vrcp.pop %v751
        %v809 = vmul.f32 1.0, %v808
        %v810 = vrcp.pop %v752
        %v811 = vmul.f32 1.0, %v810
        %v812 = vrcp.pop %v753
        %v813 = vmul.f32 1.0, %v812
        %v814 = vrcp.pop %v754
        %v815 = vmul.f32 1.0, %v814
        %v816 = vrcp.pop %v755
        %v817 = vmul.f32 1.0, %v816
        %v818 = vrcp.pop %v756
        %v819 = vmul.f32 1.0, %v818
        %v820 = vrcp.pop %v757
        %v821 = vmul.f32 1.0, %v820
        %v822 = vmul.f32 %v504, %v759
        %v823 = vmul.f32 %v507, %v761
        %v824 = vmul.f32 %v512, %v763
        %v825 = vmul.f32 %v515, %v765
        %v826 = vmul.f32 %v520, %v767
        %v827 = vmul.f32 %v523, %v769
        %v828 = vmul.f32 %v528, %v771
        %v829 = vmul.f32 %v531, %v773
        %v830 = vmul.f32 %v536, %v775
        %v831 = vmul.f32 %v539, %v777
        %v832 = vmul.f32 %v544, %v779
        %v833 = vmul.f32 %v547, %v781
        %v834 = vmul.f32 %v552, %v783
        %v835 = vmul.f32 %v555, %v785
        %v836 = vmul.f32 %v560, %v787
        %v837 = vmul.f32 %v563, %v789
        %v838 = vmul.f32 %v568, %v791
        %v839 = vmul.f32 %v571, %v793
        %v840 = vmul.f32 %v576, %v795
        %v841 = vmul.f32 %v579, %v797
        %v842 = vmul.f32 %v584, %v799
        %v843 = vmul.f32 %v587, %v801
        %v844 = vmul.f32 %v592, %v803
        %v845 = vmul.f32 %v595, %v805
        %v846 = vmul.f32 %v600, %v807
        %v847 = vmul.f32 %v603, %v809
        %v848 = vmul.f32 %v608, %v811
        %v849 = vmul.f32 %v611, %v813
        %v850 = vmul.f32 %v616, %v815
        %v851 = vmul.f32 %v619, %v817
        %v852 = vmul.f32 %v624, %v819
        %v853 = vmul.f32 %v627, %v821
        %vm854 = vcmask 15360
        %855 = vst.msk [vmem:[#allocation2] sm:$0xff] %vm854, -inf
        %856 = vst.msk [vmem:[#allocation2 + $0x8] sm:$0xff] %vm854, -inf
        %857 = vst.msk [vmem:[#allocation2 + $0x10] sm:$0xff] %vm854, -inf
        %858 = vst.msk [vmem:[#allocation2 + $0x18] sm:$0xff] %vm854, -inf
        %s859 = scalar_lea.vmem [#allocation2], 288
        %860 = vst.msk [vmem:[%s859] sm:$0xff] %vm854, -inf
        %861 = vst.msk [vmem:[%s859 + $0x8] sm:$0xff] %vm854, -inf
        %862 = vst.msk [vmem:[%s859 + $0x10] sm:$0xff] %vm854, -inf
        %863 = vst.msk [vmem:[%s859 + $0x18] sm:$0xff] %vm854, -inf
        %vm864 = vcmask 9216
        %865 = vst.msk [vmem:[#allocation3] sm:$0x3] %vm864, -inf
        %866 = vst.msk [vmem:[#allocation3 + $0x18] sm:$0x3] %vm864, -inf
        %867 = vst.msk [vmem:[#allocation3 + $0x30] sm:$0x3] %vm864, -inf
        %868 = vst.msk [vmem:[#allocation3 + $0x48] sm:$0x3] %vm864, -inf
        %869 = vst.msk [vmem:[#allocation3 + $0x60] sm:$0x3] %vm864, -inf
        %870 = vst.msk [vmem:[#allocation3 + $0x78] sm:$0x3] %vm864, -inf
        %871 = vst.msk [vmem:[#allocation3 + $0x90] sm:$0x3] %vm864, -inf
        %872 = vst.msk [vmem:[#allocation3 + $0xa8] sm:$0x3] %vm864, -inf
        %873 = vst.msk [vmem:[#allocation3 + $0xc0] sm:$0x3] %vm864, -inf
        %874 = vst.msk [vmem:[#allocation3 + $0xd8] sm:$0x3] %vm864, -inf
        %875 = vst.msk [vmem:[#allocation3 + $0xf0] sm:$0x3] %vm864, -inf
        %876 = vst.msk [vmem:[#allocation3 + $0x108] sm:$0x3] %vm864, -inf
        %877 = vst.msk [vmem:[#allocation3 + $0x120] sm:$0x3] %vm864, -inf
        %878 = vst.msk [vmem:[#allocation3 + $0x138] sm:$0x3] %vm864, -inf
        %879 = vst.msk [vmem:[#allocation3 + $0x150] sm:$0x3] %vm864, -inf
        %880 = vst.msk [vmem:[#allocation3 + $0x168] sm:$0x3] %vm864, -inf
        %881 = vst.msk [vmem:[#allocation3 + $0x12] sm:$0x3] %vm864, -inf
        %882 = vst.msk [vmem:[#allocation3 + $0x2a] sm:$0x3] %vm864, -inf
        %883 = vst.msk [vmem:[#allocation3 + $0x42] sm:$0x3] %vm864, -inf
        %884 = vst.msk [vmem:[#allocation3 + $0x5a] sm:$0x3] %vm864, -inf
        %885 = vst.msk [vmem:[#allocation3 + $0x72] sm:$0x3] %vm864, -inf
        %886 = vst.msk [vmem:[#allocation3 + $0x8a] sm:$0x3] %vm864, -inf
        %887 = vst.msk [vmem:[#allocation3 + $0xa2] sm:$0x3] %vm864, -inf
        %888 = vst.msk [vmem:[#allocation3 + $0xba] sm:$0x3] %vm864, -inf
        %889 = vst.msk [vmem:[#allocation3 + $0xd2] sm:$0x3] %vm864, -inf
        %890 = vst.msk [vmem:[#allocation3 + $0xea] sm:$0x3] %vm864, -inf
        %891 = vst.msk [vmem:[#allocation3 + $0x102] sm:$0x3] %vm864, -inf
        %892 = vst.msk [vmem:[#allocation3 + $0x11a] sm:$0x3] %vm864, -inf
        %893 = vst.msk [vmem:[#allocation3 + $0x132] sm:$0x3] %vm864, -inf
        %894 = vst.msk [vmem:[#allocation3 + $0x14a] sm:$0x3] %vm864, -inf
        %895 = vst.msk [vmem:[#allocation3 + $0x162] sm:$0x3] %vm864, -inf
        %896 = vst.msk [vmem:[#allocation3 + $0x17a] sm:$0x3] %vm864, -inf
        %v897 = vpack.c.bf16 %v823, %v822
        %v898 = vpack.c.bf16 %v825, %v824
        %v899 = vpack.c.bf16 %v827, %v826
        %v900 = vpack.c.bf16 %v829, %v828
        %v901 = vpack.c.bf16 %v831, %v830
        %v902 = vpack.c.bf16 %v833, %v832
        %v903 = vpack.c.bf16 %v835, %v834
        %v904 = vpack.c.bf16 %v837, %v836
        %v905 = vpack.c.bf16 %v839, %v838
        %v906 = vpack.c.bf16 %v841, %v840
        %v907 = vpack.c.bf16 %v843, %v842
        %v908 = vpack.c.bf16 %v845, %v844
        %v909 = vpack.c.bf16 %v847, %v846
        %v910 = vpack.c.bf16 %v849, %v848
        %v911 = vpack.c.bf16 %v851, %v850
        %v912 = vpack.c.bf16 %v853, %v852
        %v913 = vld [vmem:[#allocation10] sm:$0x1]
        %s914 = scalar_lea.vmem [#allocation2], 32
        %915 = vst.msk [vmem:[%s914] sm:$0xff] %vm854, %v822
        %916 = vst.msk [vmem:[%s914 + $0x8] sm:$0xff] %vm854, %v823
        %917 = vst.msk [vmem:[%s914 + $0x10] sm:$0xff] %vm854, %v824
        %918 = vst.msk [vmem:[%s914 + $0x18] sm:$0xff] %vm854, %v825
        %919 = vst.msk [vmem:[%s914 + $0x20] sm:$0xff] %vm854, %v826
        %920 = vst.msk [vmem:[%s914 + $0x28] sm:$0xff] %vm854, %v827
        %921 = vst.msk [vmem:[%s914 + $0x30] sm:$0xff] %vm854, %v828
        %922 = vst.msk [vmem:[%s914 + $0x38] sm:$0xff] %vm854, %v829
        %923 = vst.msk [vmem:[%s914 + $0x40] sm:$0xff] %vm854, %v830
        %924 = vst.msk [vmem:[%s914 + $0x48] sm:$0xff] %vm854, %v831
        %925 = vst.msk [vmem:[%s914 + $0x50] sm:$0xff] %vm854, %v832
        %926 = vst.msk [vmem:[%s914 + $0x58] sm:$0xff] %vm854, %v833
        %927 = vst.msk [vmem:[%s914 + $0x60] sm:$0xff] %vm854, %v834
        %928 = vst.msk [vmem:[%s914 + $0x68] sm:$0xff] %vm854, %v835
        %929 = vst.msk [vmem:[%s914 + $0x70] sm:$0xff] %vm854, %v836
        %930 = vst.msk [vmem:[%s914 + $0x78] sm:$0xff] %vm854, %v837
        %931 = vst.msk [vmem:[%s914 + $0x80] sm:$0xff] %vm854, %v838
        %932 = vst.msk [vmem:[%s914 + $0x88] sm:$0xff] %vm854, %v839
        %933 = vst.msk [vmem:[%s914 + $0x90] sm:$0xff] %vm854, %v840
        %934 = vst.msk [vmem:[%s914 + $0x98] sm:$0xff] %vm854, %v841
        %935 = vst.msk [vmem:[%s914 + $0xa0] sm:$0xff] %vm854, %v842
        %936 = vst.msk [vmem:[%s914 + $0xa8] sm:$0xff] %vm854, %v843
        %937 = vst.msk [vmem:[%s914 + $0xb0] sm:$0xff] %vm854, %v844
        %938 = vst.msk [vmem:[%s914 + $0xb8] sm:$0xff] %vm854, %v845
        %939 = vst.msk [vmem:[%s914 + $0xc0] sm:$0xff] %vm854, %v846
        %940 = vst.msk [vmem:[%s914 + $0xc8] sm:$0xff] %vm854, %v847
        %941 = vst.msk [vmem:[%s914 + $0xd0] sm:$0xff] %vm854, %v848
        %942 = vst.msk [vmem:[%s914 + $0xd8] sm:$0xff] %vm854, %v849
        %943 = vst.msk [vmem:[%s914 + $0xe0] sm:$0xff] %vm854, %v850
        %944 = vst.msk [vmem:[%s914 + $0xe8] sm:$0xff] %vm854, %v851
        %945 = vst.msk [vmem:[%s914 + $0xf0] sm:$0xff] %vm854, %v852
        %946 = vst.msk [vmem:[%s914 + $0xf8] sm:$0xff] %vm854, %v853
        %v947 = vld [vmem:[#allocation2] sm:$0xff]
        %v948 = vld [vmem:[#allocation2 + $0x8] sm:$0xff]
        %v949 = vld [vmem:[#allocation2 + $0x10] sm:$0xff]
        %v950 = vld [vmem:[#allocation2 + $0x18] sm:$0xff]
        %v951 = vld [vmem:[#allocation2 + $0x20] sm:$0xff]
        %v952 = vld [vmem:[#allocation2 + $0x28] sm:$0xff]
        %v953 = vld [vmem:[#allocation2 + $0x30] sm:$0xff]
        %v954 = vld [vmem:[#allocation2 + $0x38] sm:$0xff]
        %v955 = vld [vmem:[#allocation2 + $0x40] sm:$0xff]
        %v956 = vld [vmem:[#allocation2 + $0x48] sm:$0xff]
        %v957 = vld [vmem:[#allocation2 + $0x50] sm:$0xff]
        %v958 = vld [vmem:[#allocation2 + $0x58] sm:$0xff]
        %v959 = vld [vmem:[#allocation2 + $0x60] sm:$0xff]
        %v960 = vld [vmem:[#allocation2 + $0x68] sm:$0xff]
        %v961 = vld [vmem:[#allocation2 + $0x70] sm:$0xff]
        %v962 = vld [vmem:[#allocation2 + $0x78] sm:$0xff]
        %v963 = vld [vmem:[#allocation2 + $0x80] sm:$0xff]
        %v964 = vld [vmem:[#allocation2 + $0x88] sm:$0xff]
        %v965 = vld [vmem:[#allocation2 + $0x90] sm:$0xff]
        %v966 = vld [vmem:[#allocation2 + $0x98] sm:$0xff]
        %v967 = vld [vmem:[#allocation2 + $0xa0] sm:$0xff]
        %v968 = vld [vmem:[#allocation2 + $0xa8] sm:$0xff]
        %v969 = vld [vmem:[#allocation2 + $0xb0] sm:$0xff]
        %v970 = vld [vmem:[#allocation2 + $0xb8] sm:$0xff]
        %v971 = vld [vmem:[#allocation2 + $0xc0] sm:$0xff]
        %v972 = vld [vmem:[#allocation2 + $0xc8] sm:$0xff]
        %v973 = vld [vmem:[#allocation2 + $0xd0] sm:$0xff]
        %v974 = vld [vmem:[#allocation2 + $0xd8] sm:$0xff]
        %v975 = vld [vmem:[#allocation2 + $0xe0] sm:$0xff]
        %v976 = vld [vmem:[#allocation2 + $0xe8] sm:$0xff]
        %v977 = vld [vmem:[#allocation2 + $0xf0] sm:$0xff]
        %v978 = vld [vmem:[#allocation2 + $0xf8] sm:$0xff]
        %s979 = scalar_lea.vmem [#allocation2], 16
        %v980 = vld [vmem:[%s979] sm:$0xff]
        %v981 = vld [vmem:[%s979 + $0x8] sm:$0xff]
        %v982 = vld [vmem:[%s979 + $0x10] sm:$0xff]
        %v983 = vld [vmem:[%s979 + $0x18] sm:$0xff]
        %v984 = vld [vmem:[%s979 + $0x20] sm:$0xff]
        %v985 = vld [vmem:[%s979 + $0x28] sm:$0xff]
        %v986 = vld [vmem:[%s979 + $0x30] sm:$0xff]
        %v987 = vld [vmem:[%s979 + $0x38] sm:$0xff]
        %v988 = vld [vmem:[%s979 + $0x40] sm:$0xff]
        %v989 = vld [vmem:[%s979 + $0x48] sm:$0xff]
        %v990 = vld [vmem:[%s979 + $0x50] sm:$0xff]
        %v991 = vld [vmem:[%s979 + $0x58] sm:$0xff]
        %v992 = vld [vmem:[%s979 + $0x60] sm:$0xff]
        %v993 = vld [vmem:[%s979 + $0x68] sm:$0xff]
        %v994 = vld [vmem:[%s979 + $0x70] sm:$0xff]
        %v995 = vld [vmem:[%s979 + $0x78] sm:$0xff]
        %v996 = vld [vmem:[%s979 + $0x80] sm:$0xff]
        %v997 = vld [vmem:[%s979 + $0x88] sm:$0xff]
        %v998 = vld [vmem:[%s979 + $0x90] sm:$0xff]
        %v999 = vld [vmem:[%s979 + $0x98] sm:$0xff]
        %v1000 = vld [vmem:[%s979 + $0xa0] sm:$0xff]
        %v1001 = vld [vmem:[%s979 + $0xa8] sm:$0xff]
        %v1002 = vld [vmem:[%s979 + $0xb0] sm:$0xff]
        %v1003 = vld [vmem:[%s979 + $0xb8] sm:$0xff]
        %v1004 = vld [vmem:[%s979 + $0xc0] sm:$0xff]
        %v1005 = vld [vmem:[%s979 + $0xc8] sm:$0xff]
        %v1006 = vld [vmem:[%s979 + $0xd0] sm:$0xff]
        %v1007 = vld [vmem:[%s979 + $0xd8] sm:$0xff]
        %v1008 = vld [vmem:[%s979 + $0xe0] sm:$0xff]
        %v1009 = vld [vmem:[%s979 + $0xe8] sm:$0xff]
        %v1010 = vld [vmem:[%s979 + $0xf0] sm:$0xff]
        %v1011 = vld [vmem:[%s979 + $0xf8] sm:$0xff]
        %v1012 = vmax.f32 %v947, %v980
        %v1013 = vmax.f32 %v948, %v981
        %v1014 = vmax.f32 %v949, %v982
        %v1015 = vmax.f32 %v950, %v983
        %v1016 = vmax.f32 %v951, %v984
        %v1017 = vmax.f32 %v952, %v985
        %v1018 = vmax.f32 %v953, %v986
        %v1019 = vmax.f32 %v954, %v987
        %v1020 = vmax.f32 %v955, %v988
        %v1021 = vmax.f32 %v956, %v989
        %v1022 = vmax.f32 %v957, %v990
        %v1023 = vmax.f32 %v958, %v991
        %v1024 = vmax.f32 %v959, %v992
        %v1025 = vmax.f32 %v960, %v993
        %v1026 = vmax.f32 %v961, %v994
        %v1027 = vmax.f32 %v962, %v995
        %v1028 = vmax.f32 %v963, %v996
        %v1029 = vmax.f32 %v964, %v997
        %v1030 = vmax.f32 %v965, %v998
        %v1031 = vmax.f32 %v966, %v999
        %v1032 = vmax.f32 %v967, %v1000
        %v1033 = vmax.f32 %v968, %v1001
        %v1034 = vmax.f32 %v969, %v1002
        %v1035 = vmax.f32 %v970, %v1003
        %v1036 = vmax.f32 %v971, %v1004
        %v1037 = vmax.f32 %v972, %v1005
        %v1038 = vmax.f32 %v973, %v1006
        %v1039 = vmax.f32 %v974, %v1007
        %v1040 = vmax.f32 %v975, %v1008
        %v1041 = vmax.f32 %v976, %v1009
        %v1042 = vmax.f32 %v977, %v1010
        %v1043 = vmax.f32 %v978, %v1011
        %v1044 = vld [vmem:[%s914] sm:$0xff]
        %v1045 = vld [vmem:[%s914 + $0x8] sm:$0xff]
        %v1046 = vld [vmem:[%s914 + $0x10] sm:$0xff]
        %v1047 = vld [vmem:[%s914 + $0x18] sm:$0xff]
        %v1048 = vld [vmem:[%s914 + $0x20] sm:$0xff]
        %v1049 = vld [vmem:[%s914 + $0x28] sm:$0xff]
        %v1050 = vld [vmem:[%s914 + $0x30] sm:$0xff]
        %v1051 = vld [vmem:[%s914 + $0x38] sm:$0xff]
        %v1052 = vld [vmem:[%s914 + $0x40] sm:$0xff]
        %v1053 = vld [vmem:[%s914 + $0x48] sm:$0xff]
        %v1054 = vld [vmem:[%s914 + $0x50] sm:$0xff]
        %v1055 = vld [vmem:[%s914 + $0x58] sm:$0xff]
        %v1056 = vld [vmem:[%s914 + $0x60] sm:$0xff]
        %v1057 = vld [vmem:[%s914 + $0x68] sm:$0xff]
        %v1058 = vld [vmem:[%s914 + $0x70] sm:$0xff]
        %v1059 = vld [vmem:[%s914 + $0x78] sm:$0xff]
        %v1060 = vld [vmem:[%s914 + $0x80] sm:$0xff]
        %v1061 = vld [vmem:[%s914 + $0x88] sm:$0xff]
        %v1062 = vld [vmem:[%s914 + $0x90] sm:$0xff]
        %v1063 = vld [vmem:[%s914 + $0x98] sm:$0xff]
        %v1064 = vld [vmem:[%s914 + $0xa0] sm:$0xff]
        %v1065 = vld [vmem:[%s914 + $0xa8] sm:$0xff]
        %v1066 = vld [vmem:[%s914 + $0xb0] sm:$0xff]
        %v1067 = vld [vmem:[%s914 + $0xb8] sm:$0xff]
        %v1068 = vld [vmem:[%s914 + $0xc0] sm:$0xff]
        %v1069 = vld [vmem:[%s914 + $0xc8] sm:$0xff]
        %v1070 = vld [vmem:[%s914 + $0xd0] sm:$0xff]
        %v1071 = vld [vmem:[%s914 + $0xd8] sm:$0xff]
        %v1072 = vld [vmem:[%s914 + $0xe0] sm:$0xff]
        %v1073 = vld [vmem:[%s914 + $0xe8] sm:$0xff]
        %v1074 = vld [vmem:[%s914 + $0xf0] sm:$0xff]
        %v1075 = vld [vmem:[%s914 + $0xf8] sm:$0xff]
        %s1076 = scalar_lea.vmem [#allocation2], 48
        %v1077 = vld [vmem:[%s1076] sm:$0xff]
        %v1078 = vld [vmem:[%s1076 + $0x8] sm:$0xff]
        %v1079 = vld [vmem:[%s1076 + $0x10] sm:$0xff]
        %v1080 = vld [vmem:[%s1076 + $0x18] sm:$0xff]
        %v1081 = vld [vmem:[%s1076 + $0x20] sm:$0xff]
        %v1082 = vld [vmem:[%s1076 + $0x28] sm:$0xff]
        %v1083 = vld [vmem:[%s1076 + $0x30] sm:$0xff]
        %v1084 = vld [vmem:[%s1076 + $0x38] sm:$0xff]
        %v1085 = vld [vmem:[%s1076 + $0x40] sm:$0xff]
        %v1086 = vld [vmem:[%s1076 + $0x48] sm:$0xff]
        %v1087 = vld [vmem:[%s1076 + $0x50] sm:$0xff]
        %v1088 = vld [vmem:[%s1076 + $0x58] sm:$0xff]
        %v1089 = vld [vmem:[%s1076 + $0x60] sm:$0xff]
        %v1090 = vld [vmem:[%s1076 + $0x68] sm:$0xff]
        %v1091 = vld [vmem:[%s1076 + $0x70] sm:$0xff]
        %v1092 = vld [vmem:[%s1076 + $0x78] sm:$0xff]
        %v1093 = vld [vmem:[%s1076 + $0x80] sm:$0xff]
        %v1094 = vld [vmem:[%s1076 + $0x88] sm:$0xff]
        %v1095 = vld [vmem:[%s1076 + $0x90] sm:$0xff]
        %v1096 = vld [vmem:[%s1076 + $0x98] sm:$0xff]
        %v1097 = vld [vmem:[%s1076 + $0xa0] sm:$0xff]
        %v1098 = vld [vmem:[%s1076 + $0xa8] sm:$0xff]
        %v1099 = vld [vmem:[%s1076 + $0xb0] sm:$0xff]
        %v1100 = vld [vmem:[%s1076 + $0xb8] sm:$0xff]
        %v1101 = vld [vmem:[%s1076 + $0xc0] sm:$0xff]
        %v1102 = vld [vmem:[%s1076 + $0xc8] sm:$0xff]
        %v1103 = vld [vmem:[%s1076 + $0xd0] sm:$0xff]
        %v1104 = vld [vmem:[%s1076 + $0xd8] sm:$0xff]
        %v1105 = vld [vmem:[%s1076 + $0xe0] sm:$0xff]
        %v1106 = vld [vmem:[%s1076 + $0xe8] sm:$0xff]
        %v1107 = vld [vmem:[%s1076 + $0xf0] sm:$0xff]
        %v1108 = vld [vmem:[%s1076 + $0xf8] sm:$0xff]
        %v1109 = vmax.f32 %v1044, %v1077
        %v1110 = vmax.f32 %v1045, %v1078
        %v1111 = vmax.f32 %v1046, %v1079
        %v1112 = vmax.f32 %v1047, %v1080
        %v1113 = vmax.f32 %v1048, %v1081
        %v1114 = vmax.f32 %v1049, %v1082
        %v1115 = vmax.f32 %v1050, %v1083
        %v1116 = vmax.f32 %v1051, %v1084
        %v1117 = vmax.f32 %v1052, %v1085
        %v1118 = vmax.f32 %v1053, %v1086
        %v1119 = vmax.f32 %v1054, %v1087
        %v1120 = vmax.f32 %v1055, %v1088
        %v1121 = vmax.f32 %v1056, %v1089
        %v1122 = vmax.f32 %v1057, %v1090
        %v1123 = vmax.f32 %v1058, %v1091
        %v1124 = vmax.f32 %v1059, %v1092
        %v1125 = vmax.f32 %v1060, %v1093
        %v1126 = vmax.f32 %v1061, %v1094
        %v1127 = vmax.f32 %v1062, %v1095
        %v1128 = vmax.f32 %v1063, %v1096
        %v1129 = vmax.f32 %v1064, %v1097
        %v1130 = vmax.f32 %v1065, %v1098
        %v1131 = vmax.f32 %v1066, %v1099
        %v1132 = vmax.f32 %v1067, %v1100
        %v1133 = vmax.f32 %v1068, %v1101
        %v1134 = vmax.f32 %v1069, %v1102
        %v1135 = vmax.f32 %v1070, %v1103
        %v1136 = vmax.f32 %v1071, %v1104
        %v1137 = vmax.f32 %v1072, %v1105
        %v1138 = vmax.f32 %v1073, %v1106
        %v1139 = vmax.f32 %v1074, %v1107
        %v1140 = vmax.f32 %v1075, %v1108
        %v1141 = vmax.f32 %v1012, %v1109
        %v1142 = vmax.f32 %v1013, %v1110
        %v1143 = vmax.f32 %v1014, %v1111
        %v1144 = vmax.f32 %v1015, %v1112
        %v1145 = vmax.f32 %v1016, %v1113
        %v1146 = vmax.f32 %v1017, %v1114
        %v1147 = vmax.f32 %v1018, %v1115
        %v1148 = vmax.f32 %v1019, %v1116
        %v1149 = vmax.f32 %v1020, %v1117
        %v1150 = vmax.f32 %v1021, %v1118
        %v1151 = vmax.f32 %v1022, %v1119
        %v1152 = vmax.f32 %v1023, %v1120
        %v1153 = vmax.f32 %v1024, %v1121
        %v1154 = vmax.f32 %v1025, %v1122
        %v1155 = vmax.f32 %v1026, %v1123
        %v1156 = vmax.f32 %v1027, %v1124
        %v1157 = vmax.f32 %v1028, %v1125
        %v1158 = vmax.f32 %v1029, %v1126
        %v1159 = vmax.f32 %v1030, %v1127
        %v1160 = vmax.f32 %v1031, %v1128
        %v1161 = vmax.f32 %v1032, %v1129
        %v1162 = vmax.f32 %v1033, %v1130
        %v1163 = vmax.f32 %v1034, %v1131
        %v1164 = vmax.f32 %v1035, %v1132
        %v1165 = vmax.f32 %v1036, %v1133
        %v1166 = vmax.f32 %v1037, %v1134
        %v1167 = vmax.f32 %v1038, %v1135
        %v1168 = vmax.f32 %v1039, %v1136
        %v1169 = vmax.f32 %v1040, %v1137
        %v1170 = vmax.f32 %v1041, %v1138
        %v1171 = vmax.f32 %v1042, %v1139
        %v1172 = vmax.f32 %v1043, %v1140
        %s1173 = scalar_lea.vmem [#allocation2], 64
        %v1174 = vld [vmem:[%s1173] sm:$0xff]
        %v1175 = vld [vmem:[%s1173 + $0x8] sm:$0xff]
        %v1176 = vld [vmem:[%s1173 + $0x10] sm:$0xff]
        %v1177 = vld [vmem:[%s1173 + $0x18] sm:$0xff]
        %v1178 = vld [vmem:[%s1173 + $0x20] sm:$0xff]
        %v1179 = vld [vmem:[%s1173 + $0x28] sm:$0xff]
        %v1180 = vld [vmem:[%s1173 + $0x30] sm:$0xff]
        %v1181 = vld [vmem:[%s1173 + $0x38] sm:$0xff]
        %v1182 = vld [vmem:[%s1173 + $0x40] sm:$0xff]
        %v1183 = vld [vmem:[%s1173 + $0x48] sm:$0xff]
        %v1184 = vld [vmem:[%s1173 + $0x50] sm:$0xff]
        %v1185 = vld [vmem:[%s1173 + $0x58] sm:$0xff]
        %v1186 = vld [vmem:[%s1173 + $0x60] sm:$0xff]
        %v1187 = vld [vmem:[%s1173 + $0x68] sm:$0xff]
        %v1188 = vld [vmem:[%s1173 + $0x70] sm:$0xff]
        %v1189 = vld [vmem:[%s1173 + $0x78] sm:$0xff]
        %v1190 = vld [vmem:[%s1173 + $0x80] sm:$0xff]
        %v1191 = vld [vmem:[%s1173 + $0x88] sm:$0xff]
        %v1192 = vld [vmem:[%s1173 + $0x90] sm:$0xff]
        %v1193 = vld [vmem:[%s1173 + $0x98] sm:$0xff]
        %v1194 = vld [vmem:[%s1173 + $0xa0] sm:$0xff]
        %v1195 = vld [vmem:[%s1173 + $0xa8] sm:$0xff]
        %v1196 = vld [vmem:[%s1173 + $0xb0] sm:$0xff]
        %v1197 = vld [vmem:[%s1173 + $0xb8] sm:$0xff]
        %v1198 = vld [vmem:[%s1173 + $0xc0] sm:$0xff]
        %v1199 = vld [vmem:[%s1173 + $0xc8] sm:$0xff]
        %v1200 = vld [vmem:[%s1173 + $0xd0] sm:$0xff]
        %v1201 = vld [vmem:[%s1173 + $0xd8] sm:$0xff]
        %v1202 = vld [vmem:[%s1173 + $0xe0] sm:$0xff]
        %v1203 = vld [vmem:[%s1173 + $0xe8] sm:$0xff]
        %v1204 = vld [vmem:[%s1173 + $0xf0] sm:$0xff]
        %v1205 = vld [vmem:[%s1173 + $0xf8] sm:$0xff]
        %v1206 = vmax.f32 %v1141, %v1174
        %v1207 = vmax.f32 %v1142, %v1175
        %v1208 = vmax.f32 %v1143, %v1176
        %v1209 = vmax.f32 %v1144, %v1177
        %v1210 = vmax.f32 %v1145, %v1178
        %v1211 = vmax.f32 %v1146, %v1179
        %v1212 = vmax.f32 %v1147, %v1180
        %v1213 = vmax.f32 %v1148, %v1181
        %v1214 = vmax.f32 %v1149, %v1182
        %v1215 = vmax.f32 %v1150, %v1183
        %v1216 = vmax.f32 %v1151, %v1184
        %v1217 = vmax.f32 %v1152, %v1185
        %v1218 = vmax.f32 %v1153, %v1186
        %v1219 = vmax.f32 %v1154, %v1187
        %v1220 = vmax.f32 %v1155, %v1188
        %v1221 = vmax.f32 %v1156, %v1189
        %v1222 = vmax.f32 %v1157, %v1190
        %v1223 = vmax.f32 %v1158, %v1191
        %v1224 = vmax.f32 %v1159, %v1192
        %v1225 = vmax.f32 %v1160, %v1193
        %v1226 = vmax.f32 %v1161, %v1194
        %v1227 = vmax.f32 %v1162, %v1195
        %v1228 = vmax.f32 %v1163, %v1196
        %v1229 = vmax.f32 %v1164, %v1197
        %v1230 = vmax.f32 %v1165, %v1198
        %v1231 = vmax.f32 %v1166, %v1199
        %v1232 = vmax.f32 %v1167, %v1200
        %v1233 = vmax.f32 %v1168, %v1201
        %v1234 = vmax.f32 %v1169, %v1202
        %v1235 = vmax.f32 %v1170, %v1203
        %v1236 = vmax.f32 %v1171, %v1204
        %v1237 = vmax.f32 %v1172, %v1205
        %1238 = vst.msk [vmem:[#allocation3 + $0x2] sm:$0xff] %vm854, %v1206
        %1239 = vst.msk [vmem:[#allocation3 + $0xa] sm:$0xff] %vm854, %v1207
        %1240 = vst.msk [vmem:[#allocation3 + $0x1a] sm:$0xff] %vm854, %v1208
        %1241 = vst.msk [vmem:[#allocation3 + $0x22] sm:$0xff] %vm854, %v1209
        %1242 = vst.msk [vmem:[#allocation3 + $0x32] sm:$0xff] %vm854, %v1210
        %1243 = vst.msk [vmem:[#allocation3 + $0x3a] sm:$0xff] %vm854, %v1211
        %1244 = vst.msk [vmem:[#allocation3 + $0x4a] sm:$0xff] %vm854, %v1212
        %1245 = vst.msk [vmem:[#allocation3 + $0x52] sm:$0xff] %vm854, %v1213
        %1246 = vst.msk [vmem:[#allocation3 + $0x62] sm:$0xff] %vm854, %v1214
        %1247 = vst.msk [vmem:[#allocation3 + $0x6a] sm:$0xff] %vm854, %v1215
        %1248 = vst.msk [vmem:[#allocation3 + $0x7a] sm:$0xff] %vm854, %v1216
        %1249 = vst.msk [vmem:[#allocation3 + $0x82] sm:$0xff] %vm854, %v1217
        %1250 = vst.msk [vmem:[#allocation3 + $0x92] sm:$0xff] %vm854, %v1218
        %1251 = vst.msk [vmem:[#allocation3 + $0x9a] sm:$0xff] %vm854, %v1219
        %1252 = vst.msk [vmem:[#allocation3 + $0xaa] sm:$0xff] %vm854, %v1220
        %1253 = vst.msk [vmem:[#allocation3 + $0xb2] sm:$0xff] %vm854, %v1221
        %1254 = vst.msk [vmem:[#allocation3 + $0xc2] sm:$0xff] %vm854, %v1222
        %1255 = vst.msk [vmem:[#allocation3 + $0xca] sm:$0xff] %vm854, %v1223
        %1256 = vst.msk [vmem:[#allocation3 + $0xda] sm:$0xff] %vm854, %v1224
        %1257 = vst.msk [vmem:[#allocation3 + $0xe2] sm:$0xff] %vm854, %v1225
        %1258 = vst.msk [vmem:[#allocation3 + $0xf2] sm:$0xff] %vm854, %v1226
        %1259 = vst.msk [vmem:[#allocation3 + $0xfa] sm:$0xff] %vm854, %v1227
        %1260 = vst.msk [vmem:[#allocation3 + $0x10a] sm:$0xff] %vm854, %v1228
        %1261 = vst.msk [vmem:[#allocation3 + $0x112] sm:$0xff] %vm854, %v1229
        %1262 = vst.msk [vmem:[#allocation3 + $0x122] sm:$0xff] %vm854, %v1230
        %1263 = vst.msk [vmem:[#allocation3 + $0x12a] sm:$0xff] %vm854, %v1231
        %1264 = vst.msk [vmem:[#allocation3 + $0x13a] sm:$0xff] %vm854, %v1232
        %1265 = vst.msk [vmem:[#allocation3 + $0x142] sm:$0xff] %vm854, %v1233
        %1266 = vst.msk [vmem:[#allocation3 + $0x152] sm:$0xff] %vm854, %v1234
        %1267 = vst.msk [vmem:[#allocation3 + $0x15a] sm:$0xff] %vm854, %v1235
        %1268 = vst.msk [vmem:[#allocation3 + $0x16a] sm:$0xff] %vm854, %v1236
        %1269 = vst.msk [vmem:[#allocation3 + $0x172] sm:$0xff] %vm854, %v1237
        %v1270 = vld [vmem:[#allocation3] sm:$0xff]
        %v1271 = vld [vmem:[#allocation3 + $0x8] sm:$0xff]
        %v1272 = vld [vmem:[#allocation3 + $0x18] sm:$0xff]
        %v1273 = vld [vmem:[#allocation3 + $0x20] sm:$0xff]
        %v1274 = vld [vmem:[#allocation3 + $0x30] sm:$0xff]
        %v1275 = vld [vmem:[#allocation3 + $0x38] sm:$0xff]
        %v1276 = vld [vmem:[#allocation3 + $0x48] sm:$0xff]
        %v1277 = vld [vmem:[#allocation3 + $0x50] sm:$0xff]
        %v1278 = vld [vmem:[#allocation3 + $0x60] sm:$0xff]
        %v1279 = vld [vmem:[#allocation3 + $0x68] sm:$0xff]
        %v1280 = vld [vmem:[#allocation3 + $0x78] sm:$0xff]
        %v1281 = vld [vmem:[#allocation3 + $0x80] sm:$0xff]
        %v1282 = vld [vmem:[#allocation3 + $0x90] sm:$0xff]
        %v1283 = vld [vmem:[#allocation3 + $0x98] sm:$0xff]
        %v1284 = vld [vmem:[#allocation3 + $0xa8] sm:$0xff]
        %v1285 = vld [vmem:[#allocation3 + $0xb0] sm:$0xff]
        %v1286 = vld [vmem:[#allocation3 + $0xc0] sm:$0xff]
        %v1287 = vld [vmem:[#allocation3 + $0xc8] sm:$0xff]
        %v1288 = vld [vmem:[#allocation3 + $0xd8] sm:$0xff]
        %v1289 = vld [vmem:[#allocation3 + $0xe0] sm:$0xff]
        %v1290 = vld [vmem:[#allocation3 + $0xf0] sm:$0xff]
        %v1291 = vld [vmem:[#allocation3 + $0xf8] sm:$0xff]
        %v1292 = vld [vmem:[#allocation3 + $0x108] sm:$0xff]
        %v1293 = vld [vmem:[#allocation3 + $0x110] sm:$0xff]
        %v1294 = vld [vmem:[#allocation3 + $0x120] sm:$0xff]
        %v1295 = vld [vmem:[#allocation3 + $0x128] sm:$0xff]
        %v1296 = vld [vmem:[#allocation3 + $0x138] sm:$0xff]
        %v1297 = vld [vmem:[#allocation3 + $0x140] sm:$0xff]
        %v1298 = vld [vmem:[#allocation3 + $0x150] sm:$0xff]
        %v1299 = vld [vmem:[#allocation3 + $0x158] sm:$0xff]
        %v1300 = vld [vmem:[#allocation3 + $0x168] sm:$0xff]
        %v1301 = vld [vmem:[#allocation3 + $0x170] sm:$0xff]
        %v1302 = vld [vmem:[#allocation3 + $0x1] sm:$0xff]
        %v1303 = vld [vmem:[#allocation3 + $0x9] sm:$0xff]
        %v1304 = vld [vmem:[#allocation3 + $0x19] sm:$0xff]
        %v1305 = vld [vmem:[#allocation3 + $0x21] sm:$0xff]
        %v1306 = vld [vmem:[#allocation3 + $0x31] sm:$0xff]
        %v1307 = vld [vmem:[#allocation3 + $0x39] sm:$0xff]
        %v1308 = vld [vmem:[#allocation3 + $0x49] sm:$0xff]
        %v1309 = vld [vmem:[#allocation3 + $0x51] sm:$0xff]
        %v1310 = vld [vmem:[#allocation3 + $0x61] sm:$0xff]
        %v1311 = vld [vmem:[#allocation3 + $0x69] sm:$0xff]
        %v1312 = vld [vmem:[#allocation3 + $0x79] sm:$0xff]
        %v1313 = vld [vmem:[#allocation3 + $0x81] sm:$0xff]
        %v1314 = vld [vmem:[#allocation3 + $0x91] sm:$0xff]
        %v1315 = vld [vmem:[#allocation3 + $0x99] sm:$0xff]
        %v1316 = vld [vmem:[#allocation3 + $0xa9] sm:$0xff]
        %v1317 = vld [vmem:[#allocation3 + $0xb1] sm:$0xff]
        %v1318 = vld [vmem:[#allocation3 + $0xc1] sm:$0xff]
        %v1319 = vld [vmem:[#allocation3 + $0xc9] sm:$0xff]
        %v1320 = vld [vmem:[#allocation3 + $0xd9] sm:$0xff]
        %v1321 = vld [vmem:[#allocation3 + $0xe1] sm:$0xff]
        %v1322 = vld [vmem:[#allocation3 + $0xf1] sm:$0xff]
        %v1323 = vld [vmem:[#allocation3 + $0xf9] sm:$0xff]
        %v1324 = vld [vmem:[#allocation3 + $0x109] sm:$0xff]
        %v1325 = vld [vmem:[#allocation3 + $0x111] sm:$0xff]
        %v1326 = vld [vmem:[#allocation3 + $0x121] sm:$0xff]
        %v1327 = vld [vmem:[#allocation3 + $0x129] sm:$0xff]
        %v1328 = vld [vmem:[#allocation3 + $0x139] sm:$0xff]
        %v1329 = vld [vmem:[#allocation3 + $0x141] sm:$0xff]
        %v1330 = vld [vmem:[#allocation3 + $0x151] sm:$0xff]
        %v1331 = vld [vmem:[#allocation3 + $0x159] sm:$0xff]
        %v1332 = vld [vmem:[#allocation3 + $0x169] sm:$0xff]
        %v1333 = vld [vmem:[#allocation3 + $0x171] sm:$0xff]
        %v1334 = vmax.f32 %v1270, %v1302
        %v1335 = vmax.f32 %v1271, %v1303
        %v1336 = vmax.f32 %v1272, %v1304
        %v1337 = vmax.f32 %v1273, %v1305
        %v1338 = vmax.f32 %v1274, %v1306
        %v1339 = vmax.f32 %v1275, %v1307
        %v1340 = vmax.f32 %v1276, %v1308
        %v1341 = vmax.f32 %v1277, %v1309
        %v1342 = vmax.f32 %v1278, %v1310
        %v1343 = vmax.f32 %v1279, %v1311
        %v1344 = vmax.f32 %v1280, %v1312
        %v1345 = vmax.f32 %v1281, %v1313
        %v1346 = vmax.f32 %v1282, %v1314
        %v1347 = vmax.f32 %v1283, %v1315
        %v1348 = vmax.f32 %v1284, %v1316
        %v1349 = vmax.f32 %v1285, %v1317
        %v1350 = vmax.f32 %v1286, %v1318
        %v1351 = vmax.f32 %v1287, %v1319
        %v1352 = vmax.f32 %v1288, %v1320
        %v1353 = vmax.f32 %v1289, %v1321
        %v1354 = vmax.f32 %v1290, %v1322
        %v1355 = vmax.f32 %v1291, %v1323
        %v1356 = vmax.f32 %v1292, %v1324
        %v1357 = vmax.f32 %v1293, %v1325
        %v1358 = vmax.f32 %v1294, %v1326
        %v1359 = vmax.f32 %v1295, %v1327
        %v1360 = vmax.f32 %v1296, %v1328
        %v1361 = vmax.f32 %v1297, %v1329
        %v1362 = vmax.f32 %v1298, %v1330
        %v1363 = vmax.f32 %v1299, %v1331
        %v1364 = vmax.f32 %v1300, %v1332
        %v1365 = vmax.f32 %v1301, %v1333
        %v1366 = vld [vmem:[#allocation3 + $0x2] sm:$0xff]
        %v1367 = vld [vmem:[#allocation3 + $0xa] sm:$0xff]
        %v1368 = vld [vmem:[#allocation3 + $0x1a] sm:$0xff]
        %v1369 = vld [vmem:[#allocation3 + $0x22] sm:$0xff]
        %v1370 = vld [vmem:[#allocation3 + $0x32] sm:$0xff]
        %v1371 = vld [vmem:[#allocation3 + $0x3a] sm:$0xff]
        %v1372 = vld [vmem:[#allocation3 + $0x4a] sm:$0xff]
        %v1373 = vld [vmem:[#allocation3 + $0x52] sm:$0xff]
        %v1374 = vld [vmem:[#allocation3 + $0x62] sm:$0xff]
        %v1375 = vld [vmem:[#allocation3 + $0x6a] sm:$0xff]
        %v1376 = vld [vmem:[#allocation3 + $0x7a] sm:$0xff]
        %v1377 = vld [vmem:[#allocation3 + $0x82] sm:$0xff]
        %v1378 = vld [vmem:[#allocation3 + $0x92] sm:$0xff]
        %v1379 = vld [vmem:[#allocation3 + $0x9a] sm:$0xff]
        %v1380 = vld [vmem:[#allocation3 + $0xaa] sm:$0xff]
        %v1381 = vld [vmem:[#allocation3 + $0xb2] sm:$0xff]
        %v1382 = vld [vmem:[#allocation3 + $0xc2] sm:$0xff]
        %v1383 = vld [vmem:[#allocation3 + $0xca] sm:$0xff]
        %v1384 = vld [vmem:[#allocation3 + $0xda] sm:$0xff]
        %v1385 = vld [vmem:[#allocation3 + $0xe2] sm:$0xff]
        %v1386 = vld [vmem:[#allocation3 + $0xf2] sm:$0xff]
        %v1387 = vld [vmem:[#allocation3 + $0xfa] sm:$0xff]
        %v1388 = vld [vmem:[#allocation3 + $0x10a] sm:$0xff]
        %v1389 = vld [vmem:[#allocation3 + $0x112] sm:$0xff]
        %v1390 = vld [vmem:[#allocation3 + $0x122] sm:$0xff]
        %v1391 = vld [vmem:[#allocation3 + $0x12a] sm:$0xff]
        %v1392 = vld [vmem:[#allocation3 + $0x13a] sm:$0xff]
        %v1393 = vld [vmem:[#allocation3 + $0x142] sm:$0xff]
        %v1394 = vld [vmem:[#allocation3 + $0x152] sm:$0xff]
        %v1395 = vld [vmem:[#allocation3 + $0x15a] sm:$0xff]
        %v1396 = vld [vmem:[#allocation3 + $0x16a] sm:$0xff]
        %v1397 = vld [vmem:[#allocation3 + $0x172] sm:$0xff]
        %v1398 = vld [vmem:[#allocation3 + $0x3] sm:$0xff]
        %v1399 = vld [vmem:[#allocation3 + $0xb] sm:$0xff]
        %v1400 = vld [vmem:[#allocation3 + $0x1b] sm:$0xff]
        %v1401 = vld [vmem:[#allocation3 + $0x23] sm:$0xff]
        %v1402 = vld [vmem:[#allocation3 + $0x33] sm:$0xff]
        %v1403 = vld [vmem:[#allocation3 + $0x3b] sm:$0xff]
        %v1404 = vld [vmem:[#allocation3 + $0x4b] sm:$0xff]
        %v1405 = vld [vmem:[#allocation3 + $0x53] sm:$0xff]
        %v1406 = vld [vmem:[#allocation3 + $0x63] sm:$0xff]
        %v1407 = vld [vmem:[#allocation3 + $0x6b] sm:$0xff]
        %v1408 = vld [vmem:[#allocation3 + $0x7b] sm:$0xff]
        %v1409 = vld [vmem:[#allocation3 + $0x83] sm:$0xff]
        %v1410 = vld [vmem:[#allocation3 + $0x93] sm:$0xff]
        %v1411 = vld [vmem:[#allocation3 + $0x9b] sm:$0xff]
        %v1412 = vld [vmem:[#allocation3 + $0xab] sm:$0xff]
        %v1413 = vld [vmem:[#allocation3 + $0xb3] sm:$0xff]
        %v1414 = vld [vmem:[#allocation3 + $0xc3] sm:$0xff]
        %v1415 = vld [vmem:[#allocation3 + $0xcb] sm:$0xff]
        %v1416 = vld [vmem:[#allocation3 + $0xdb] sm:$0xff]
        %v1417 = vld [vmem:[#allocation3 + $0xe3] sm:$0xff]
        %v1418 = vld [vmem:[#allocation3 + $0xf3] sm:$0xff]
        %v1419 = vld [vmem:[#allocation3 + $0xfb] sm:$0xff]
        %v1420 = vld [vmem:[#allocation3 + $0x10b] sm:$0xff]
        %v1421 = vld [vmem:[#allocation3 + $0x113] sm:$0xff]
        %v1422 = vld [vmem:[#allocation3 + $0x123] sm:$0xff]
        %v1423 = vld [vmem:[#allocation3 + $0x12b] sm:$0xff]
        %v1424 = vld [vmem:[#allocation3 + $0x13b] sm:$0xff]
        %v1425 = vld [vmem:[#allocation3 + $0x143] sm:$0xff]
        %v1426 = vld [vmem:[#allocation3 + $0x153] sm:$0xff]
        %v1427 = vld [vmem:[#allocation3 + $0x15b] sm:$0xff]
        %v1428 = vld [vmem:[#allocation3 + $0x16b] sm:$0xff]
        %v1429 = vld [vmem:[#allocation3 + $0x173] sm:$0xff]
        %v1430 = vmax.f32 %v1366, %v1398
        %v1431 = vmax.f32 %v1367, %v1399
        %v1432 = vmax.f32 %v1368, %v1400
        %v1433 = vmax.f32 %v1369, %v1401
        %v1434 = vmax.f32 %v1370, %v1402
        %v1435 = vmax.f32 %v1371, %v1403
        %v1436 = vmax.f32 %v1372, %v1404
        %v1437 = vmax.f32 %v1373, %v1405
        %v1438 = vmax.f32 %v1374, %v1406
        %v1439 = vmax.f32 %v1375, %v1407
        %v1440 = vmax.f32 %v1376, %v1408
        %v1441 = vmax.f32 %v1377, %v1409
        %v1442 = vmax.f32 %v1378, %v1410
        %v1443 = vmax.f32 %v1379, %v1411
        %v1444 = vmax.f32 %v1380, %v1412
        %v1445 = vmax.f32 %v1381, %v1413
        %v1446 = vmax.f32 %v1382, %v1414
        %v1447 = vmax.f32 %v1383, %v1415
        %v1448 = vmax.f32 %v1384, %v1416
        %v1449 = vmax.f32 %v1385, %v1417
        %v1450 = vmax.f32 %v1386, %v1418
        %v1451 = vmax.f32 %v1387, %v1419
        %v1452 = vmax.f32 %v1388, %v1420
        %v1453 = vmax.f32 %v1389, %v1421
        %v1454 = vmax.f32 %v1390, %v1422
        %v1455 = vmax.f32 %v1391, %v1423
        %v1456 = vmax.f32 %v1392, %v1424
        %v1457 = vmax.f32 %v1393, %v1425
        %v1458 = vmax.f32 %v1394, %v1426
        %v1459 = vmax.f32 %v1395, %v1427
        %v1460 = vmax.f32 %v1396, %v1428
        %v1461 = vmax.f32 %v1397, %v1429
        %v1462 = vmax.f32 %v1334, %v1430
        %v1463 = vmax.f32 %v1335, %v1431
        %v1464 = vmax.f32 %v1336, %v1432
        %v1465 = vmax.f32 %v1337, %v1433
        %v1466 = vmax.f32 %v1338, %v1434
        %v1467 = vmax.f32 %v1339, %v1435
        %v1468 = vmax.f32 %v1340, %v1436
        %v1469 = vmax.f32 %v1341, %v1437
        %v1470 = vmax.f32 %v1342, %v1438
        %v1471 = vmax.f32 %v1343, %v1439
        %v1472 = vmax.f32 %v1344, %v1440
        %v1473 = vmax.f32 %v1345, %v1441
        %v1474 = vmax.f32 %v1346, %v1442
        %v1475 = vmax.f32 %v1347, %v1443
        %v1476 = vmax.f32 %v1348, %v1444
        %v1477 = vmax.f32 %v1349, %v1445
        %v1478 = vmax.f32 %v1350, %v1446
        %v1479 = vmax.f32 %v1351, %v1447
        %v1480 = vmax.f32 %v1352, %v1448
        %v1481 = vmax.f32 %v1353, %v1449
        %v1482 = vmax.f32 %v1354, %v1450
        %v1483 = vmax.f32 %v1355, %v1451
        %v1484 = vmax.f32 %v1356, %v1452
        %v1485 = vmax.f32 %v1357, %v1453
        %v1486 = vmax.f32 %v1358, %v1454
        %v1487 = vmax.f32 %v1359, %v1455
        %v1488 = vmax.f32 %v1360, %v1456
        %v1489 = vmax.f32 %v1361, %v1457
        %v1490 = vmax.f32 %v1362, %v1458
        %v1491 = vmax.f32 %v1363, %v1459
        %v1492 = vmax.f32 %v1364, %v1460
        %v1493 = vmax.f32 %v1365, %v1461
        %v1494 = vld [vmem:[#allocation3 + $0x4] sm:$0xff]
        %v1495 = vld [vmem:[#allocation3 + $0xc] sm:$0xff]
        %v1496 = vld [vmem:[#allocation3 + $0x1c] sm:$0xff]
        %v1497 = vld [vmem:[#allocation3 + $0x24] sm:$0xff]
        %v1498 = vld [vmem:[#allocation3 + $0x34] sm:$0xff]
        %v1499 = vld [vmem:[#allocation3 + $0x3c] sm:$0xff]
        %v1500 = vld [vmem:[#allocation3 + $0x4c] sm:$0xff]
        %v1501 = vld [vmem:[#allocation3 + $0x54] sm:$0xff]
        %v1502 = vld [vmem:[#allocation3 + $0x64] sm:$0xff]
        %v1503 = vld [vmem:[#allocation3 + $0x6c] sm:$0xff]
        %v1504 = vld [vmem:[#allocation3 + $0x7c] sm:$0xff]
        %v1505 = vld [vmem:[#allocation3 + $0x84] sm:$0xff]
        %v1506 = vld [vmem:[#allocation3 + $0x94] sm:$0xff]
        %v1507 = vld [vmem:[#allocation3 + $0x9c] sm:$0xff]
        %v1508 = vld [vmem:[#allocation3 + $0xac] sm:$0xff]
        %v1509 = vld [vmem:[#allocation3 + $0xb4] sm:$0xff]
        %v1510 = vld [vmem:[#allocation3 + $0xc4] sm:$0xff]
        %v1511 = vld [vmem:[#allocation3 + $0xcc] sm:$0xff]
        %v1512 = vld [vmem:[#allocation3 + $0xdc] sm:$0xff]
        %v1513 = vld [vmem:[#allocation3 + $0xe4] sm:$0xff]
        %v1514 = vld [vmem:[#allocation3 + $0xf4] sm:$0xff]
        %v1515 = vld [vmem:[#allocation3 + $0xfc] sm:$0xff]
        %v1516 = vld [vmem:[#allocation3 + $0x10c] sm:$0xff]
        %v1517 = vld [vmem:[#allocation3 + $0x114] sm:$0xff]
        %v1518 = vld [vmem:[#allocation3 + $0x124] sm:$0xff]
        %v1519 = vld [vmem:[#allocation3 + $0x12c] sm:$0xff]
        %v1520 = vld [vmem:[#allocation3 + $0x13c] sm:$0xff]
        %v1521 = vld [vmem:[#allocation3 + $0x144] sm:$0xff]
        %v1522 = vld [vmem:[#allocation3 + $0x154] sm:$0xff]
        %v1523 = vld [vmem:[#allocation3 + $0x15c] sm:$0xff]
        %v1524 = vld [vmem:[#allocation3 + $0x16c] sm:$0xff]
        %v1525 = vld [vmem:[#allocation3 + $0x174] sm:$0xff]
        %v1526 = vmax.f32 %v1462, %v1494
        %v1527 = vmax.f32 %v1463, %v1495
        %v1528 = vmax.f32 %v1464, %v1496
        %v1529 = vmax.f32 %v1465, %v1497
        %v1530 = vmax.f32 %v1466, %v1498
        %v1531 = vmax.f32 %v1467, %v1499
        %v1532 = vmax.f32 %v1468, %v1500
        %v1533 = vmax.f32 %v1469, %v1501
        %v1534 = vmax.f32 %v1470, %v1502
        %v1535 = vmax.f32 %v1471, %v1503
        %v1536 = vmax.f32 %v1472, %v1504
        %v1537 = vmax.f32 %v1473, %v1505
        %v1538 = vmax.f32 %v1474, %v1506
        %v1539 = vmax.f32 %v1475, %v1507
        %v1540 = vmax.f32 %v1476, %v1508
        %v1541 = vmax.f32 %v1477, %v1509
        %v1542 = vmax.f32 %v1478, %v1510
        %v1543 = vmax.f32 %v1479, %v1511
        %v1544 = vmax.f32 %v1480, %v1512
        %v1545 = vmax.f32 %v1481, %v1513
        %v1546 = vmax.f32 %v1482, %v1514
        %v1547 = vmax.f32 %v1483, %v1515
        %v1548 = vmax.f32 %v1484, %v1516
        %v1549 = vmax.f32 %v1485, %v1517
        %v1550 = vmax.f32 %v1486, %v1518
        %v1551 = vmax.f32 %v1487, %v1519
        %v1552 = vmax.f32 %v1488, %v1520
        %v1553 = vmax.f32 %v1489, %v1521
        %v1554 = vmax.f32 %v1490, %v1522
        %v1555 = vmax.f32 %v1491, %v1523
        %v1556 = vmax.f32 %v1492, %v1524
        %v1557 = vmax.f32 %v1493, %v1525
        %v1558 = vpack.c.bf16 %v1527, %v1526
        %v1559 = vpack.c.bf16 %v1529, %v1528
        %v1560 = vpack.c.bf16 %v1531, %v1530
        %v1561 = vpack.c.bf16 %v1533, %v1532
        %v1562 = vpack.c.bf16 %v1535, %v1534
        %v1563 = vpack.c.bf16 %v1537, %v1536
        %v1564 = vpack.c.bf16 %v1539, %v1538
        %v1565 = vpack.c.bf16 %v1541, %v1540
        %v1566 = vpack.c.bf16 %v1543, %v1542
        %v1567 = vpack.c.bf16 %v1545, %v1544
        %v1568 = vpack.c.bf16 %v1547, %v1546
        %v1569 = vpack.c.bf16 %v1549, %v1548
        %v1570 = vpack.c.bf16 %v1551, %v1550
        %v1571 = vpack.c.bf16 %v1553, %v1552
        %v1572 = vpack.c.bf16 %v1555, %v1554
        %v1573 = vpack.c.bf16 %v1557, %v1556
        %s1574 = scalar_lea.vmem [#allocation10], 1
        %v1575 = vld [vmem:[%s1574] sm:$0x1]
        %v1577 = vsel %vm854, %v1558, 0
        %v1580 = vsel %vm854, %v1559, 0
        %v1583 = vsel %vm854, %v1560, 0
        %v1586 = vsel %vm854, %v1561, 0
        %v1589 = vsel %vm854, %v1562, 0
        %v1592 = vsel %vm854, %v1563, 0
        %v1595 = vsel %vm854, %v1564, 0
        %v1598 = vsel %vm854, %v1565, 0
        %v1601 = vsel %vm854, %v1566, 0
        %v1604 = vsel %vm854, %v1567, 0
        %v1607 = vsel %vm854, %v1568, 0
        %v1610 = vsel %vm854, %v1569, 0
        %v1613 = vsel %vm854, %v1570, 0
        %v1616 = vsel %vm854, %v1571, 0
        %v1619 = vsel %vm854, %v1572, 0
        %v1622 = vsel %vm854, %v1573, 0
        %vm1624 = vcmask 1040384
        %v1626 = vsel %vm1624, %v1575, 0
        %1628 = vmatprep.subr.bf16.mxu0 0
        %1629 = vmatpush1.bf16.msra.mxu0 %v1626
        %1630 = vmatprep.subr.bf16.mxu0 0
        %1631 = vmatpush1.bf16.msra.mxu0 0
        %1632 = vmatprep.subr.bf16.mxu0 0
        %1633 = vmatpush1.bf16.msra.mxu0 0
        %1634 = vmatprep.subr.bf16.mxu0 0
        %1635 = vmatpush1.bf16.msra.mxu0 0
        %1636 = vmatprep.subr.bf16.mxu0 0
        %1637 = vmatpush1.bf16.msra.mxu0 0
        %1638 = vmatprep.subr.bf16.mxu0 0
        %1639 = vmatpush1.bf16.msra.mxu0 0
        %1640 = vmatprep.subr.bf16.mxu0 0
        %1641 = vmatpush1.bf16.msra.mxu0 0
        %1642 = vmatprep.subr.bf16.mxu0 0
        %1643 = vmatpush1.bf16.msra.mxu0 0
        %1644 = vmatprep.subr.bf16.mxu0 0
        %1645 = vmatpush1.bf16.msra.mxu0 0
        %1646 = vmatprep.subr.bf16.mxu0 0
        %1647 = vmatpush1.bf16.msra.mxu0 0
        %1648 = vmatprep.subr.bf16.mxu0 0
        %1649 = vmatpush1.bf16.msra.mxu0 0
        %1650 = vmatprep.subr.bf16.mxu0 0
        %1651 = vmatpush1.bf16.msra.mxu0 0
        %1652 = vmatprep.subr.bf16.mxu0 0
        %1653 = vmatpush1.bf16.msra.mxu0 0
        %1654 = vmatprep.subr.bf16.mxu0 0
        %1655 = vmatpush1.bf16.msra.mxu0 0
        %1656 = vmatprep.subr.bf16.mxu0 0
        %1657 = vmatpush1.bf16.msra.mxu0 0
        %1658 = vmatprep.subr.bf16.mxu0 0
        %1659 = vmatpush1.bf16.msra.mxu0 0
        %1660 = vmatprep.mubr.bf16.mxu0 0
        %1661 = vmatmul.mubr.bf16.gmra.mrb[0].mxu0 %v1577
        %v1662 = vpop.f32.mrb[0].mxu0
        %v1663 = vadd.f32 0.0, %v1662
        %v1664 = vpop.f32.mrb[0].mxu0
        %v1665 = vpop.f32.mrb[0].mxu0
        %v1666 = vadd.f32 0.0, %v1665
        %v1667 = vpop.f32.mrb[0].mxu0
        %1668 = vmatprep.mubr.bf16.mxu0 0
        %1669 = vmatmul.mubr.bf16.gmra.mrb[0].mxu0 %v1580
        %v1670 = vpop.f32.mrb[0].mxu0
        %v1671 = vadd.f32 0.0, %v1670
        %v1672 = vpop.f32.mrb[0].mxu0
        %v1673 = vpop.f32.mrb[0].mxu0
        %v1674 = vadd.f32 0.0, %v1673
        %v1675 = vpop.f32.mrb[0].mxu0
        %1676 = vmatprep.mubr.bf16.mxu0 0
        %1677 = vmatmul.mubr.bf16.gmra.mrb[0].mxu0 %v1583
        %v1678 = vpop.f32.mrb[0].mxu0
        %v1679 = vadd.f32 0.0, %v1678
        %v1680 = vpop.f32.mrb[0].mxu0
        %v1681 = vpop.f32.mrb[0].mxu0
        %v1682 = vadd.f32 0.0, %v1681
        %v1683 = vpop.f32.mrb[0].mxu0
        %1684 = vmatprep.mubr.bf16.mxu0 0
        %1685 = vmatmul.mubr.bf16.gmra.mrb[0].mxu0 %v1586
        %v1686 = vpop.f32.mrb[0].mxu0
        %v1687 = vadd.f32 0.0, %v1686
        %v1688 = vpop.f32.mrb[0].mxu0
        %v1689 = vpop.f32.mrb[0].mxu0
        %v1690 = vadd.f32 0.0, %v1689
        %v1691 = vpop.f32.mrb[0].mxu0
        %1692 = vmatprep.mubr.bf16.mxu0 0
        %1693 = vmatmul.mubr.bf16.gmra.mrb[0].mxu0 %v1589
        %v1694 = vpop.f32.mrb[0].mxu0
        %v1695 = vadd.f32 0.0, %v1694
        %v1696 = vpop.f32.mrb[0].mxu0
        %v1697 = vpop.f32.mrb[0].mxu0
        %v1698 = vadd.f32 0.0, %v1697
        %v1699 = vpop.f32.mrb[0].mxu0
        %1700 = vmatprep.mubr.bf16.mxu0 0
        %1701 = vmatmul.mubr.bf16.gmra.mrb[0].mxu0 %v1592
        %v1702 = vpop.f32.mrb[0].mxu0
        %v1703 = vadd.f32 0.0, %v1702
        %v1704 = vpop.f32.mrb[0].mxu0
        %v1705 = vpop.f32.mrb[0].mxu0
        %v1706 = vadd.f32 0.0, %v1705
        %v1707 = vpop.f32.mrb[0].mxu0
        %1708 = vmatprep.mubr.bf16.mxu0 0
        %1709 = vmatmul.mubr.bf16.gmra.mrb[0].mxu0 %v1595
        %v1710 = vpop.f32.mrb[0].mxu0
        %v1711 = vadd.f32 0.0, %v1710
        %v1712 = vpop.f32.mrb[0].mxu0
        %v1713 = vpop.f32.mrb[0].mxu0
        %v1714 = vadd.f32 0.0, %v1713
        %v1715 = vpop.f32.mrb[0].mxu0
        %1716 = vmatprep.mubr.bf16.mxu0 0
        %1717 = vmatmul.mubr.bf16.gmra.mrb[0].mxu0 %v1598
        %v1718 = vpop.f32.mrb[0].mxu0
        %v1719 = vadd.f32 0.0, %v1718
        %v1720 = vpop.f32.mrb[0].mxu0
        %v1721 = vpop.f32.mrb[0].mxu0
        %v1722 = vadd.f32 0.0, %v1721
        %v1723 = vpop.f32.mrb[0].mxu0
        %1724 = vmatprep.mubr.bf16.mxu0 0
        %1725 = vmatmul.mubr.bf16.gmra.mrb[0].mxu0 %v1601
        %v1726 = vpop.f32.mrb[0].mxu0
        %v1727 = vadd.f32 0.0, %v1726
        %v1728 = vpop.f32.mrb[0].mxu0
        %v1729 = vpop.f32.mrb[0].mxu0
        %v1730 = vadd.f32 0.0, %v1729
        %v1731 = vpop.f32.mrb[0].mxu0
        %1732 = vmatprep.mubr.bf16.mxu0 0
        %1733 = vmatmul.mubr.bf16.gmra.mrb[0].mxu0 %v1604
        %v1734 = vpop.f32.mrb[0].mxu0
        %v1735 = vadd.f32 0.0, %v1734
        %v1736 = vpop.f32.mrb[0].mxu0
        %v1737 = vpop.f32.mrb[0].mxu0
        %v1738 = vadd.f32 0.0, %v1737
        %v1739 = vpop.f32.mrb[0].mxu0
        %1740 = vmatprep.mubr.bf16.mxu0 0
        %1741 = vmatmul.mubr.bf16.gmra.mrb[0].mxu0 %v1607
        %v1742 = vpop.f32.mrb[0].mxu0
        %v1743 = vadd.f32 0.0, %v1742
        %v1744 = vpop.f32.mrb[0].mxu0
        %v1745 = vpop.f32.mrb[0].mxu0
        %v1746 = vadd.f32 0.0, %v1745
        %v1747 = vpop.f32.mrb[0].mxu0
        %1748 = vmatprep.mubr.bf16.mxu0 0
        %1749 = vmatmul.mubr.bf16.gmra.mrb[0].mxu0 %v1610
        %v1750 = vpop.f32.mrb[0].mxu0
        %v1751 = vadd.f32 0.0, %v1750
        %v1752 = vpop.f32.mrb[0].mxu0
        %v1753 = vpop.f32.mrb[0].mxu0
        %v1754 = vadd.f32 0.0, %v1753
        %v1755 = vpop.f32.mrb[0].mxu0
        %1756 = vmatprep.mubr.bf16.mxu0 0
        %1757 = vmatmul.mubr.bf16.gmra.mrb[0].mxu0 %v1613
        %v1758 = vpop.f32.mrb[0].mxu0
        %v1759 = vadd.f32 0.0, %v1758
        %v1760 = vpop.f32.mrb[0].mxu0
        %v1761 = vpop.f32.mrb[0].mxu0
        %v1762 = vadd.f32 0.0, %v1761
        %v1763 = vpop.f32.mrb[0].mxu0
        %1764 = vmatprep.mubr.bf16.mxu0 0
        %1765 = vmatmul.mubr.bf16.gmra.mrb[0].mxu0 %v1616
        %v1766 = vpop.f32.mrb[0].mxu0
        %v1767 = vadd.f32 0.0, %v1766
        %v1768 = vpop.f32.mrb[0].mxu0
        %v1769 = vpop.f32.mrb[0].mxu0
        %v1770 = vadd.f32 0.0, %v1769
        %v1771 = vpop.f32.mrb[0].mxu0
        %1772 = vmatprep.mubr.bf16.mxu0 0
        %1773 = vmatmul.mubr.bf16.gmra.mrb[0].mxu0 %v1619
        %v1774 = vpop.f32.mrb[0].mxu0
        %v1775 = vadd.f32 0.0, %v1774
        %v1776 = vpop.f32.mrb[0].mxu0
        %v1777 = vpop.f32.mrb[0].mxu0
        %v1778 = vadd.f32 0.0, %v1777
        %v1779 = vpop.f32.mrb[0].mxu0
        %1780 = vmatprep.mubr.bf16.mxu0 0
        %1781 = vmatmul.mubr.bf16.gmra.mrb[0].mxu0 %v1622
        %v1782 = vpop.f32.mrb[0].mxu0
        %v1783 = vadd.f32 0.0, %v1782
        %v1784 = vpop.f32.mrb[0].mxu0
        %v1785 = vpop.f32.mrb[0].mxu0
        %v1786 = vadd.f32 0.0, %v1785
        %v1787 = vpop.f32.mrb[0].mxu0
        %1788 = vdwg.mxu0
        %v1790 = vsel %vm854, %v897, 0
        %v1793 = vsel %vm854, %v898, 0
        %v1796 = vsel %vm854, %v899, 0
        %v1799 = vsel %vm854, %v900, 0
        %v1802 = vsel %vm854, %v901, 0
        %v1805 = vsel %vm854, %v902, 0
        %v1808 = vsel %vm854, %v903, 0
        %v1811 = vsel %vm854, %v904, 0
        %v1814 = vsel %vm854, %v905, 0
        %v1817 = vsel %vm854, %v906, 0
        %v1820 = vsel %vm854, %v907, 0
        %v1823 = vsel %vm854, %v908, 0
        %v1826 = vsel %vm854, %v909, 0
        %v1829 = vsel %vm854, %v910, 0
        %v1832 = vsel %vm854, %v911, 0
        %v1835 = vsel %vm854, %v912, 0
        %v1838 = vsel %vm1624, %v913, 0
        %1840 = vmatprep.subr.bf16.mxu0 0
        %1841 = vmatpush1.bf16.msra.mxu0 %v1838
        %1842 = vmatprep.subr.bf16.mxu0 0
        %1843 = vmatpush1.bf16.msra.mxu0 0
        %1844 = vmatprep.subr.bf16.mxu0 0
        %1845 = vmatpush1.bf16.msra.mxu0 0
        %1846 = vmatprep.subr.bf16.mxu0 0
        %1847 = vmatpush1.bf16.msra.mxu0 0
        %1848 = vmatprep.subr.bf16.mxu0 0
        %1849 = vmatpush1.bf16.msra.mxu0 0
        %1850 = vmatprep.subr.bf16.mxu0 0
        %1851 = vmatpush1.bf16.msra.mxu0 0
        %1852 = vmatprep.subr.bf16.mxu0 0
        %1853 = vmatpush1.bf16.msra.mxu0 0
        %1854 = vmatprep.subr.bf16.mxu0 0
        %1855 = vmatpush1.bf16.msra.mxu0 0
        %1856 = vmatprep.subr.bf16.mxu0 0
        %1857 = vmatpush1.bf16.msra.mxu0 0
        %1858 = vmatprep.subr.bf16.mxu0 0
        %1859 = vmatpush1.bf16.msra.mxu0 0
        %1860 = vmatprep.subr.bf16.mxu0 0
        %1861 = vmatpush1.bf16.msra.mxu0 0
        %1862 = vmatprep.subr.bf16.mxu0 0
        %1863 = vmatpush1.bf16.msra.mxu0 0
        %1864 = vmatprep.subr.bf16.mxu0 0
        %1865 = vmatpush1.bf16.msra.mxu0 0
        %1866 = vmatprep.subr.bf16.mxu0 0
        %1867 = vmatpush1.bf16.msra.mxu0 0
        %1868 = vmatprep.subr.bf16.mxu0 0
        %1869 = vmatpush1.bf16.msra.mxu0 0
        %1870 = vmatprep.subr.bf16.mxu0 0
        %1871 = vmatpush1.bf16.msra.mxu0 0
        %1872 = vmatprep.mubr.bf16.mxu0 0
        %1873 = vmatmul.mubr.bf16.gmra.mrb[0].mxu0 %v1790
        %v1874 = vpop.f32.mrb[0].mxu0
        %v1875 = vadd.f32 %v1663, %v1874
        %v1876 = vpop.f32.mrb[0].mxu0
        %v1877 = vpop.f32.mrb[0].mxu0
        %v1878 = vadd.f32 %v1666, %v1877
        %v1879 = vpop.f32.mrb[0].mxu0
        %1880 = vmatprep.mubr.bf16.mxu0 0
        %1881 = vmatmul.mubr.bf16.gmra.mrb[0].mxu0 %v1793
        %v1882 = vpop.f32.mrb[0].mxu0
        %v1883 = vadd.f32 %v1671, %v1882
        %v1884 = vpop.f32.mrb[0].mxu0
        %v1885 = vpop.f32.mrb[0].mxu0
        %v1886 = vadd.f32 %v1674, %v1885
        %v1887 = vpop.f32.mrb[0].mxu0
        %1888 = vmatprep.mubr.bf16.mxu0 0
        %1889 = vmatmul.mubr.bf16.gmra.mrb[0].mxu0 %v1796
        %v1890 = vpop.f32.mrb[0].mxu0
        %v1891 = vadd.f32 %v1679, %v1890
        %v1892 = vpop.f32.mrb[0].mxu0
        %v1893 = vpop.f32.mrb[0].mxu0
        %v1894 = vadd.f32 %v1682, %v1893
        %v1895 = vpop.f32.mrb[0].mxu0
        %1896 = vmatprep.mubr.bf16.mxu0 0
        %1897 = vmatmul.mubr.bf16.gmra.mrb[0].mxu0 %v1799
        %v1898 = vpop.f32.mrb[0].mxu0
        %v1899 = vadd.f32 %v1687, %v1898
        %v1900 = vpop.f32.mrb[0].mxu0
        %v1901 = vpop.f32.mrb[0].mxu0
        %v1902 = vadd.f32 %v1690, %v1901
        %v1903 = vpop.f32.mrb[0].mxu0
        %1904 = vmatprep.mubr.bf16.mxu0 0
        %1905 = vmatmul.mubr.bf16.gmra.mrb[0].mxu0 %v1802
        %v1906 = vpop.f32.mrb[0].mxu0
        %v1907 = vadd.f32 %v1695, %v1906
        %v1908 = vpop.f32.mrb[0].mxu0
        %v1909 = vpop.f32.mrb[0].mxu0
        %v1910 = vadd.f32 %v1698, %v1909
        %v1911 = vpop.f32.mrb[0].mxu0
        %1912 = vmatprep.mubr.bf16.mxu0 0
        %1913 = vmatmul.mubr.bf16.gmra.mrb[0].mxu0 %v1805
        %v1914 = vpop.f32.mrb[0].mxu0
        %v1915 = vadd.f32 %v1703, %v1914
        %v1916 = vpop.f32.mrb[0].mxu0
        %v1917 = vpop.f32.mrb[0].mxu0
        %v1918 = vadd.f32 %v1706, %v1917
        %v1919 = vpop.f32.mrb[0].mxu0
        %1920 = vmatprep.mubr.bf16.mxu0 0
        %1921 = vmatmul.mubr.bf16.gmra.mrb[0].mxu0 %v1808
        %v1922 = vpop.f32.mrb[0].mxu0
        %v1923 = vadd.f32 %v1711, %v1922
        %v1924 = vpop.f32.mrb[0].mxu0
        %v1925 = vpop.f32.mrb[0].mxu0
        %v1926 = vadd.f32 %v1714, %v1925
        %v1927 = vpop.f32.mrb[0].mxu0
        %1928 = vmatprep.mubr.bf16.mxu0 0
        %1929 = vmatmul.mubr.bf16.gmra.mrb[0].mxu0 %v1811
        %v1930 = vpop.f32.mrb[0].mxu0
        %v1931 = vadd.f32 %v1719, %v1930
        %v1932 = vpop.f32.mrb[0].mxu0
        %v1933 = vpop.f32.mrb[0].mxu0
        %v1934 = vadd.f32 %v1722, %v1933
        %v1935 = vpop.f32.mrb[0].mxu0
        %1936 = vmatprep.mubr.bf16.mxu0 0
        %1937 = vmatmul.mubr.bf16.gmra.mrb[0].mxu0 %v1814
        %v1938 = vpop.f32.mrb[0].mxu0
        %v1939 = vadd.f32 %v1727, %v1938
        %v1940 = vpop.f32.mrb[0].mxu0
        %v1941 = vpop.f32.mrb[0].mxu0
        %v1942 = vadd.f32 %v1730, %v1941
        %v1943 = vpop.f32.mrb[0].mxu0
        %1944 = vmatprep.mubr.bf16.mxu0 0
        %1945 = vmatmul.mubr.bf16.gmra.mrb[0].mxu0 %v1817
        %v1946 = vpop.f32.mrb[0].mxu0
        %v1947 = vadd.f32 %v1735, %v1946
        %v1948 = vpop.f32.mrb[0].mxu0
        %v1949 = vpop.f32.mrb[0].mxu0
        %v1950 = vadd.f32 %v1738, %v1949
        %v1951 = vpop.f32.mrb[0].mxu0
        %1952 = vmatprep.mubr.bf16.mxu0 0
        %1953 = vmatmul.mubr.bf16.gmra.mrb[0].mxu0 %v1820
        %v1954 = vpop.f32.mrb[0].mxu0
        %v1955 = vadd.f32 %v1743, %v1954
        %v1956 = vpop.f32.mrb[0].mxu0
        %v1957 = vpop.f32.mrb[0].mxu0
        %v1958 = vadd.f32 %v1746, %v1957
        %v1959 = vpop.f32.mrb[0].mxu0
        %1960 = vmatprep.mubr.bf16.mxu0 0
        %1961 = vmatmul.mubr.bf16.gmra.mrb[0].mxu0 %v1823
        %v1962 = vpop.f32.mrb[0].mxu0
        %v1963 = vadd.f32 %v1751, %v1962
        %v1964 = vpop.f32.mrb[0].mxu0
        %v1965 = vpop.f32.mrb[0].mxu0
        %v1966 = vadd.f32 %v1754, %v1965
        %v1967 = vpop.f32.mrb[0].mxu0
        %1968 = vmatprep.mubr.bf16.mxu0 0
        %1969 = vmatmul.mubr.bf16.gmra.mrb[0].mxu0 %v1826
        %v1970 = vpop.f32.mrb[0].mxu0
        %v1971 = vadd.f32 %v1759, %v1970
        %v1972 = vpop.f32.mrb[0].mxu0
        %v1973 = vpop.f32.mrb[0].mxu0
        %v1974 = vadd.f32 %v1762, %v1973
        %v1975 = vpop.f32.mrb[0].mxu0
        %1976 = vmatprep.mubr.bf16.mxu0 0
        %1977 = vmatmul.mubr.bf16.gmra.mrb[0].mxu0 %v1829
        %v1978 = vpop.f32.mrb[0].mxu0
        %v1979 = vadd.f32 %v1767, %v1978
        %v1980 = vpop.f32.mrb[0].mxu0
        %v1981 = vpop.f32.mrb[0].mxu0
        %v1982 = vadd.f32 %v1770, %v1981
        %v1983 = vpop.f32.mrb[0].mxu0
        %1984 = vmatprep.mubr.bf16.mxu0 0
        %1985 = vmatmul.mubr.bf16.gmra.mrb[0].mxu0 %v1832
        %v1986 = vpop.f32.mrb[0].mxu0
        %v1987 = vadd.f32 %v1775, %v1986
        %v1988 = vpop.f32.mrb[0].mxu0
        %v1989 = vpop.f32.mrb[0].mxu0
        %v1990 = vadd.f32 %v1778, %v1989
        %v1991 = vpop.f32.mrb[0].mxu0
        %1992 = vmatprep.mubr.bf16.mxu0 0
        %1993 = vmatmul.mubr.bf16.gmra.mrb[0].mxu0 %v1835
        %v1994 = vpop.f32.mrb[0].mxu0
        %v1995 = vadd.f32 %v1783, %v1994
        %v1996 = vpop.f32.mrb[0].mxu0
        %v1997 = vpop.f32.mrb[0].mxu0
        %v1998 = vadd.f32 %v1786, %v1997
        %v1999 = vpop.f32.mrb[0].mxu0
        %2000 = vdwg.mxu0
        %2001 = vst.msk [vmem:[%s914] sm:$0xff] %vm854, %v1526
        %2002 = vst.msk [vmem:[%s914 + $0x8] sm:$0xff] %vm854, %v1527
        %2003 = vst.msk [vmem:[%s914 + $0x10] sm:$0xff] %vm854, %v1528
        %2004 = vst.msk [vmem:[%s914 + $0x18] sm:$0xff] %vm854, %v1529
        %2005 = vst.msk [vmem:[%s914 + $0x20] sm:$0xff] %vm854, %v1530
        %2006 = vst.msk [vmem:[%s914 + $0x28] sm:$0xff] %vm854, %v1531
        %2007 = vst.msk [vmem:[%s914 + $0x30] sm:$0xff] %vm854, %v1532
        %2008 = vst.msk [vmem:[%s914 + $0x38] sm:$0xff] %vm854, %v1533
        %2009 = vst.msk [vmem:[%s914 + $0x40] sm:$0xff] %vm854, %v1534
        %2010 = vst.msk [vmem:[%s914 + $0x48] sm:$0xff] %vm854, %v1535
        %2011 = vst.msk [vmem:[%s914 + $0x50] sm:$0xff] %vm854, %v1536
        %2012 = vst.msk [vmem:[%s914 + $0x58] sm:$0xff] %vm854, %v1537
        %2013 = vst.msk [vmem:[%s914 + $0x60] sm:$0xff] %vm854, %v1538
        %2014 = vst.msk [vmem:[%s914 + $0x68] sm:$0xff] %vm854, %v1539
        %2015 = vst.msk [vmem:[%s914 + $0x70] sm:$0xff] %vm854, %v1540
        %2016 = vst.msk [vmem:[%s914 + $0x78] sm:$0xff] %vm854, %v1541
        %2017 = vst.msk [vmem:[%s914 + $0x80] sm:$0xff] %vm854, %v1542
        %2018 = vst.msk [vmem:[%s914 + $0x88] sm:$0xff] %vm854, %v1543
        %2019 = vst.msk [vmem:[%s914 + $0x90] sm:$0xff] %vm854, %v1544
        %2020 = vst.msk [vmem:[%s914 + $0x98] sm:$0xff] %vm854, %v1545
        %2021 = vst.msk [vmem:[%s914 + $0xa0] sm:$0xff] %vm854, %v1546
        %2022 = vst.msk [vmem:[%s914 + $0xa8] sm:$0xff] %vm854, %v1547
        %2023 = vst.msk [vmem:[%s914 + $0xb0] sm:$0xff] %vm854, %v1548
        %2024 = vst.msk [vmem:[%s914 + $0xb8] sm:$0xff] %vm854, %v1549
        %2025 = vst.msk [vmem:[%s914 + $0xc0] sm:$0xff] %vm854, %v1550
        %2026 = vst.msk [vmem:[%s914 + $0xc8] sm:$0xff] %vm854, %v1551
        %2027 = vst.msk [vmem:[%s914 + $0xd0] sm:$0xff] %vm854, %v1552
        %2028 = vst.msk [vmem:[%s914 + $0xd8] sm:$0xff] %vm854, %v1553
        %2029 = vst.msk [vmem:[%s914 + $0xe0] sm:$0xff] %vm854, %v1554
        %2030 = vst.msk [vmem:[%s914 + $0xe8] sm:$0xff] %vm854, %v1555
        %2031 = vst.msk [vmem:[%s914 + $0xf0] sm:$0xff] %vm854, %v1556
        %2032 = vst.msk [vmem:[%s914 + $0xf8] sm:$0xff] %vm854, %v1557
        %v2033 = vld [vmem:[#allocation2] sm:$0xff]
        %v2034 = vld [vmem:[#allocation2 + $0x8] sm:$0xff]
        %v2035 = vld [vmem:[#allocation2 + $0x10] sm:$0xff]
        %v2036 = vld [vmem:[#allocation2 + $0x18] sm:$0xff]
        %v2037 = vld [vmem:[#allocation2 + $0x20] sm:$0xff]
        %v2038 = vld [vmem:[#allocation2 + $0x28] sm:$0xff]
        %v2039 = vld [vmem:[#allocation2 + $0x30] sm:$0xff]
        %v2040 = vld [vmem:[#allocation2 + $0x38] sm:$0xff]
        %v2041 = vld [vmem:[#allocation2 + $0x40] sm:$0xff]
        %v2042 = vld [vmem:[#allocation2 + $0x48] sm:$0xff]
        %v2043 = vld [vmem:[#allocation2 + $0x50] sm:$0xff]
        %v2044 = vld [vmem:[#allocation2 + $0x58] sm:$0xff]
        %v2045 = vld [vmem:[#allocation2 + $0x60] sm:$0xff]
        %v2046 = vld [vmem:[#allocation2 + $0x68] sm:$0xff]
        %v2047 = vld [vmem:[#allocation2 + $0x70] sm:$0xff]
        %v2048 = vld [vmem:[#allocation2 + $0x78] sm:$0xff]
        %v2049 = vld [vmem:[#allocation2 + $0x80] sm:$0xff]
        %v2050 = vld [vmem:[#allocation2 + $0x88] sm:$0xff]
        %v2051 = vld [vmem:[#allocation2 + $0x90] sm:$0xff]
        %v2052 = vld [vmem:[#allocation2 + $0x98] sm:$0xff]
        %v2053 = vld [vmem:[#allocation2 + $0xa0] sm:$0xff]
        %v2054 = vld [vmem:[#allocation2 + $0xa8] sm:$0xff]
        %v2055 = vld [vmem:[#allocation2 + $0xb0] sm:$0xff]
        %v2056 = vld [vmem:[#allocation2 + $0xb8] sm:$0xff]
        %v2057 = vld [vmem:[#allocation2 + $0xc0] sm:$0xff]
        %v2058 = vld [vmem:[#allocation2 + $0xc8] sm:$0xff]
        %v2059 = vld [vmem:[#allocation2 + $0xd0] sm:$0xff]
        %v2060 = vld [vmem:[#allocation2 + $0xd8] sm:$0xff]
        %v2061 = vld [vmem:[#allocation2 + $0xe0] sm:$0xff]
        %v2062 = vld [vmem:[#allocation2 + $0xe8] sm:$0xff]
        %v2063 = vld [vmem:[#allocation2 + $0xf0] sm:$0xff]
        %v2064 = vld [vmem:[#allocation2 + $0xf8] sm:$0xff]
        %v2065 = vld [vmem:[%s979] sm:$0xff]
        %v2066 = vld [vmem:[%s979 + $0x8] sm:$0xff]
        %v2067 = vld [vmem:[%s979 + $0x10] sm:$0xff]
        %v2068 = vld [vmem:[%s979 + $0x18] sm:$0xff]
        %v2069 = vld [vmem:[%s979 + $0x20] sm:$0xff]
        %v2070 = vld [vmem:[%s979 + $0x28] sm:$0xff]
        %v2071 = vld [vmem:[%s979 + $0x30] sm:$0xff]
        %v2072 = vld [vmem:[%s979 + $0x38] sm:$0xff]
        %v2073 = vld [vmem:[%s979 + $0x40] sm:$0xff]
        %v2074 = vld [vmem:[%s979 + $0x48] sm:$0xff]
        %v2075 = vld [vmem:[%s979 + $0x50] sm:$0xff]
        %v2076 = vld [vmem:[%s979 + $0x58] sm:$0xff]
        %v2077 = vld [vmem:[%s979 + $0x60] sm:$0xff]
        %v2078 = vld [vmem:[%s979 + $0x68] sm:$0xff]
        %v2079 = vld [vmem:[%s979 + $0x70] sm:$0xff]
        %v2080 = vld [vmem:[%s979 + $0x78] sm:$0xff]
        %v2081 = vld [vmem:[%s979 + $0x80] sm:$0xff]
        %v2082 = vld [vmem:[%s979 + $0x88] sm:$0xff]
        %v2083 = vld [vmem:[%s979 + $0x90] sm:$0xff]
        %v2084 = vld [vmem:[%s979 + $0x98] sm:$0xff]
        %v2085 = vld [vmem:[%s979 + $0xa0] sm:$0xff]
        %v2086 = vld [vmem:[%s979 + $0xa8] sm:$0xff]
        %v2087 = vld [vmem:[%s979 + $0xb0] sm:$0xff]
        %v2088 = vld [vmem:[%s979 + $0xb8] sm:$0xff]
        %v2089 = vld [vmem:[%s979 + $0xc0] sm:$0xff]
        %v2090 = vld [vmem:[%s979 + $0xc8] sm:$0xff]
        %v2091 = vld [vmem:[%s979 + $0xd0] sm:$0xff]
        %v2092 = vld [vmem:[%s979 + $0xd8] sm:$0xff]
        %v2093 = vld [vmem:[%s979 + $0xe0] sm:$0xff]
        %v2094 = vld [vmem:[%s979 + $0xe8] sm:$0xff]
        %v2095 = vld [vmem:[%s979 + $0xf0] sm:$0xff]
        %v2096 = vld [vmem:[%s979 + $0xf8] sm:$0xff]
        %v2097 = vmax.f32 %v2033, %v2065
        %v2098 = vmax.f32 %v2034, %v2066
        %v2099 = vmax.f32 %v2035, %v2067
        %v2100 = vmax.f32 %v2036, %v2068
        %v2101 = vmax.f32 %v2037, %v2069
        %v2102 = vmax.f32 %v2038, %v2070
        %v2103 = vmax.f32 %v2039, %v2071
        %v2104 = vmax.f32 %v2040, %v2072
        %v2105 = vmax.f32 %v2041, %v2073
        %v2106 = vmax.f32 %v2042, %v2074
        %v2107 = vmax.f32 %v2043, %v2075
        %v2108 = vmax.f32 %v2044, %v2076
        %v2109 = vmax.f32 %v2045, %v2077
        %v2110 = vmax.f32 %v2046, %v2078
        %v2111 = vmax.f32 %v2047, %v2079
        %v2112 = vmax.f32 %v2048, %v2080
        %v2113 = vmax.f32 %v2049, %v2081
        %v2114 = vmax.f32 %v2050, %v2082
        %v2115 = vmax.f32 %v2051, %v2083
        %v2116 = vmax.f32 %v2052, %v2084
        %v2117 = vmax.f32 %v2053, %v2085
        %v2118 = vmax.f32 %v2054, %v2086
        %v2119 = vmax.f32 %v2055, %v2087
        %v2120 = vmax.f32 %v2056, %v2088
        %v2121 = vmax.f32 %v2057, %v2089
        %v2122 = vmax.f32 %v2058, %v2090
        %v2123 = vmax.f32 %v2059, %v2091
        %v2124 = vmax.f32 %v2060, %v2092
        %v2125 = vmax.f32 %v2061, %v2093
        %v2126 = vmax.f32 %v2062, %v2094
        %v2127 = vmax.f32 %v2063, %v2095
        %v2128 = vmax.f32 %v2064, %v2096
        %v2129 = vld [vmem:[%s914] sm:$0xff]
        %v2130 = vld [vmem:[%s914 + $0x8] sm:$0xff]
        %v2131 = vld [vmem:[%s914 + $0x10] sm:$0xff]
        %v2132 = vld [vmem:[%s914 + $0x18] sm:$0xff]
        %v2133 = vld [vmem:[%s914 + $0x20] sm:$0xff]
        %v2134 = vld [vmem:[%s914 + $0x28] sm:$0xff]
        %v2135 = vld [vmem:[%s914 + $0x30] sm:$0xff]
        %v2136 = vld [vmem:[%s914 + $0x38] sm:$0xff]
        %v2137 = vld [vmem:[%s914 + $0x40] sm:$0xff]
        %v2138 = vld [vmem:[%s914 + $0x48] sm:$0xff]
        %v2139 = vld [vmem:[%s914 + $0x50] sm:$0xff]
        %v2140 = vld [vmem:[%s914 + $0x58] sm:$0xff]
        %v2141 = vld [vmem:[%s914 + $0x60] sm:$0xff]
        %v2142 = vld [vmem:[%s914 + $0x68] sm:$0xff]
        %v2143 = vld [vmem:[%s914 + $0x70] sm:$0xff]
        %v2144 = vld [vmem:[%s914 + $0x78] sm:$0xff]
        %v2145 = vld [vmem:[%s914 + $0x80] sm:$0xff]
        %v2146 = vld [vmem:[%s914 + $0x88] sm:$0xff]
        %v2147 = vld [vmem:[%s914 + $0x90] sm:$0xff]
        %v2148 = vld [vmem:[%s914 + $0x98] sm:$0xff]
        %v2149 = vld [vmem:[%s914 + $0xa0] sm:$0xff]
        %v2150 = vld [vmem:[%s914 + $0xa8] sm:$0xff]
        %v2151 = vld [vmem:[%s914 + $0xb0] sm:$0xff]
        %v2152 = vld [vmem:[%s914 + $0xb8] sm:$0xff]
        %v2153 = vld [vmem:[%s914 + $0xc0] sm:$0xff]
        %v2154 = vld [vmem:[%s914 + $0xc8] sm:$0xff]
        %v2155 = vld [vmem:[%s914 + $0xd0] sm:$0xff]
        %v2156 = vld [vmem:[%s914 + $0xd8] sm:$0xff]
        %v2157 = vld [vmem:[%s914 + $0xe0] sm:$0xff]
        %v2158 = vld [vmem:[%s914 + $0xe8] sm:$0xff]
        %v2159 = vld [vmem:[%s914 + $0xf0] sm:$0xff]
        %v2160 = vld [vmem:[%s914 + $0xf8] sm:$0xff]
        %v2161 = vld [vmem:[%s1076] sm:$0xff]
        %v2162 = vld [vmem:[%s1076 + $0x8] sm:$0xff]
        %v2163 = vld [vmem:[%s1076 + $0x10] sm:$0xff]
        %v2164 = vld [vmem:[%s1076 + $0x18] sm:$0xff]
        %v2165 = vld [vmem:[%s1076 + $0x20] sm:$0xff]
        %v2166 = vld [vmem:[%s1076 + $0x28] sm:$0xff]
        %v2167 = vld [vmem:[%s1076 + $0x30] sm:$0xff]
        %v2168 = vld [vmem:[%s1076 + $0x38] sm:$0xff]
        %v2169 = vld [vmem:[%s1076 + $0x40] sm:$0xff]
        %v2170 = vld [vmem:[%s1076 + $0x48] sm:$0xff]
        %v2171 = vld [vmem:[%s1076 + $0x50] sm:$0xff]
        %v2172 = vld [vmem:[%s1076 + $0x58] sm:$0xff]
        %v2173 = vld [vmem:[%s1076 + $0x60] sm:$0xff]
        %v2174 = vld [vmem:[%s1076 + $0x68] sm:$0xff]
        %v2175 = vld [vmem:[%s1076 + $0x70] sm:$0xff]
        %v2176 = vld [vmem:[%s1076 + $0x78] sm:$0xff]
        %v2177 = vld [vmem:[%s1076 + $0x80] sm:$0xff]
        %v2178 = vld [vmem:[%s1076 + $0x88] sm:$0xff]
        %v2179 = vld [vmem:[%s1076 + $0x90] sm:$0xff]
        %v2180 = vld [vmem:[%s1076 + $0x98] sm:$0xff]
        %v2181 = vld [vmem:[%s1076 + $0xa0] sm:$0xff]
        %v2182 = vld [vmem:[%s1076 + $0xa8] sm:$0xff]
        %v2183 = vld [vmem:[%s1076 + $0xb0] sm:$0xff]
        %v2184 = vld [vmem:[%s1076 + $0xb8] sm:$0xff]
        %v2185 = vld [vmem:[%s1076 + $0xc0] sm:$0xff]
        %v2186 = vld [vmem:[%s1076 + $0xc8] sm:$0xff]
        %v2187 = vld [vmem:[%s1076 + $0xd0] sm:$0xff]
        %v2188 = vld [vmem:[%s1076 + $0xd8] sm:$0xff]
        %v2189 = vld [vmem:[%s1076 + $0xe0] sm:$0xff]
        %v2190 = vld [vmem:[%s1076 + $0xe8] sm:$0xff]
        %v2191 = vld [vmem:[%s1076 + $0xf0] sm:$0xff]
        %v2192 = vld [vmem:[%s1076 + $0xf8] sm:$0xff]
        %v2193 = vmax.f32 %v2129, %v2161
        %v2194 = vmax.f32 %v2130, %v2162
        %v2195 = vmax.f32 %v2131, %v2163
        %v2196 = vmax.f32 %v2132, %v2164
        %v2197 = vmax.f32 %v2133, %v2165
        %v2198 = vmax.f32 %v2134, %v2166
        %v2199 = vmax.f32 %v2135, %v2167
        %v2200 = vmax.f32 %v2136, %v2168
        %v2201 = vmax.f32 %v2137, %v2169
        %v2202 = vmax.f32 %v2138, %v2170
        %v2203 = vmax.f32 %v2139, %v2171
        %v2204 = vmax.f32 %v2140, %v2172
        %v2205 = vmax.f32 %v2141, %v2173
        %v2206 = vmax.f32 %v2142, %v2174
        %v2207 = vmax.f32 %v2143, %v2175
        %v2208 = vmax.f32 %v2144, %v2176
        %v2209 = vmax.f32 %v2145, %v2177
        %v2210 = vmax.f32 %v2146, %v2178
        %v2211 = vmax.f32 %v2147, %v2179
        %v2212 = vmax.f32 %v2148, %v2180
        %v2213 = vmax.f32 %v2149, %v2181
        %v2214 = vmax.f32 %v2150, %v2182
        %v2215 = vmax.f32 %v2151, %v2183
        %v2216 = vmax.f32 %v2152, %v2184
        %v2217 = vmax.f32 %v2153, %v2185
        %v2218 = vmax.f32 %v2154, %v2186
        %v2219 = vmax.f32 %v2155, %v2187
        %v2220 = vmax.f32 %v2156, %v2188
        %v2221 = vmax.f32 %v2157, %v2189
        %v2222 = vmax.f32 %v2158, %v2190
        %v2223 = vmax.f32 %v2159, %v2191
        %v2224 = vmax.f32 %v2160, %v2192
        %v2225 = vmax.f32 %v2097, %v2193
        %v2226 = vmax.f32 %v2098, %v2194
        %v2227 = vmax.f32 %v2099, %v2195
        %v2228 = vmax.f32 %v2100, %v2196
        %v2229 = vmax.f32 %v2101, %v2197
        %v2230 = vmax.f32 %v2102, %v2198
        %v2231 = vmax.f32 %v2103, %v2199
        %v2232 = vmax.f32 %v2104, %v2200
        %v2233 = vmax.f32 %v2105, %v2201
        %v2234 = vmax.f32 %v2106, %v2202
        %v2235 = vmax.f32 %v2107, %v2203
        %v2236 = vmax.f32 %v2108, %v2204
        %v2237 = vmax.f32 %v2109, %v2205
        %v2238 = vmax.f32 %v2110, %v2206
        %v2239 = vmax.f32 %v2111, %v2207
        %v2240 = vmax.f32 %v2112, %v2208
        %v2241 = vmax.f32 %v2113, %v2209
        %v2242 = vmax.f32 %v2114, %v2210
        %v2243 = vmax.f32 %v2115, %v2211
        %v2244 = vmax.f32 %v2116, %v2212
        %v2245 = vmax.f32 %v2117, %v2213
        %v2246 = vmax.f32 %v2118, %v2214
        %v2247 = vmax.f32 %v2119, %v2215
        %v2248 = vmax.f32 %v2120, %v2216
        %v2249 = vmax.f32 %v2121, %v2217
        %v2250 = vmax.f32 %v2122, %v2218
        %v2251 = vmax.f32 %v2123, %v2219
        %v2252 = vmax.f32 %v2124, %v2220
        %v2253 = vmax.f32 %v2125, %v2221
        %v2254 = vmax.f32 %v2126, %v2222
        %v2255 = vmax.f32 %v2127, %v2223
        %v2256 = vmax.f32 %v2128, %v2224
        %v2257 = vld [vmem:[%s1173] sm:$0xff]
        %v2258 = vld [vmem:[%s1173 + $0x8] sm:$0xff]
        %v2259 = vld [vmem:[%s1173 + $0x10] sm:$0xff]
        %v2260 = vld [vmem:[%s1173 + $0x18] sm:$0xff]
        %v2261 = vld [vmem:[%s1173 + $0x20] sm:$0xff]
        %v2262 = vld [vmem:[%s1173 + $0x28] sm:$0xff]
        %v2263 = vld [vmem:[%s1173 + $0x30] sm:$0xff]
        %v2264 = vld [vmem:[%s1173 + $0x38] sm:$0xff]
        %v2265 = vld [vmem:[%s1173 + $0x40] sm:$0xff]
        %v2266 = vld [vmem:[%s1173 + $0x48] sm:$0xff]
        %v2267 = vld [vmem:[%s1173 + $0x50] sm:$0xff]
        %v2268 = vld [vmem:[%s1173 + $0x58] sm:$0xff]
        %v2269 = vld [vmem:[%s1173 + $0x60] sm:$0xff]
        %v2270 = vld [vmem:[%s1173 + $0x68] sm:$0xff]
        %v2271 = vld [vmem:[%s1173 + $0x70] sm:$0xff]
        %v2272 = vld [vmem:[%s1173 + $0x78] sm:$0xff]
        %v2273 = vld [vmem:[%s1173 + $0x80] sm:$0xff]
        %v2274 = vld [vmem:[%s1173 + $0x88] sm:$0xff]
        %v2275 = vld [vmem:[%s1173 + $0x90] sm:$0xff]
        %v2276 = vld [vmem:[%s1173 + $0x98] sm:$0xff]
        %v2277 = vld [vmem:[%s1173 + $0xa0] sm:$0xff]
        %v2278 = vld [vmem:[%s1173 + $0xa8] sm:$0xff]
        %v2279 = vld [vmem:[%s1173 + $0xb0] sm:$0xff]
        %v2280 = vld [vmem:[%s1173 + $0xb8] sm:$0xff]
        %v2281 = vld [vmem:[%s1173 + $0xc0] sm:$0xff]
        %v2282 = vld [vmem:[%s1173 + $0xc8] sm:$0xff]
        %v2283 = vld [vmem:[%s1173 + $0xd0] sm:$0xff]
        %v2284 = vld [vmem:[%s1173 + $0xd8] sm:$0xff]
        %v2285 = vld [vmem:[%s1173 + $0xe0] sm:$0xff]
        %v2286 = vld [vmem:[%s1173 + $0xe8] sm:$0xff]
        %v2287 = vld [vmem:[%s1173 + $0xf0] sm:$0xff]
        %v2288 = vld [vmem:[%s1173 + $0xf8] sm:$0xff]
        %v2289 = vmax.f32 %v2225, %v2257
        %v2290 = vmax.f32 %v2226, %v2258
        %v2291 = vmax.f32 %v2227, %v2259
        %v2292 = vmax.f32 %v2228, %v2260
        %v2293 = vmax.f32 %v2229, %v2261
        %v2294 = vmax.f32 %v2230, %v2262
        %v2295 = vmax.f32 %v2231, %v2263
        %v2296 = vmax.f32 %v2232, %v2264
        %v2297 = vmax.f32 %v2233, %v2265
        %v2298 = vmax.f32 %v2234, %v2266
        %v2299 = vmax.f32 %v2235, %v2267
        %v2300 = vmax.f32 %v2236, %v2268
        %v2301 = vmax.f32 %v2237, %v2269
        %v2302 = vmax.f32 %v2238, %v2270
        %v2303 = vmax.f32 %v2239, %v2271
        %v2304 = vmax.f32 %v2240, %v2272
        %v2305 = vmax.f32 %v2241, %v2273
        %v2306 = vmax.f32 %v2242, %v2274
        %v2307 = vmax.f32 %v2243, %v2275
        %v2308 = vmax.f32 %v2244, %v2276
        %v2309 = vmax.f32 %v2245, %v2277
        %v2310 = vmax.f32 %v2246, %v2278
        %v2311 = vmax.f32 %v2247, %v2279
        %v2312 = vmax.f32 %v2248, %v2280
        %v2313 = vmax.f32 %v2249, %v2281
        %v2314 = vmax.f32 %v2250, %v2282
        %v2315 = vmax.f32 %v2251, %v2283
        %v2316 = vmax.f32 %v2252, %v2284
        %v2317 = vmax.f32 %v2253, %v2285
        %v2318 = vmax.f32 %v2254, %v2286
        %v2319 = vmax.f32 %v2255, %v2287
        %v2320 = vmax.f32 %v2256, %v2288
        %2321 = vst.msk [vmem:[#allocation3 + $0x2] sm:$0xff] %vm854, %v2289
        %2322 = vst.msk [vmem:[#allocation3 + $0xa] sm:$0xff] %vm854, %v2290
        %2323 = vst.msk [vmem:[#allocation3 + $0x1a] sm:$0xff] %vm854, %v2291
        %2324 = vst.msk [vmem:[#allocation3 + $0x22] sm:$0xff] %vm854, %v2292
        %2325 = vst.msk [vmem:[#allocation3 + $0x32] sm:$0xff] %vm854, %v2293
        %2326 = vst.msk [vmem:[#allocation3 + $0x3a] sm:$0xff] %vm854, %v2294
        %2327 = vst.msk [vmem:[#allocation3 + $0x4a] sm:$0xff] %vm854, %v2295
        %2328 = vst.msk [vmem:[#allocation3 + $0x52] sm:$0xff] %vm854, %v2296
        %2329 = vst.msk [vmem:[#allocation3 + $0x62] sm:$0xff] %vm854, %v2297
        %2330 = vst.msk [vmem:[#allocation3 + $0x6a] sm:$0xff] %vm854, %v2298
        %2331 = vst.msk [vmem:[#allocation3 + $0x7a] sm:$0xff] %vm854, %v2299
        %2332 = vst.msk [vmem:[#allocation3 + $0x82] sm:$0xff] %vm854, %v2300
        %2333 = vst.msk [vmem:[#allocation3 + $0x92] sm:$0xff] %vm854, %v2301
        %2334 = vst.msk [vmem:[#allocation3 + $0x9a] sm:$0xff] %vm854, %v2302
        %2335 = vst.msk [vmem:[#allocation3 + $0xaa] sm:$0xff] %vm854, %v2303
        %2336 = vst.msk [vmem:[#allocation3 + $0xb2] sm:$0xff] %vm854, %v2304
        %2337 = vst.msk [vmem:[#allocation3 + $0xc2] sm:$0xff] %vm854, %v2305
        %2338 = vst.msk [vmem:[#allocation3 + $0xca] sm:$0xff] %vm854, %v2306
        %2339 = vst.msk [vmem:[#allocation3 + $0xda] sm:$0xff] %vm854, %v2307
        %2340 = vst.msk [vmem:[#allocation3 + $0xe2] sm:$0xff] %vm854, %v2308
        %2341 = vst.msk [vmem:[#allocation3 + $0xf2] sm:$0xff] %vm854, %v2309
        %2342 = vst.msk [vmem:[#allocation3 + $0xfa] sm:$0xff] %vm854, %v2310
        %2343 = vst.msk [vmem:[#allocation3 + $0x10a] sm:$0xff] %vm854, %v2311
        %2344 = vst.msk [vmem:[#allocation3 + $0x112] sm:$0xff] %vm854, %v2312
        %2345 = vst.msk [vmem:[#allocation3 + $0x122] sm:$0xff] %vm854, %v2313
        %2346 = vst.msk [vmem:[#allocation3 + $0x12a] sm:$0xff] %vm854, %v2314
        %2347 = vst.msk [vmem:[#allocation3 + $0x13a] sm:$0xff] %vm854, %v2315
        %2348 = vst.msk [vmem:[#allocation3 + $0x142] sm:$0xff] %vm854, %v2316
        %2349 = vst.msk [vmem:[#allocation3 + $0x152] sm:$0xff] %vm854, %v2317
        %2350 = vst.msk [vmem:[#allocation3 + $0x15a] sm:$0xff] %vm854, %v2318
        %2351 = vst.msk [vmem:[#allocation3 + $0x16a] sm:$0xff] %vm854, %v2319
        %2352 = vst.msk [vmem:[#allocation3 + $0x172] sm:$0xff] %vm854, %v2320
        %v2353 = vld [vmem:[#allocation3] sm:$0xff]
        %v2354 = vld [vmem:[#allocation3 + $0x8] sm:$0xff]
        %v2355 = vld [vmem:[#allocation3 + $0x18] sm:$0xff]
        %v2356 = vld [vmem:[#allocation3 + $0x20] sm:$0xff]
        %v2357 = vld [vmem:[#allocation3 + $0x30] sm:$0xff]
        %v2358 = vld [vmem:[#allocation3 + $0x38] sm:$0xff]
        %v2359 = vld [vmem:[#allocation3 + $0x48] sm:$0xff]
        %v2360 = vld [vmem:[#allocation3 + $0x50] sm:$0xff]
        %v2361 = vld [vmem:[#allocation3 + $0x60] sm:$0xff]
        %v2362 = vld [vmem:[#allocation3 + $0x68] sm:$0xff]
        %v2363 = vld [vmem:[#allocation3 + $0x78] sm:$0xff]
        %v2364 = vld [vmem:[#allocation3 + $0x80] sm:$0xff]
        %v2365 = vld [vmem:[#allocation3 + $0x90] sm:$0xff]
        %v2366 = vld [vmem:[#allocation3 + $0x98] sm:$0xff]
        %v2367 = vld [vmem:[#allocation3 + $0xa8] sm:$0xff]
        %v2368 = vld [vmem:[#allocation3 + $0xb0] sm:$0xff]
        %v2369 = vld [vmem:[#allocation3 + $0xc0] sm:$0xff]
        %v2370 = vld [vmem:[#allocation3 + $0xc8] sm:$0xff]
        %v2371 = vld [vmem:[#allocation3 + $0xd8] sm:$0xff]
        %v2372 = vld [vmem:[#allocation3 + $0xe0] sm:$0xff]
        %v2373 = vld [vmem:[#allocation3 + $0xf0] sm:$0xff]
        %v2374 = vld [vmem:[#allocation3 + $0xf8] sm:$0xff]
        %v2375 = vld [vmem:[#allocation3 + $0x108] sm:$0xff]
        %v2376 = vld [vmem:[#allocation3 + $0x110] sm:$0xff]
        %v2377 = vld [vmem:[#allocation3 + $0x120] sm:$0xff]
        %v2378 = vld [vmem:[#allocation3 + $0x128] sm:$0xff]
        %v2379 = vld [vmem:[#allocation3 + $0x138] sm:$0xff]
        %v2380 = vld [vmem:[#allocation3 + $0x140] sm:$0xff]
        %v2381 = vld [vmem:[#allocation3 + $0x150] sm:$0xff]
        %v2382 = vld [vmem:[#allocation3 + $0x158] sm:$0xff]
        %v2383 = vld [vmem:[#allocation3 + $0x168] sm:$0xff]
        %v2384 = vld [vmem:[#allocation3 + $0x170] sm:$0xff]
        %v2385 = vld [vmem:[#allocation3 + $0x1] sm:$0xff]
        %v2386 = vld [vmem:[#allocation3 + $0x9] sm:$0xff]
        %v2387 = vld [vmem:[#allocation3 + $0x19] sm:$0xff]
        %v2388 = vld [vmem:[#allocation3 + $0x21] sm:$0xff]
        %v2389 = vld [vmem:[#allocation3 + $0x31] sm:$0xff]
        %v2390 = vld [vmem:[#allocation3 + $0x39] sm:$0xff]
        %v2391 = vld [vmem:[#allocation3 + $0x49] sm:$0xff]
        %v2392 = vld [vmem:[#allocation3 + $0x51] sm:$0xff]
        %v2393 = vld [vmem:[#allocation3 + $0x61] sm:$0xff]
        %v2394 = vld [vmem:[#allocation3 + $0x69] sm:$0xff]
        %v2395 = vld [vmem:[#allocation3 + $0x79] sm:$0xff]
        %v2396 = vld [vmem:[#allocation3 + $0x81] sm:$0xff]
        %v2397 = vld [vmem:[#allocation3 + $0x91] sm:$0xff]
        %v2398 = vld [vmem:[#allocation3 + $0x99] sm:$0xff]
        %v2399 = vld [vmem:[#allocation3 + $0xa9] sm:$0xff]
        %v2400 = vld [vmem:[#allocation3 + $0xb1] sm:$0xff]
        %v2401 = vld [vmem:[#allocation3 + $0xc1] sm:$0xff]
        %v2402 = vld [vmem:[#allocation3 + $0xc9] sm:$0xff]
        %v2403 = vld [vmem:[#allocation3 + $0xd9] sm:$0xff]
        %v2404 = vld [vmem:[#allocation3 + $0xe1] sm:$0xff]
        %v2405 = vld [vmem:[#allocation3 + $0xf1] sm:$0xff]
        %v2406 = vld [vmem:[#allocation3 + $0xf9] sm:$0xff]
        %v2407 = vld [vmem:[#allocation3 + $0x109] sm:$0xff]
        %v2408 = vld [vmem:[#allocation3 + $0x111] sm:$0xff]
        %v2409 = vld [vmem:[#allocation3 + $0x121] sm:$0xff]
        %v2410 = vld [vmem:[#allocation3 + $0x129] sm:$0xff]
        %v2411 = vld [vmem:[#allocation3 + $0x139] sm:$0xff]
        %v2412 = vld [vmem:[#allocation3 + $0x141] sm:$0xff]
        %v2413 = vld [vmem:[#allocation3 + $0x151] sm:$0xff]
        %v2414 = vld [vmem:[#allocation3 + $0x159] sm:$0xff]
        %v2415 = vld [vmem:[#allocation3 + $0x169] sm:$0xff]
        %v2416 = vld [vmem:[#allocation3 + $0x171] sm:$0xff]
        %v2417 = vmax.f32 %v2353, %v2385
        %v2418 = vmax.f32 %v2354, %v2386
        %v2419 = vmax.f32 %v2355, %v2387
        %v2420 = vmax.f32 %v2356, %v2388
        %v2421 = vmax.f32 %v2357, %v2389
        %v2422 = vmax.f32 %v2358, %v2390
        %v2423 = vmax.f32 %v2359, %v2391
        %v2424 = vmax.f32 %v2360, %v2392
        %v2425 = vmax.f32 %v2361, %v2393
        %v2426 = vmax.f32 %v2362, %v2394
        %v2427 = vmax.f32 %v2363, %v2395
        %v2428 = vmax.f32 %v2364, %v2396
        %v2429 = vmax.f32 %v2365, %v2397
        %v2430 = vmax.f32 %v2366, %v2398
        %v2431 = vmax.f32 %v2367, %v2399
        %v2432 = vmax.f32 %v2368, %v2400
        %v2433 = vmax.f32 %v2369, %v2401
        %v2434 = vmax.f32 %v2370, %v2402
        %v2435 = vmax.f32 %v2371, %v2403
        %v2436 = vmax.f32 %v2372, %v2404
        %v2437 = vmax.f32 %v2373, %v2405
        %v2438 = vmax.f32 %v2374, %v2406
        %v2439 = vmax.f32 %v2375, %v2407
        %v2440 = vmax.f32 %v2376, %v2408
        %v2441 = vmax.f32 %v2377, %v2409
        %v2442 = vmax.f32 %v2378, %v2410
        %v2443 = vmax.f32 %v2379, %v2411
        %v2444 = vmax.f32 %v2380, %v2412
        %v2445 = vmax.f32 %v2381, %v2413
        %v2446 = vmax.f32 %v2382, %v2414
        %v2447 = vmax.f32 %v2383, %v2415
        %v2448 = vmax.f32 %v2384, %v2416
        %v2449 = vld [vmem:[#allocation3 + $0x2] sm:$0xff]
        %v2450 = vld [vmem:[#allocation3 + $0xa] sm:$0xff]
        %v2451 = vld [vmem:[#allocation3 + $0x1a] sm:$0xff]
        %v2452 = vld [vmem:[#allocation3 + $0x22] sm:$0xff]
        %v2453 = vld [vmem:[#allocation3 + $0x32] sm:$0xff]
        %v2454 = vld [vmem:[#allocation3 + $0x3a] sm:$0xff]
        %v2455 = vld [vmem:[#allocation3 + $0x4a] sm:$0xff]
        %v2456 = vld [vmem:[#allocation3 + $0x52] sm:$0xff]
        %v2457 = vld [vmem:[#allocation3 + $0x62] sm:$0xff]
        %v2458 = vld [vmem:[#allocation3 + $0x6a] sm:$0xff]
        %v2459 = vld [vmem:[#allocation3 + $0x7a] sm:$0xff]
        %v2460 = vld [vmem:[#allocation3 + $0x82] sm:$0xff]
        %v2461 = vld [vmem:[#allocation3 + $0x92] sm:$0xff]
        %v2462 = vld [vmem:[#allocation3 + $0x9a] sm:$0xff]
        %v2463 = vld [vmem:[#allocation3 + $0xaa] sm:$0xff]
        %v2464 = vld [vmem:[#allocation3 + $0xb2] sm:$0xff]
        %v2465 = vld [vmem:[#allocation3 + $0xc2] sm:$0xff]
        %v2466 = vld [vmem:[#allocation3 + $0xca] sm:$0xff]
        %v2467 = vld [vmem:[#allocation3 + $0xda] sm:$0xff]
        %v2468 = vld [vmem:[#allocation3 + $0xe2] sm:$0xff]
        %v2469 = vld [vmem:[#allocation3 + $0xf2] sm:$0xff]
        %v2470 = vld [vmem:[#allocation3 + $0xfa] sm:$0xff]
        %v2471 = vld [vmem:[#allocation3 + $0x10a] sm:$0xff]
        %v2472 = vld [vmem:[#allocation3 + $0x112] sm:$0xff]
        %v2473 = vld [vmem:[#allocation3 + $0x122] sm:$0xff]
        %v2474 = vld [vmem:[#allocation3 + $0x12a] sm:$0xff]
        %v2475 = vld [vmem:[#allocation3 + $0x13a] sm:$0xff]
        %v2476 = vld [vmem:[#allocation3 + $0x142] sm:$0xff]
        %v2477 = vld [vmem:[#allocation3 + $0x152] sm:$0xff]
        %v2478 = vld [vmem:[#allocation3 + $0x15a] sm:$0xff]
        %v2479 = vld [vmem:[#allocation3 + $0x16a] sm:$0xff]
        %v2480 = vld [vmem:[#allocation3 + $0x172] sm:$0xff]
        %v2481 = vld [vmem:[#allocation3 + $0x3] sm:$0xff]
        %v2482 = vld [vmem:[#allocation3 + $0xb] sm:$0xff]
        %v2483 = vld [vmem:[#allocation3 + $0x1b] sm:$0xff]
        %v2484 = vld [vmem:[#allocation3 + $0x23] sm:$0xff]
        %v2485 = vld [vmem:[#allocation3 + $0x33] sm:$0xff]
        %v2486 = vld [vmem:[#allocation3 + $0x3b] sm:$0xff]
        %v2487 = vld [vmem:[#allocation3 + $0x4b] sm:$0xff]
        %v2488 = vld [vmem:[#allocation3 + $0x53] sm:$0xff]
        %v2489 = vld [vmem:[#allocation3 + $0x63] sm:$0xff]
        %v2490 = vld [vmem:[#allocation3 + $0x6b] sm:$0xff]
        %v2491 = vld [vmem:[#allocation3 + $0x7b] sm:$0xff]
        %v2492 = vld [vmem:[#allocation3 + $0x83] sm:$0xff]
        %v2493 = vld [vmem:[#allocation3 + $0x93] sm:$0xff]
        %v2494 = vld [vmem:[#allocation3 + $0x9b] sm:$0xff]
        %v2495 = vld [vmem:[#allocation3 + $0xab] sm:$0xff]
        %v2496 = vld [vmem:[#allocation3 + $0xb3] sm:$0xff]
        %v2497 = vld [vmem:[#allocation3 + $0xc3] sm:$0xff]
        %v2498 = vld [vmem:[#allocation3 + $0xcb] sm:$0xff]
        %v2499 = vld [vmem:[#allocation3 + $0xdb] sm:$0xff]
        %v2500 = vld [vmem:[#allocation3 + $0xe3] sm:$0xff]
        %v2501 = vld [vmem:[#allocation3 + $0xf3] sm:$0xff]
        %v2502 = vld [vmem:[#allocation3 + $0xfb] sm:$0xff]
        %v2503 = vld [vmem:[#allocation3 + $0x10b] sm:$0xff]
        %v2504 = vld [vmem:[#allocation3 + $0x113] sm:$0xff]
        %v2505 = vld [vmem:[#allocation3 + $0x123] sm:$0xff]
        %v2506 = vld [vmem:[#allocation3 + $0x12b] sm:$0xff]
        %v2507 = vld [vmem:[#allocation3 + $0x13b] sm:$0xff]
        %v2508 = vld [vmem:[#allocation3 + $0x143] sm:$0xff]
        %v2509 = vld [vmem:[#allocation3 + $0x153] sm:$0xff]
        %v2510 = vld [vmem:[#allocation3 + $0x15b] sm:$0xff]
        %v2511 = vld [vmem:[#allocation3 + $0x16b] sm:$0xff]
        %v2512 = vld [vmem:[#allocation3 + $0x173] sm:$0xff]
        %v2513 = vmax.f32 %v2449, %v2481
        %v2514 = vmax.f32 %v2450, %v2482
        %v2515 = vmax.f32 %v2451, %v2483
        %v2516 = vmax.f32 %v2452, %v2484
        %v2517 = vmax.f32 %v2453, %v2485
        %v2518 = vmax.f32 %v2454, %v2486
        %v2519 = vmax.f32 %v2455, %v2487
        %v2520 = vmax.f32 %v2456, %v2488
        %v2521 = vmax.f32 %v2457, %v2489
        %v2522 = vmax.f32 %v2458, %v2490
        %v2523 = vmax.f32 %v2459, %v2491
        %v2524 = vmax.f32 %v2460, %v2492
        %v2525 = vmax.f32 %v2461, %v2493
        %v2526 = vmax.f32 %v2462, %v2494
        %v2527 = vmax.f32 %v2463, %v2495
        %v2528 = vmax.f32 %v2464, %v2496
        %v2529 = vmax.f32 %v2465, %v2497
        %v2530 = vmax.f32 %v2466, %v2498
        %v2531 = vmax.f32 %v2467, %v2499
        %v2532 = vmax.f32 %v2468, %v2500
        %v2533 = vmax.f32 %v2469, %v2501
        %v2534 = vmax.f32 %v2470, %v2502
        %v2535 = vmax.f32 %v2471, %v2503
        %v2536 = vmax.f32 %v2472, %v2504
        %v2537 = vmax.f32 %v2473, %v2505
        %v2538 = vmax.f32 %v2474, %v2506
        %v2539 = vmax.f32 %v2475, %v2507
        %v2540 = vmax.f32 %v2476, %v2508
        %v2541 = vmax.f32 %v2477, %v2509
        %v2542 = vmax.f32 %v2478, %v2510
        %v2543 = vmax.f32 %v2479, %v2511
        %v2544 = vmax.f32 %v2480, %v2512
        %v2545 = vmax.f32 %v2417, %v2513
        %v2546 = vmax.f32 %v2418, %v2514
        %v2547 = vmax.f32 %v2419, %v2515
        %v2548 = vmax.f32 %v2420, %v2516
        %v2549 = vmax.f32 %v2421, %v2517
        %v2550 = vmax.f32 %v2422, %v2518
        %v2551 = vmax.f32 %v2423, %v2519
        %v2552 = vmax.f32 %v2424, %v2520
        %v2553 = vmax.f32 %v2425, %v2521
        %v2554 = vmax.f32 %v2426, %v2522
        %v2555 = vmax.f32 %v2427, %v2523
        %v2556 = vmax.f32 %v2428, %v2524
        %v2557 = vmax.f32 %v2429, %v2525
        %v2558 = vmax.f32 %v2430, %v2526
        %v2559 = vmax.f32 %v2431, %v2527
        %v2560 = vmax.f32 %v2432, %v2528
        %v2561 = vmax.f32 %v2433, %v2529
        %v2562 = vmax.f32 %v2434, %v2530
        %v2563 = vmax.f32 %v2435, %v2531
        %v2564 = vmax.f32 %v2436, %v2532
        %v2565 = vmax.f32 %v2437, %v2533
        %v2566 = vmax.f32 %v2438, %v2534
        %v2567 = vmax.f32 %v2439, %v2535
        %v2568 = vmax.f32 %v2440, %v2536
        %v2569 = vmax.f32 %v2441, %v2537
        %v2570 = vmax.f32 %v2442, %v2538
        %v2571 = vmax.f32 %v2443, %v2539
        %v2572 = vmax.f32 %v2444, %v2540
        %v2573 = vmax.f32 %v2445, %v2541
        %v2574 = vmax.f32 %v2446, %v2542
        %v2575 = vmax.f32 %v2447, %v2543
        %v2576 = vmax.f32 %v2448, %v2544
        %v2577 = vld [vmem:[#allocation3 + $0x4] sm:$0xff]
        %v2578 = vld [vmem:[#allocation3 + $0xc] sm:$0xff]
        %v2579 = vld [vmem:[#allocation3 + $0x1c] sm:$0xff]
        %v2580 = vld [vmem:[#allocation3 + $0x24] sm:$0xff]
        %v2581 = vld [vmem:[#allocation3 + $0x34] sm:$0xff]
        %v2582 = vld [vmem:[#allocation3 + $0x3c] sm:$0xff]
        %v2583 = vld [vmem:[#allocation3 + $0x4c] sm:$0xff]
        %v2584 = vld [vmem:[#allocation3 + $0x54] sm:$0xff]
        %v2585 = vld [vmem:[#allocation3 + $0x64] sm:$0xff]
        %v2586 = vld [vmem:[#allocation3 + $0x6c] sm:$0xff]
        %v2587 = vld [vmem:[#allocation3 + $0x7c] sm:$0xff]
        %v2588 = vld [vmem:[#allocation3 + $0x84] sm:$0xff]
        %v2589 = vld [vmem:[#allocation3 + $0x94] sm:$0xff]
        %v2590 = vld [vmem:[#allocation3 + $0x9c] sm:$0xff]
        %v2591 = vld [vmem:[#allocation3 + $0xac] sm:$0xff]
        %v2592 = vld [vmem:[#allocation3 + $0xb4] sm:$0xff]
        %v2593 = vld [vmem:[#allocation3 + $0xc4] sm:$0xff]
        %v2594 = vld [vmem:[#allocation3 + $0xcc] sm:$0xff]
        %v2595 = vld [vmem:[#allocation3 + $0xdc] sm:$0xff]
        %v2596 = vld [vmem:[#allocation3 + $0xe4] sm:$0xff]
        %v2597 = vld [vmem:[#allocation3 + $0xf4] sm:$0xff]
        %v2598 = vld [vmem:[#allocation3 + $0xfc] sm:$0xff]
        %v2599 = vld [vmem:[#allocation3 + $0x10c] sm:$0xff]
        %v2600 = vld [vmem:[#allocation3 + $0x114] sm:$0xff]
        %v2601 = vld [vmem:[#allocation3 + $0x124] sm:$0xff]
        %v2602 = vld [vmem:[#allocation3 + $0x12c] sm:$0xff]
        %v2603 = vld [vmem:[#allocation3 + $0x13c] sm:$0xff]
        %v2604 = vld [vmem:[#allocation3 + $0x144] sm:$0xff]
        %v2605 = vld [vmem:[#allocation3 + $0x154] sm:$0xff]
        %v2606 = vld [vmem:[#allocation3 + $0x15c] sm:$0xff]
        %v2607 = vld [vmem:[#allocation3 + $0x16c] sm:$0xff]
        %v2608 = vld [vmem:[#allocation3 + $0x174] sm:$0xff]
        %v2609 = vmax.f32 %v2545, %v2577
        %v2610 = vmax.f32 %v2546, %v2578
        %v2611 = vmax.f32 %v2547, %v2579
        %v2612 = vmax.f32 %v2548, %v2580
        %v2613 = vmax.f32 %v2549, %v2581
        %v2614 = vmax.f32 %v2550, %v2582
        %v2615 = vmax.f32 %v2551, %v2583
        %v2616 = vmax.f32 %v2552, %v2584
        %v2617 = vmax.f32 %v2553, %v2585
        %v2618 = vmax.f32 %v2554, %v2586
        %v2619 = vmax.f32 %v2555, %v2587
        %v2620 = vmax.f32 %v2556, %v2588
        %v2621 = vmax.f32 %v2557, %v2589
        %v2622 = vmax.f32 %v2558, %v2590
        %v2623 = vmax.f32 %v2559, %v2591
        %v2624 = vmax.f32 %v2560, %v2592
        %v2625 = vmax.f32 %v2561, %v2593
        %v2626 = vmax.f32 %v2562, %v2594
        %v2627 = vmax.f32 %v2563, %v2595
        %v2628 = vmax.f32 %v2564, %v2596
        %v2629 = vmax.f32 %v2565, %v2597
        %v2630 = vmax.f32 %v2566, %v2598
        %v2631 = vmax.f32 %v2567, %v2599
        %v2632 = vmax.f32 %v2568, %v2600
        %v2633 = vmax.f32 %v2569, %v2601
        %v2634 = vmax.f32 %v2570, %v2602
        %v2635 = vmax.f32 %v2571, %v2603
        %v2636 = vmax.f32 %v2572, %v2604
        %v2637 = vmax.f32 %v2573, %v2605
        %v2638 = vmax.f32 %v2574, %v2606
        %v2639 = vmax.f32 %v2575, %v2607
        %v2640 = vmax.f32 %v2576, %v2608
        %v2641 = vpack.c.bf16 %v2610, %v2609
        %v2642 = vpack.c.bf16 %v2612, %v2611
        %v2643 = vpack.c.bf16 %v2614, %v2613
        %v2644 = vpack.c.bf16 %v2616, %v2615
        %v2645 = vpack.c.bf16 %v2618, %v2617
        %v2646 = vpack.c.bf16 %v2620, %v2619
        %v2647 = vpack.c.bf16 %v2622, %v2621
        %v2648 = vpack.c.bf16 %v2624, %v2623
        %v2649 = vpack.c.bf16 %v2626, %v2625
        %v2650 = vpack.c.bf16 %v2628, %v2627
        %v2651 = vpack.c.bf16 %v2630, %v2629
        %v2652 = vpack.c.bf16 %v2632, %v2631
        %v2653 = vpack.c.bf16 %v2634, %v2633
        %v2654 = vpack.c.bf16 %v2636, %v2635
        %v2655 = vpack.c.bf16 %v2638, %v2637
        %v2656 = vpack.c.bf16 %v2640, %v2639
        %s2657 = scalar_lea.vmem [#allocation10], 2
        %v2658 = vld [vmem:[%s2657] sm:$0x1]
        %v2660 = vsel %vm854, %v2641, 0
        %v2663 = vsel %vm854, %v2642, 0
        %v2666 = vsel %vm854, %v2643, 0
        %v2669 = vsel %vm854, %v2644, 0
        %v2672 = vsel %vm854, %v2645, 0
        %v2675 = vsel %vm854, %v2646, 0
        %v2678 = vsel %vm854, %v2647, 0
        %v2681 = vsel %vm854, %v2648, 0
        %v2684 = vsel %vm854, %v2649, 0
        %v2687 = vsel %vm854, %v2650, 0
        %v2690 = vsel %vm854, %v2651, 0
        %v2693 = vsel %vm854, %v2652, 0
        %v2696 = vsel %vm854, %v2653, 0
        %v2699 = vsel %vm854, %v2654, 0
        %v2702 = vsel %vm854, %v2655, 0
        %v2705 = vsel %vm854, %v2656, 0
        %v2708 = vsel %vm1624, %v2658, 0
        %2710 = vmatprep.subr.bf16.mxu0 0
        %2711 = vmatpush1.bf16.msra.mxu0 %v2708
        %2712 = vmatprep.subr.bf16.mxu0 0
        %2713 = vmatpush1.bf16.msra.mxu0 0
        %2714 = vmatprep.subr.bf16.mxu0 0
        %2715 = vmatpush1.bf16.msra.mxu0 0
        %2716 = vmatprep.subr.bf16.mxu0 0
        %2717 = vmatpush1.bf16.msra.mxu0 0
        %2718 = vmatprep.subr.bf16.mxu0 0
        %2719 = vmatpush1.bf16.msra.mxu0 0
        %2720 = vmatprep.subr.bf16.mxu0 0
        %2721 = vmatpush1.bf16.msra.mxu0 0
        %2722 = vmatprep.subr.bf16.mxu0 0
        %2723 = vmatpush1.bf16.msra.mxu0 0
        %2724 = vmatprep.subr.bf16.mxu0 0
        %2725 = vmatpush1.bf16.msra.mxu0 0
        %2726 = vmatprep.subr.bf16.mxu0 0
        %2727 = vmatpush1.bf16.msra.mxu0 0
        %2728 = vmatprep.subr.bf16.mxu0 0
        %2729 = vmatpush1.bf16.msra.mxu0 0
        %2730 = vmatprep.subr.bf16.mxu0 0
        %2731 = vmatpush1.bf16.msra.mxu0 0
        %2732 = vmatprep.subr.bf16.mxu0 0
        %2733 = vmatpush1.bf16.msra.mxu0 0
        %2734 = vmatprep.subr.bf16.mxu0 0
        %2735 = vmatpush1.bf16.msra.mxu0 0
        %2736 = vmatprep.subr.bf16.mxu0 0
        %2737 = vmatpush1.bf16.msra.mxu0 0
        %2738 = vmatprep.subr.bf16.mxu0 0
        %2739 = vmatpush1.bf16.msra.mxu0 0
        %2740 = vmatprep.subr.bf16.mxu0 0
        %2741 = vmatpush1.bf16.msra.mxu0 0
        %2742 = vmatprep.mubr.bf16.mxu0 0
        %2743 = vmatmul.mubr.bf16.gmra.mrb[0].mxu0 %v2660
        %v2744 = vpop.f32.mrb[0].mxu0
        %v2745 = vadd.f32 0.0, %v2744
        %v2746 = vpop.f32.mrb[0].mxu0
        %v2747 = vpop.f32.mrb[0].mxu0
        %v2748 = vadd.f32 0.0, %v2747
        %v2749 = vpop.f32.mrb[0].mxu0
        %2750 = vmatprep.mubr.bf16.mxu0 0
        %2751 = vmatmul.mubr.bf16.gmra.mrb[0].mxu0 %v2663
        %v2752 = vpop.f32.mrb[0].mxu0
        %v2753 = vadd.f32 0.0, %v2752
        %v2754 = vpop.f32.mrb[0].mxu0
        %v2755 = vpop.f32.mrb[0].mxu0
        %v2756 = vadd.f32 0.0, %v2755
        %v2757 = vpop.f32.mrb[0].mxu0
        %2758 = vmatprep.mubr.bf16.mxu0 0
        %2759 = vmatmul.mubr.bf16.gmra.mrb[0].mxu0 %v2666
        %v2760 = vpop.f32.mrb[0].mxu0
        %v2761 = vadd.f32 0.0, %v2760
        %v2762 = vpop.f32.mrb[0].mxu0
        %v2763 = vpop.f32.mrb[0].mxu0
        %v2764 = vadd.f32 0.0, %v2763
        %v2765 = vpop.f32.mrb[0].mxu0
        %2766 = vmatprep.mubr.bf16.mxu0 0
        %2767 = vmatmul.mubr.bf16.gmra.mrb[0].mxu0 %v2669
        %v2768 = vpop.f32.mrb[0].mxu0
        %v2769 = vadd.f32 0.0, %v2768
        %v2770 = vpop.f32.mrb[0].mxu0
        %v2771 = vpop.f32.mrb[0].mxu0
        %v2772 = vadd.f32 0.0, %v2771
        %v2773 = vpop.f32.mrb[0].mxu0
        %2774 = vmatprep.mubr.bf16.mxu0 0
        %2775 = vmatmul.mubr.bf16.gmra.mrb[0].mxu0 %v2672
        %v2776 = vpop.f32.mrb[0].mxu0
        %v2777 = vadd.f32 0.0, %v2776
        %v2778 = vpop.f32.mrb[0].mxu0
        %v2779 = vpop.f32.mrb[0].mxu0
        %v2780 = vadd.f32 0.0, %v2779
        %v2781 = vpop.f32.mrb[0].mxu0
        %2782 = vmatprep.mubr.bf16.mxu0 0
        %2783 = vmatmul.mubr.bf16.gmra.mrb[0].mxu0 %v2675
        %v2784 = vpop.f32.mrb[0].mxu0
        %v2785 = vadd.f32 0.0, %v2784
        %v2786 = vpop.f32.mrb[0].mxu0
        %v2787 = vpop.f32.mrb[0].mxu0
        %v2788 = vadd.f32 0.0, %v2787
        %v2789 = vpop.f32.mrb[0].mxu0
        %2790 = vmatprep.mubr.bf16.mxu0 0
        %2791 = vmatmul.mubr.bf16.gmra.mrb[0].mxu0 %v2678
        %v2792 = vpop.f32.mrb[0].mxu0
        %v2793 = vadd.f32 0.0, %v2792
        %v2794 = vpop.f32.mrb[0].mxu0
        %v2795 = vpop.f32.mrb[0].mxu0
        %v2796 = vadd.f32 0.0, %v2795
        %v2797 = vpop.f32.mrb[0].mxu0
        %2798 = vmatprep.mubr.bf16.mxu0 0
        %2799 = vmatmul.mubr.bf16.gmra.mrb[0].mxu0 %v2681
        %v2800 = vpop.f32.mrb[0].mxu0
        %v2801 = vadd.f32 0.0, %v2800
        %v2802 = vpop.f32.mrb[0].mxu0
        %v2803 = vpop.f32.mrb[0].mxu0
        %v2804 = vadd.f32 0.0, %v2803
        %v2805 = vpop.f32.mrb[0].mxu0
        %2806 = vmatprep.mubr.bf16.mxu0 0
        %2807 = vmatmul.mubr.bf16.gmra.mrb[0].mxu0 %v2684
        %v2808 = vpop.f32.mrb[0].mxu0
        %v2809 = vadd.f32 0.0, %v2808
        %v2810 = vpop.f32.mrb[0].mxu0
        %v2811 = vpop.f32.mrb[0].mxu0
        %v2812 = vadd.f32 0.0, %v2811
        %v2813 = vpop.f32.mrb[0].mxu0
        %2814 = vmatprep.mubr.bf16.mxu0 0
        %2815 = vmatmul.mubr.bf16.gmra.mrb[0].mxu0 %v2687
        %v2816 = vpop.f32.mrb[0].mxu0
        %v2817 = vadd.f32 0.0, %v2816
        %v2818 = vpop.f32.mrb[0].mxu0
        %v2819 = vpop.f32.mrb[0].mxu0
        %v2820 = vadd.f32 0.0, %v2819
        %v2821 = vpop.f32.mrb[0].mxu0
        %2822 = vmatprep.mubr.bf16.mxu0 0
        %2823 = vmatmul.mubr.bf16.gmra.mrb[0].mxu0 %v2690
        %v2824 = vpop.f32.mrb[0].mxu0
        %v2825 = vadd.f32 0.0, %v2824
        %v2826 = vpop.f32.mrb[0].mxu0
        %v2827 = vpop.f32.mrb[0].mxu0
        %v2828 = vadd.f32 0.0, %v2827
        %v2829 = vpop.f32.mrb[0].mxu0
        %2830 = vmatprep.mubr.bf16.mxu0 0
        %2831 = vmatmul.mubr.bf16.gmra.mrb[0].mxu0 %v2693
        %v2832 = vpop.f32.mrb[0].mxu0
        %v2833 = vadd.f32 0.0, %v2832
        %v2834 = vpop.f32.mrb[0].mxu0
        %v2835 = vpop.f32.mrb[0].mxu0
        %v2836 = vadd.f32 0.0, %v2835
        %v2837 = vpop.f32.mrb[0].mxu0
        %2838 = vmatprep.mubr.bf16.mxu0 0
        %2839 = vmatmul.mubr.bf16.gmra.mrb[0].mxu0 %v2696
        %v2840 = vpop.f32.mrb[0].mxu0
        %v2841 = vadd.f32 0.0, %v2840
        %v2842 = vpop.f32.mrb[0].mxu0
        %v2843 = vpop.f32.mrb[0].mxu0
        %v2844 = vadd.f32 0.0, %v2843
        %v2845 = vpop.f32.mrb[0].mxu0
        %2846 = vmatprep.mubr.bf16.mxu0 0
        %2847 = vmatmul.mubr.bf16.gmra.mrb[0].mxu0 %v2699
        %v2848 = vpop.f32.mrb[0].mxu0
        %v2849 = vadd.f32 0.0, %v2848
        %v2850 = vpop.f32.mrb[0].mxu0
        %v2851 = vpop.f32.mrb[0].mxu0
        %v2852 = vadd.f32 0.0, %v2851
        %v2853 = vpop.f32.mrb[0].mxu0
        %2854 = vmatprep.mubr.bf16.mxu0 0
        %2855 = vmatmul.mubr.bf16.gmra.mrb[0].mxu0 %v2702
        %v2856 = vpop.f32.mrb[0].mxu0
        %v2857 = vadd.f32 0.0, %v2856
        %v2858 = vpop.f32.mrb[0].mxu0
        %v2859 = vpop.f32.mrb[0].mxu0
        %v2860 = vadd.f32 0.0, %v2859
        %v2861 = vpop.f32.mrb[0].mxu0
        %2862 = vmatprep.mubr.bf16.mxu0 0
        %2863 = vmatmul.mubr.bf16.gmra.mrb[0].mxu0 %v2705
        %v2864 = vpop.f32.mrb[0].mxu0
        %v2865 = vadd.f32 0.0, %v2864
        %v2866 = vpop.f32.mrb[0].mxu0
        %v2867 = vpop.f32.mrb[0].mxu0
        %v2868 = vadd.f32 0.0, %v2867
        %v2869 = vpop.f32.mrb[0].mxu0
        %2870 = vdwg.mxu0
        %v2871 = vadd.f32 %v1875, %v2745
        %v2872 = vadd.f32 %v1878, %v2748
        %v2873 = vadd.f32 %v1883, %v2753
        %v2874 = vadd.f32 %v1886, %v2756
        %v2875 = vadd.f32 %v1891, %v2761
        %v2876 = vadd.f32 %v1894, %v2764
        %v2877 = vadd.f32 %v1899, %v2769
        %v2878 = vadd.f32 %v1902, %v2772
        %v2879 = vadd.f32 %v1907, %v2777
        %v2880 = vadd.f32 %v1910, %v2780
        %v2881 = vadd.f32 %v1915, %v2785
        %v2882 = vadd.f32 %v1918, %v2788
        %v2883 = vadd.f32 %v1923, %v2793
        %v2884 = vadd.f32 %v1926, %v2796
        %v2885 = vadd.f32 %v1931, %v2801
        %v2886 = vadd.f32 %v1934, %v2804
        %v2887 = vadd.f32 %v1939, %v2809
        %v2888 = vadd.f32 %v1942, %v2812
        %v2889 = vadd.f32 %v1947, %v2817
        %v2890 = vadd.f32 %v1950, %v2820
        %v2891 = vadd.f32 %v1955, %v2825
        %v2892 = vadd.f32 %v1958, %v2828
        %v2893 = vadd.f32 %v1963, %v2833
        %v2894 = vadd.f32 %v1966, %v2836
        %v2895 = vadd.f32 %v1971, %v2841
        %v2896 = vadd.f32 %v1974, %v2844
        %v2897 = vadd.f32 %v1979, %v2849
        %v2898 = vadd.f32 %v1982, %v2852
        %v2899 = vadd.f32 %v1987, %v2857
        %v2900 = vadd.f32 %v1990, %v2860
        %v2901 = vadd.f32 %v1995, %v2865
        %v2902 = vadd.f32 %v1998, %v2868
        %2903 = vst.msk [vmem:[%s914] sm:$0xff] %vm854, %v2609
        %2904 = vst.msk [vmem:[%s914 + $0x8] sm:$0xff] %vm854, %v2610
        %2905 = vst.msk [vmem:[%s914 + $0x10] sm:$0xff] %vm854, %v2611
        %2906 = vst.msk [vmem:[%s914 + $0x18] sm:$0xff] %vm854, %v2612
        %2907 = vst.msk [vmem:[%s914 + $0x20] sm:$0xff] %vm854, %v2613
        %2908 = vst.msk [vmem:[%s914 + $0x28] sm:$0xff] %vm854, %v2614
        %2909 = vst.msk [vmem:[%s914 + $0x30] sm:$0xff] %vm854, %v2615
        %2910 = vst.msk [vmem:[%s914 + $0x38] sm:$0xff] %vm854, %v2616
        %2911 = vst.msk [vmem:[%s914 + $0x40] sm:$0xff] %vm854, %v2617
        %2912 = vst.msk [vmem:[%s914 + $0x48] sm:$0xff] %vm854, %v2618
        %2913 = vst.msk [vmem:[%s914 + $0x50] sm:$0xff] %vm854, %v2619
        %2914 = vst.msk [vmem:[%s914 + $0x58] sm:$0xff] %vm854, %v2620
        %2915 = vst.msk [vmem:[%s914 + $0x60] sm:$0xff] %vm854, %v2621
        %2916 = vst.msk [vmem:[%s914 + $0x68] sm:$0xff] %vm854, %v2622
        %2917 = vst.msk [vmem:[%s914 + $0x70] sm:$0xff] %vm854, %v2623
        %2918 = vst.msk [vmem:[%s914 + $0x78] sm:$0xff] %vm854, %v2624
        %2919 = vst.msk [vmem:[%s914 + $0x80] sm:$0xff] %vm854, %v2625
        %2920 = vst.msk [vmem:[%s914 + $0x88] sm:$0xff] %vm854, %v2626
        %2921 = vst.msk [vmem:[%s914 + $0x90] sm:$0xff] %vm854, %v2627
        %2922 = vst.msk [vmem:[%s914 + $0x98] sm:$0xff] %vm854, %v2628
        %2923 = vst.msk [vmem:[%s914 + $0xa0] sm:$0xff] %vm854, %v2629
        %2924 = vst.msk [vmem:[%s914 + $0xa8] sm:$0xff] %vm854, %v2630
        %2925 = vst.msk [vmem:[%s914 + $0xb0] sm:$0xff] %vm854, %v2631
        %2926 = vst.msk [vmem:[%s914 + $0xb8] sm:$0xff] %vm854, %v2632
        %2927 = vst.msk [vmem:[%s914 + $0xc0] sm:$0xff] %vm854, %v2633
        %2928 = vst.msk [vmem:[%s914 + $0xc8] sm:$0xff] %vm854, %v2634
        %2929 = vst.msk [vmem:[%s914 + $0xd0] sm:$0xff] %vm854, %v2635
        %2930 = vst.msk [vmem:[%s914 + $0xd8] sm:$0xff] %vm854, %v2636
        %2931 = vst.msk [vmem:[%s914 + $0xe0] sm:$0xff] %vm854, %v2637
        %2932 = vst.msk [vmem:[%s914 + $0xe8] sm:$0xff] %vm854, %v2638
        %2933 = vst.msk [vmem:[%s914 + $0xf0] sm:$0xff] %vm854, %v2639
        %2934 = vst.msk [vmem:[%s914 + $0xf8] sm:$0xff] %vm854, %v2640
        %v2935 = vld [vmem:[#allocation2] sm:$0xff]
        %v2936 = vld [vmem:[#allocation2 + $0x8] sm:$0xff]
        %v2937 = vld [vmem:[#allocation2 + $0x10] sm:$0xff]
        %v2938 = vld [vmem:[#allocation2 + $0x18] sm:$0xff]
        %v2939 = vld [vmem:[#allocation2 + $0x20] sm:$0xff]
        %v2940 = vld [vmem:[#allocation2 + $0x28] sm:$0xff]
        %v2941 = vld [vmem:[#allocation2 + $0x30] sm:$0xff]
        %v2942 = vld [vmem:[#allocation2 + $0x38] sm:$0xff]
        %v2943 = vld [vmem:[#allocation2 + $0x40] sm:$0xff]
        %v2944 = vld [vmem:[#allocation2 + $0x48] sm:$0xff]
        %v2945 = vld [vmem:[#allocation2 + $0x50] sm:$0xff]
        %v2946 = vld [vmem:[#allocation2 + $0x58] sm:$0xff]
        %v2947 = vld [vmem:[#allocation2 + $0x60] sm:$0xff]
        %v2948 = vld [vmem:[#allocation2 + $0x68] sm:$0xff]
        %v2949 = vld [vmem:[#allocation2 + $0x70] sm:$0xff]
        %v2950 = vld [vmem:[#allocation2 + $0x78] sm:$0xff]
        %v2951 = vld [vmem:[#allocation2 + $0x80] sm:$0xff]
        %v2952 = vld [vmem:[#allocation2 + $0x88] sm:$0xff]
        %v2953 = vld [vmem:[#allocation2 + $0x90] sm:$0xff]
        %v2954 = vld [vmem:[#allocation2 + $0x98] sm:$0xff]
        %v2955 = vld [vmem:[#allocation2 + $0xa0] sm:$0xff]
        %v2956 = vld [vmem:[#allocation2 + $0xa8] sm:$0xff]
        %v2957 = vld [vmem:[#allocation2 + $0xb0] sm:$0xff]
        %v2958 = vld [vmem:[#allocation2 + $0xb8] sm:$0xff]
        %v2959 = vld [vmem:[#allocation2 + $0xc0] sm:$0xff]
        %v2960 = vld [vmem:[#allocation2 + $0xc8] sm:$0xff]
        %v2961 = vld [vmem:[#allocation2 + $0xd0] sm:$0xff]
        %v2962 = vld [vmem:[#allocation2 + $0xd8] sm:$0xff]
        %v2963 = vld [vmem:[#allocation2 + $0xe0] sm:$0xff]
        %v2964 = vld [vmem:[#allocation2 + $0xe8] sm:$0xff]
        %v2965 = vld [vmem:[#allocation2 + $0xf0] sm:$0xff]
        %v2966 = vld [vmem:[#allocation2 + $0xf8] sm:$0xff]
        %v2967 = vld [vmem:[%s979] sm:$0xff]
        %v2968 = vld [vmem:[%s979 + $0x8] sm:$0xff]
        %v2969 = vld [vmem:[%s979 + $0x10] sm:$0xff]
        %v2970 = vld [vmem:[%s979 + $0x18] sm:$0xff]
        %v2971 = vld [vmem:[%s979 + $0x20] sm:$0xff]
        %v2972 = vld [vmem:[%s979 + $0x28] sm:$0xff]
        %v2973 = vld [vmem:[%s979 + $0x30] sm:$0xff]
        %v2974 = vld [vmem:[%s979 + $0x38] sm:$0xff]
        %v2975 = vld [vmem:[%s979 + $0x40] sm:$0xff]
        %v2976 = vld [vmem:[%s979 + $0x48] sm:$0xff]
        %v2977 = vld [vmem:[%s979 + $0x50] sm:$0xff]
        %v2978 = vld [vmem:[%s979 + $0x58] sm:$0xff]
        %v2979 = vld [vmem:[%s979 + $0x60] sm:$0xff]
        %v2980 = vld [vmem:[%s979 + $0x68] sm:$0xff]
        %v2981 = vld [vmem:[%s979 + $0x70] sm:$0xff]
        %v2982 = vld [vmem:[%s979 + $0x78] sm:$0xff]
        %v2983 = vld [vmem:[%s979 + $0x80] sm:$0xff]
        %v2984 = vld [vmem:[%s979 + $0x88] sm:$0xff]
        %v2985 = vld [vmem:[%s979 + $0x90] sm:$0xff]
        %v2986 = vld [vmem:[%s979 + $0x98] sm:$0xff]
        %v2987 = vld [vmem:[%s979 + $0xa0] sm:$0xff]
        %v2988 = vld [vmem:[%s979 + $0xa8] sm:$0xff]
        %v2989 = vld [vmem:[%s979 + $0xb0] sm:$0xff]
        %v2990 = vld [vmem:[%s979 + $0xb8] sm:$0xff]
        %v2991 = vld [vmem:[%s979 + $0xc0] sm:$0xff]
        %v2992 = vld [vmem:[%s979 + $0xc8] sm:$0xff]
        %v2993 = vld [vmem:[%s979 + $0xd0] sm:$0xff]
        %v2994 = vld [vmem:[%s979 + $0xd8] sm:$0xff]
        %v2995 = vld [vmem:[%s979 + $0xe0] sm:$0xff]
        %v2996 = vld [vmem:[%s979 + $0xe8] sm:$0xff]
        %v2997 = vld [vmem:[%s979 + $0xf0] sm:$0xff]
        %v2998 = vld [vmem:[%s979 + $0xf8] sm:$0xff]
        %v2999 = vmax.f32 %v2935, %v2967
        %v3000 = vmax.f32 %v2936, %v2968
        %v3001 = vmax.f32 %v2937, %v2969
        %v3002 = vmax.f32 %v2938, %v2970
        %v3003 = vmax.f32 %v2939, %v2971
        %v3004 = vmax.f32 %v2940, %v2972
        %v3005 = vmax.f32 %v2941, %v2973
        %v3006 = vmax.f32 %v2942, %v2974
        %v3007 = vmax.f32 %v2943, %v2975
        %v3008 = vmax.f32 %v2944, %v2976
        %v3009 = vmax.f32 %v2945, %v2977
        %v3010 = vmax.f32 %v2946, %v2978
        %v3011 = vmax.f32 %v2947, %v2979
        %v3012 = vmax.f32 %v2948, %v2980
        %v3013 = vmax.f32 %v2949, %v2981
        %v3014 = vmax.f32 %v2950, %v2982
        %v3015 = vmax.f32 %v2951, %v2983
        %v3016 = vmax.f32 %v2952, %v2984
        %v3017 = vmax.f32 %v2953, %v2985
        %v3018 = vmax.f32 %v2954, %v2986
        %v3019 = vmax.f32 %v2955, %v2987
        %v3020 = vmax.f32 %v2956, %v2988
        %v3021 = vmax.f32 %v2957, %v2989
        %v3022 = vmax.f32 %v2958, %v2990
        %v3023 = vmax.f32 %v2959, %v2991
        %v3024 = vmax.f32 %v2960, %v2992
        %v3025 = vmax.f32 %v2961, %v2993
        %v3026 = vmax.f32 %v2962, %v2994
        %v3027 = vmax.f32 %v2963, %v2995
        %v3028 = vmax.f32 %v2964, %v2996
        %v3029 = vmax.f32 %v2965, %v2997
        %v3030 = vmax.f32 %v2966, %v2998
        %v3031 = vld [vmem:[%s914] sm:$0xff]
        %v3032 = vld [vmem:[%s914 + $0x8] sm:$0xff]
        %v3033 = vld [vmem:[%s914 + $0x10] sm:$0xff]
        %v3034 = vld [vmem:[%s914 + $0x18] sm:$0xff]
        %v3035 = vld [vmem:[%s914 + $0x20] sm:$0xff]
        %v3036 = vld [vmem:[%s914 + $0x28] sm:$0xff]
        %v3037 = vld [vmem:[%s914 + $0x30] sm:$0xff]
        %v3038 = vld [vmem:[%s914 + $0x38] sm:$0xff]
        %v3039 = vld [vmem:[%s914 + $0x40] sm:$0xff]
        %v3040 = vld [vmem:[%s914 + $0x48] sm:$0xff]
        %v3041 = vld [vmem:[%s914 + $0x50] sm:$0xff]
        %v3042 = vld [vmem:[%s914 + $0x58] sm:$0xff]
        %v3043 = vld [vmem:[%s914 + $0x60] sm:$0xff]
        %v3044 = vld [vmem:[%s914 + $0x68] sm:$0xff]
        %v3045 = vld [vmem:[%s914 + $0x70] sm:$0xff]
        %v3046 = vld [vmem:[%s914 + $0x78] sm:$0xff]
        %v3047 = vld [vmem:[%s914 + $0x80] sm:$0xff]
        %v3048 = vld [vmem:[%s914 + $0x88] sm:$0xff]
        %v3049 = vld [vmem:[%s914 + $0x90] sm:$0xff]
        %v3050 = vld [vmem:[%s914 + $0x98] sm:$0xff]
        %v3051 = vld [vmem:[%s914 + $0xa0] sm:$0xff]
        %v3052 = vld [vmem:[%s914 + $0xa8] sm:$0xff]
        %v3053 = vld [vmem:[%s914 + $0xb0] sm:$0xff]
        %v3054 = vld [vmem:[%s914 + $0xb8] sm:$0xff]
        %v3055 = vld [vmem:[%s914 + $0xc0] sm:$0xff]
        %v3056 = vld [vmem:[%s914 + $0xc8] sm:$0xff]
        %v3057 = vld [vmem:[%s914 + $0xd0] sm:$0xff]
        %v3058 = vld [vmem:[%s914 + $0xd8] sm:$0xff]
        %v3059 = vld [vmem:[%s914 + $0xe0] sm:$0xff]
        %v3060 = vld [vmem:[%s914 + $0xe8] sm:$0xff]
        %v3061 = vld [vmem:[%s914 + $0xf0] sm:$0xff]
        %v3062 = vld [vmem:[%s914 + $0xf8] sm:$0xff]
        %v3063 = vld [vmem:[%s1076] sm:$0xff]
        %v3064 = vld [vmem:[%s1076 + $0x8] sm:$0xff]
        %v3065 = vld [vmem:[%s1076 + $0x10] sm:$0xff]
        %v3066 = vld [vmem:[%s1076 + $0x18] sm:$0xff]
        %v3067 = vld [vmem:[%s1076 + $0x20] sm:$0xff]
        %v3068 = vld [vmem:[%s1076 + $0x28] sm:$0xff]
        %v3069 = vld [vmem:[%s1076 + $0x30] sm:$0xff]
        %v3070 = vld [vmem:[%s1076 + $0x38] sm:$0xff]
        %v3071 = vld [vmem:[%s1076 + $0x40] sm:$0xff]
        %v3072 = vld [vmem:[%s1076 + $0x48] sm:$0xff]
        %v3073 = vld [vmem:[%s1076 + $0x50] sm:$0xff]
        %v3074 = vld [vmem:[%s1076 + $0x58] sm:$0xff]
        %v3075 = vld [vmem:[%s1076 + $0x60] sm:$0xff]
        %v3076 = vld [vmem:[%s1076 + $0x68] sm:$0xff]
        %v3077 = vld [vmem:[%s1076 + $0x70] sm:$0xff]
        %v3078 = vld [vmem:[%s1076 + $0x78] sm:$0xff]
        %v3079 = vld [vmem:[%s1076 + $0x80] sm:$0xff]
        %v3080 = vld [vmem:[%s1076 + $0x88] sm:$0xff]
        %v3081 = vld [vmem:[%s1076 + $0x90] sm:$0xff]
        %v3082 = vld [vmem:[%s1076 + $0x98] sm:$0xff]
        %v3083 = vld [vmem:[%s1076 + $0xa0] sm:$0xff]
        %v3084 = vld [vmem:[%s1076 + $0xa8] sm:$0xff]
        %v3085 = vld [vmem:[%s1076 + $0xb0] sm:$0xff]
        %v3086 = vld [vmem:[%s1076 + $0xb8] sm:$0xff]
        %v3087 = vld [vmem:[%s1076 + $0xc0] sm:$0xff]
        %v3088 = vld [vmem:[%s1076 + $0xc8] sm:$0xff]
        %v3089 = vld [vmem:[%s1076 + $0xd0] sm:$0xff]
        %v3090 = vld [vmem:[%s1076 + $0xd8] sm:$0xff]
        %v3091 = vld [vmem:[%s1076 + $0xe0] sm:$0xff]
        %v3092 = vld [vmem:[%s1076 + $0xe8] sm:$0xff]
        %v3093 = vld [vmem:[%s1076 + $0xf0] sm:$0xff]
        %v3094 = vld [vmem:[%s1076 + $0xf8] sm:$0xff]
        %v3095 = vmax.f32 %v3031, %v3063
        %v3096 = vmax.f32 %v3032, %v3064
        %v3097 = vmax.f32 %v3033, %v3065
        %v3098 = vmax.f32 %v3034, %v3066
        %v3099 = vmax.f32 %v3035, %v3067
        %v3100 = vmax.f32 %v3036, %v3068
        %v3101 = vmax.f32 %v3037, %v3069
        %v3102 = vmax.f32 %v3038, %v3070
        %v3103 = vmax.f32 %v3039, %v3071
        %v3104 = vmax.f32 %v3040, %v3072
        %v3105 = vmax.f32 %v3041, %v3073
        %v3106 = vmax.f32 %v3042, %v3074
        %v3107 = vmax.f32 %v3043, %v3075
        %v3108 = vmax.f32 %v3044, %v3076
        %v3109 = vmax.f32 %v3045, %v3077
        %v3110 = vmax.f32 %v3046, %v3078
        %v3111 = vmax.f32 %v3047, %v3079
        %v3112 = vmax.f32 %v3048, %v3080
        %v3113 = vmax.f32 %v3049, %v3081
        %v3114 = vmax.f32 %v3050, %v3082
        %v3115 = vmax.f32 %v3051, %v3083
        %v3116 = vmax.f32 %v3052, %v3084
        %v3117 = vmax.f32 %v3053, %v3085
        %v3118 = vmax.f32 %v3054, %v3086
        %v3119 = vmax.f32 %v3055, %v3087
        %v3120 = vmax.f32 %v3056, %v3088
        %v3121 = vmax.f32 %v3057, %v3089
        %v3122 = vmax.f32 %v3058, %v3090
        %v3123 = vmax.f32 %v3059, %v3091
        %v3124 = vmax.f32 %v3060, %v3092
        %v3125 = vmax.f32 %v3061, %v3093
        %v3126 = vmax.f32 %v3062, %v3094
        %v3127 = vmax.f32 %v2999, %v3095
        %v3128 = vmax.f32 %v3000, %v3096
        %v3129 = vmax.f32 %v3001, %v3097
        %v3130 = vmax.f32 %v3002, %v3098
        %v3131 = vmax.f32 %v3003, %v3099
        %v3132 = vmax.f32 %v3004, %v3100
        %v3133 = vmax.f32 %v3005, %v3101
        %v3134 = vmax.f32 %v3006, %v3102
        %v3135 = vmax.f32 %v3007, %v3103
        %v3136 = vmax.f32 %v3008, %v3104
        %v3137 = vmax.f32 %v3009, %v3105
        %v3138 = vmax.f32 %v3010, %v3106
        %v3139 = vmax.f32 %v3011, %v3107
        %v3140 = vmax.f32 %v3012, %v3108
        %v3141 = vmax.f32 %v3013, %v3109
        %v3142 = vmax.f32 %v3014, %v3110
        %v3143 = vmax.f32 %v3015, %v3111
        %v3144 = vmax.f32 %v3016, %v3112
        %v3145 = vmax.f32 %v3017, %v3113
        %v3146 = vmax.f32 %v3018, %v3114
        %v3147 = vmax.f32 %v3019, %v3115
        %v3148 = vmax.f32 %v3020, %v3116
        %v3149 = vmax.f32 %v3021, %v3117
        %v3150 = vmax.f32 %v3022, %v3118
        %v3151 = vmax.f32 %v3023, %v3119
        %v3152 = vmax.f32 %v3024, %v3120
        %v3153 = vmax.f32 %v3025, %v3121
        %v3154 = vmax.f32 %v3026, %v3122
        %v3155 = vmax.f32 %v3027, %v3123
        %v3156 = vmax.f32 %v3028, %v3124
        %v3157 = vmax.f32 %v3029, %v3125
        %v3158 = vmax.f32 %v3030, %v3126
        %v3159 = vld [vmem:[%s1173] sm:$0xff]
        %v3160 = vld [vmem:[%s1173 + $0x8] sm:$0xff]
        %v3161 = vld [vmem:[%s1173 + $0x10] sm:$0xff]
        %v3162 = vld [vmem:[%s1173 + $0x18] sm:$0xff]
        %v3163 = vld [vmem:[%s1173 + $0x20] sm:$0xff]
        %v3164 = vld [vmem:[%s1173 + $0x28] sm:$0xff]
        %v3165 = vld [vmem:[%s1173 + $0x30] sm:$0xff]
        %v3166 = vld [vmem:[%s1173 + $0x38] sm:$0xff]
        %v3167 = vld [vmem:[%s1173 + $0x40] sm:$0xff]
        %v3168 = vld [vmem:[%s1173 + $0x48] sm:$0xff]
        %v3169 = vld [vmem:[%s1173 + $0x50] sm:$0xff]
        %v3170 = vld [vmem:[%s1173 + $0x58] sm:$0xff]
        %v3171 = vld [vmem:[%s1173 + $0x60] sm:$0xff]
        %v3172 = vld [vmem:[%s1173 + $0x68] sm:$0xff]
        %v3173 = vld [vmem:[%s1173 + $0x70] sm:$0xff]
        %v3174 = vld [vmem:[%s1173 + $0x78] sm:$0xff]
        %v3175 = vld [vmem:[%s1173 + $0x80] sm:$0xff]
        %v3176 = vld [vmem:[%s1173 + $0x88] sm:$0xff]
        %v3177 = vld [vmem:[%s1173 + $0x90] sm:$0xff]
        %v3178 = vld [vmem:[%s1173 + $0x98] sm:$0xff]
        %v3179 = vld [vmem:[%s1173 + $0xa0] sm:$0xff]
        %v3180 = vld [vmem:[%s1173 + $0xa8] sm:$0xff]
        %v3181 = vld [vmem:[%s1173 + $0xb0] sm:$0xff]
        %v3182 = vld [vmem:[%s1173 + $0xb8] sm:$0xff]
        %v3183 = vld [vmem:[%s1173 + $0xc0] sm:$0xff]
        %v3184 = vld [vmem:[%s1173 + $0xc8] sm:$0xff]
        %v3185 = vld [vmem:[%s1173 + $0xd0] sm:$0xff]
        %v3186 = vld [vmem:[%s1173 + $0xd8] sm:$0xff]
        %v3187 = vld [vmem:[%s1173 + $0xe0] sm:$0xff]
        %v3188 = vld [vmem:[%s1173 + $0xe8] sm:$0xff]
        %v3189 = vld [vmem:[%s1173 + $0xf0] sm:$0xff]
        %v3190 = vld [vmem:[%s1173 + $0xf8] sm:$0xff]
        %v3191 = vmax.f32 %v3127, %v3159
        %v3192 = vmax.f32 %v3128, %v3160
        %v3193 = vmax.f32 %v3129, %v3161
        %v3194 = vmax.f32 %v3130, %v3162
        %v3195 = vmax.f32 %v3131, %v3163
        %v3196 = vmax.f32 %v3132, %v3164
        %v3197 = vmax.f32 %v3133, %v3165
        %v3198 = vmax.f32 %v3134, %v3166
        %v3199 = vmax.f32 %v3135, %v3167
        %v3200 = vmax.f32 %v3136, %v3168
        %v3201 = vmax.f32 %v3137, %v3169
        %v3202 = vmax.f32 %v3138, %v3170
        %v3203 = vmax.f32 %v3139, %v3171
        %v3204 = vmax.f32 %v3140, %v3172
        %v3205 = vmax.f32 %v3141, %v3173
        %v3206 = vmax.f32 %v3142, %v3174
        %v3207 = vmax.f32 %v3143, %v3175
        %v3208 = vmax.f32 %v3144, %v3176
        %v3209 = vmax.f32 %v3145, %v3177
        %v3210 = vmax.f32 %v3146, %v3178
        %v3211 = vmax.f32 %v3147, %v3179
        %v3212 = vmax.f32 %v3148, %v3180
        %v3213 = vmax.f32 %v3149, %v3181
        %v3214 = vmax.f32 %v3150, %v3182
        %v3215 = vmax.f32 %v3151, %v3183
        %v3216 = vmax.f32 %v3152, %v3184
        %v3217 = vmax.f32 %v3153, %v3185
        %v3218 = vmax.f32 %v3154, %v3186
        %v3219 = vmax.f32 %v3155, %v3187
        %v3220 = vmax.f32 %v3156, %v3188
        %v3221 = vmax.f32 %v3157, %v3189
        %v3222 = vmax.f32 %v3158, %v3190
        %3223 = vst.msk [vmem:[#allocation3 + $0x2] sm:$0xff] %vm854, %v3191
        %3224 = vst.msk [vmem:[#allocation3 + $0xa] sm:$0xff] %vm854, %v3192
        %3225 = vst.msk [vmem:[#allocation3 + $0x1a] sm:$0xff] %vm854, %v3193
        %3226 = vst.msk [vmem:[#allocation3 + $0x22] sm:$0xff] %vm854, %v3194
        %3227 = vst.msk [vmem:[#allocation3 + $0x32] sm:$0xff] %vm854, %v3195
        %3228 = vst.msk [vmem:[#allocation3 + $0x3a] sm:$0xff] %vm854, %v3196
        %3229 = vst.msk [vmem:[#allocation3 + $0x4a] sm:$0xff] %vm854, %v3197
        %3230 = vst.msk [vmem:[#allocation3 + $0x52] sm:$0xff] %vm854, %v3198
        %3231 = vst.msk [vmem:[#allocation3 + $0x62] sm:$0xff] %vm854, %v3199
        %3232 = vst.msk [vmem:[#allocation3 + $0x6a] sm:$0xff] %vm854, %v3200
        %3233 = vst.msk [vmem:[#allocation3 + $0x7a] sm:$0xff] %vm854, %v3201
        %3234 = vst.msk [vmem:[#allocation3 + $0x82] sm:$0xff] %vm854, %v3202
        %3235 = vst.msk [vmem:[#allocation3 + $0x92] sm:$0xff] %vm854, %v3203
        %3236 = vst.msk [vmem:[#allocation3 + $0x9a] sm:$0xff] %vm854, %v3204
        %3237 = vst.msk [vmem:[#allocation3 + $0xaa] sm:$0xff] %vm854, %v3205
        %3238 = vst.msk [vmem:[#allocation3 + $0xb2] sm:$0xff] %vm854, %v3206
        %3239 = vst.msk [vmem:[#allocation3 + $0xc2] sm:$0xff] %vm854, %v3207
        %3240 = vst.msk [vmem:[#allocation3 + $0xca] sm:$0xff] %vm854, %v3208
        %3241 = vst.msk [vmem:[#allocation3 + $0xda] sm:$0xff] %vm854, %v3209
        %3242 = vst.msk [vmem:[#allocation3 + $0xe2] sm:$0xff] %vm854, %v3210
        %3243 = vst.msk [vmem:[#allocation3 + $0xf2] sm:$0xff] %vm854, %v3211
        %3244 = vst.msk [vmem:[#allocation3 + $0xfa] sm:$0xff] %vm854, %v3212
        %3245 = vst.msk [vmem:[#allocation3 + $0x10a] sm:$0xff] %vm854, %v3213
        %3246 = vst.msk [vmem:[#allocation3 + $0x112] sm:$0xff] %vm854, %v3214
        %3247 = vst.msk [vmem:[#allocation3 + $0x122] sm:$0xff] %vm854, %v3215
        %3248 = vst.msk [vmem:[#allocation3 + $0x12a] sm:$0xff] %vm854, %v3216
        %3249 = vst.msk [vmem:[#allocation3 + $0x13a] sm:$0xff] %vm854, %v3217
        %3250 = vst.msk [vmem:[#allocation3 + $0x142] sm:$0xff] %vm854, %v3218
        %3251 = vst.msk [vmem:[#allocation3 + $0x152] sm:$0xff] %vm854, %v3219
        %3252 = vst.msk [vmem:[#allocation3 + $0x15a] sm:$0xff] %vm854, %v3220
        %3253 = vst.msk [vmem:[#allocation3 + $0x16a] sm:$0xff] %vm854, %v3221
        %3254 = vst.msk [vmem:[#allocation3 + $0x172] sm:$0xff] %vm854, %v3222
        %v3255 = vld [vmem:[#allocation3] sm:$0xff]
        %v3256 = vld [vmem:[#allocation3 + $0x8] sm:$0xff]
        %v3257 = vld [vmem:[#allocation3 + $0x18] sm:$0xff]
        %v3258 = vld [vmem:[#allocation3 + $0x20] sm:$0xff]
        %v3259 = vld [vmem:[#allocation3 + $0x30] sm:$0xff]
        %v3260 = vld [vmem:[#allocation3 + $0x38] sm:$0xff]
        %v3261 = vld [vmem:[#allocation3 + $0x48] sm:$0xff]
        %v3262 = vld [vmem:[#allocation3 + $0x50] sm:$0xff]
        %v3263 = vld [vmem:[#allocation3 + $0x60] sm:$0xff]
        %v3264 = vld [vmem:[#allocation3 + $0x68] sm:$0xff]
        %v3265 = vld [vmem:[#allocation3 + $0x78] sm:$0xff]
        %v3266 = vld [vmem:[#allocation3 + $0x80] sm:$0xff]
        %v3267 = vld [vmem:[#allocation3 + $0x90] sm:$0xff]
        %v3268 = vld [vmem:[#allocation3 + $0x98] sm:$0xff]
        %v3269 = vld [vmem:[#allocation3 + $0xa8] sm:$0xff]
        %v3270 = vld [vmem:[#allocation3 + $0xb0] sm:$0xff]
        %v3271 = vld [vmem:[#allocation3 + $0xc0] sm:$0xff]
        %v3272 = vld [vmem:[#allocation3 + $0xc8] sm:$0xff]
        %v3273 = vld [vmem:[#allocation3 + $0xd8] sm:$0xff]
        %v3274 = vld [vmem:[#allocation3 + $0xe0] sm:$0xff]
        %v3275 = vld [vmem:[#allocation3 + $0xf0] sm:$0xff]
        %v3276 = vld [vmem:[#allocation3 + $0xf8] sm:$0xff]
        %v3277 = vld [vmem:[#allocation3 + $0x108] sm:$0xff]
        %v3278 = vld [vmem:[#allocation3 + $0x110] sm:$0xff]
        %v3279 = vld [vmem:[#allocation3 + $0x120] sm:$0xff]
        %v3280 = vld [vmem:[#allocation3 + $0x128] sm:$0xff]
        %v3281 = vld [vmem:[#allocation3 + $0x138] sm:$0xff]
        %v3282 = vld [vmem:[#allocation3 + $0x140] sm:$0xff]
        %v3283 = vld [vmem:[#allocation3 + $0x150] sm:$0xff]
        %v3284 = vld [vmem:[#allocation3 + $0x158] sm:$0xff]
        %v3285 = vld [vmem:[#allocation3 + $0x168] sm:$0xff]
        %v3286 = vld [vmem:[#allocation3 + $0x170] sm:$0xff]
        %v3287 = vld [vmem:[#allocation3 + $0x1] sm:$0xff]
        %v3288 = vld [vmem:[#allocation3 + $0x9] sm:$0xff]
        %v3289 = vld [vmem:[#allocation3 + $0x19] sm:$0xff]
        %v3290 = vld [vmem:[#allocation3 + $0x21] sm:$0xff]
        %v3291 = vld [vmem:[#allocation3 + $0x31] sm:$0xff]
        %v3292 = vld [vmem:[#allocation3 + $0x39] sm:$0xff]
        %v3293 = vld [vmem:[#allocation3 + $0x49] sm:$0xff]
        %v3294 = vld [vmem:[#allocation3 + $0x51] sm:$0xff]
        %v3295 = vld [vmem:[#allocation3 + $0x61] sm:$0xff]
        %v3296 = vld [vmem:[#allocation3 + $0x69] sm:$0xff]
        %v3297 = vld [vmem:[#allocation3 + $0x79] sm:$0xff]
        %v3298 = vld [vmem:[#allocation3 + $0x81] sm:$0xff]
        %v3299 = vld [vmem:[#allocation3 + $0x91] sm:$0xff]
        %v3300 = vld [vmem:[#allocation3 + $0x99] sm:$0xff]
        %v3301 = vld [vmem:[#allocation3 + $0xa9] sm:$0xff]
        %v3302 = vld [vmem:[#allocation3 + $0xb1] sm:$0xff]
        %v3303 = vld [vmem:[#allocation3 + $0xc1] sm:$0xff]
        %v3304 = vld [vmem:[#allocation3 + $0xc9] sm:$0xff]
        %v3305 = vld [vmem:[#allocation3 + $0xd9] sm:$0xff]
        %v3306 = vld [vmem:[#allocation3 + $0xe1] sm:$0xff]
        %v3307 = vld [vmem:[#allocation3 + $0xf1] sm:$0xff]
        %v3308 = vld [vmem:[#allocation3 + $0xf9] sm:$0xff]
        %v3309 = vld [vmem:[#allocation3 + $0x109] sm:$0xff]
        %v3310 = vld [vmem:[#allocation3 + $0x111] sm:$0xff]
        %v3311 = vld [vmem:[#allocation3 + $0x121] sm:$0xff]
        %v3312 = vld [vmem:[#allocation3 + $0x129] sm:$0xff]
        %v3313 = vld [vmem:[#allocation3 + $0x139] sm:$0xff]
        %v3314 = vld [vmem:[#allocation3 + $0x141] sm:$0xff]
        %v3315 = vld [vmem:[#allocation3 + $0x151] sm:$0xff]
        %v3316 = vld [vmem:[#allocation3 + $0x159] sm:$0xff]
        %v3317 = vld [vmem:[#allocation3 + $0x169] sm:$0xff]
        %v3318 = vld [vmem:[#allocation3 + $0x171] sm:$0xff]
        %v3319 = vmax.f32 %v3255, %v3287
        %v3320 = vmax.f32 %v3256, %v3288
        %v3321 = vmax.f32 %v3257, %v3289
        %v3322 = vmax.f32 %v3258, %v3290
        %v3323 = vmax.f32 %v3259, %v3291
        %v3324 = vmax.f32 %v3260, %v3292
        %v3325 = vmax.f32 %v3261, %v3293
        %v3326 = vmax.f32 %v3262, %v3294
        %v3327 = vmax.f32 %v3263, %v3295
        %v3328 = vmax.f32 %v3264, %v3296
        %v3329 = vmax.f32 %v3265, %v3297
        %v3330 = vmax.f32 %v3266, %v3298
        %v3331 = vmax.f32 %v3267, %v3299
        %v3332 = vmax.f32 %v3268, %v3300
        %v3333 = vmax.f32 %v3269, %v3301
        %v3334 = vmax.f32 %v3270, %v3302
        %v3335 = vmax.f32 %v3271, %v3303
        %v3336 = vmax.f32 %v3272, %v3304
        %v3337 = vmax.f32 %v3273, %v3305
        %v3338 = vmax.f32 %v3274, %v3306
        %v3339 = vmax.f32 %v3275, %v3307
        %v3340 = vmax.f32 %v3276, %v3308
        %v3341 = vmax.f32 %v3277, %v3309
        %v3342 = vmax.f32 %v3278, %v3310
        %v3343 = vmax.f32 %v3279, %v3311
        %v3344 = vmax.f32 %v3280, %v3312
        %v3345 = vmax.f32 %v3281, %v3313
        %v3346 = vmax.f32 %v3282, %v3314
        %v3347 = vmax.f32 %v3283, %v3315
        %v3348 = vmax.f32 %v3284, %v3316
        %v3349 = vmax.f32 %v3285, %v3317
        %v3350 = vmax.f32 %v3286, %v3318
        %v3351 = vld [vmem:[#allocation3 + $0x2] sm:$0xff]
        %v3352 = vld [vmem:[#allocation3 + $0xa] sm:$0xff]
        %v3353 = vld [vmem:[#allocation3 + $0x1a] sm:$0xff]
        %v3354 = vld [vmem:[#allocation3 + $0x22] sm:$0xff]
        %v3355 = vld [vmem:[#allocation3 + $0x32] sm:$0xff]
        %v3356 = vld [vmem:[#allocation3 + $0x3a] sm:$0xff]
        %v3357 = vld [vmem:[#allocation3 + $0x4a] sm:$0xff]
        %v3358 = vld [vmem:[#allocation3 + $0x52] sm:$0xff]
        %v3359 = vld [vmem:[#allocation3 + $0x62] sm:$0xff]
        %v3360 = vld [vmem:[#allocation3 + $0x6a] sm:$0xff]
        %v3361 = vld [vmem:[#allocation3 + $0x7a] sm:$0xff]
        %v3362 = vld [vmem:[#allocation3 + $0x82] sm:$0xff]
        %v3363 = vld [vmem:[#allocation3 + $0x92] sm:$0xff]
        %v3364 = vld [vmem:[#allocation3 + $0x9a] sm:$0xff]
        %v3365 = vld [vmem:[#allocation3 + $0xaa] sm:$0xff]
        %v3366 = vld [vmem:[#allocation3 + $0xb2] sm:$0xff]
        %v3367 = vld [vmem:[#allocation3 + $0xc2] sm:$0xff]
        %v3368 = vld [vmem:[#allocation3 + $0xca] sm:$0xff]
        %v3369 = vld [vmem:[#allocation3 + $0xda] sm:$0xff]
        %v3370 = vld [vmem:[#allocation3 + $0xe2] sm:$0xff]
        %v3371 = vld [vmem:[#allocation3 + $0xf2] sm:$0xff]
        %v3372 = vld [vmem:[#allocation3 + $0xfa] sm:$0xff]
        %v3373 = vld [vmem:[#allocation3 + $0x10a] sm:$0xff]
        %v3374 = vld [vmem:[#allocation3 + $0x112] sm:$0xff]
        %v3375 = vld [vmem:[#allocation3 + $0x122] sm:$0xff]
        %v3376 = vld [vmem:[#allocation3 + $0x12a] sm:$0xff]
        %v3377 = vld [vmem:[#allocation3 + $0x13a] sm:$0xff]
        %v3378 = vld [vmem:[#allocation3 + $0x142] sm:$0xff]
        %v3379 = vld [vmem:[#allocation3 + $0x152] sm:$0xff]
        %v3380 = vld [vmem:[#allocation3 + $0x15a] sm:$0xff]
        %v3381 = vld [vmem:[#allocation3 + $0x16a] sm:$0xff]
        %v3382 = vld [vmem:[#allocation3 + $0x172] sm:$0xff]
        %v3383 = vld [vmem:[#allocation3 + $0x3] sm:$0xff]
        %v3384 = vld [vmem:[#allocation3 + $0xb] sm:$0xff]
        %v3385 = vld [vmem:[#allocation3 + $0x1b] sm:$0xff]
        %v3386 = vld [vmem:[#allocation3 + $0x23] sm:$0xff]
        %v3387 = vld [vmem:[#allocation3 + $0x33] sm:$0xff]
        %v3388 = vld [vmem:[#allocation3 + $0x3b] sm:$0xff]
        %v3389 = vld [vmem:[#allocation3 + $0x4b] sm:$0xff]
        %v3390 = vld [vmem:[#allocation3 + $0x53] sm:$0xff]
        %v3391 = vld [vmem:[#allocation3 + $0x63] sm:$0xff]
        %v3392 = vld [vmem:[#allocation3 + $0x6b] sm:$0xff]
        %v3393 = vld [vmem:[#allocation3 + $0x7b] sm:$0xff]
        %v3394 = vld [vmem:[#allocation3 + $0x83] sm:$0xff]
        %v3395 = vld [vmem:[#allocation3 + $0x93] sm:$0xff]
        %v3396 = vld [vmem:[#allocation3 + $0x9b] sm:$0xff]
        %v3397 = vld [vmem:[#allocation3 + $0xab] sm:$0xff]
        %v3398 = vld [vmem:[#allocation3 + $0xb3] sm:$0xff]
        %v3399 = vld [vmem:[#allocation3 + $0xc3] sm:$0xff]
        %v3400 = vld [vmem:[#allocation3 + $0xcb] sm:$0xff]
        %v3401 = vld [vmem:[#allocation3 + $0xdb] sm:$0xff]
        %v3402 = vld [vmem:[#allocation3 + $0xe3] sm:$0xff]
        %v3403 = vld [vmem:[#allocation3 + $0xf3] sm:$0xff]
        %v3404 = vld [vmem:[#allocation3 + $0xfb] sm:$0xff]
        %v3405 = vld [vmem:[#allocation3 + $0x10b] sm:$0xff]
        %v3406 = vld [vmem:[#allocation3 + $0x113] sm:$0xff]
        %v3407 = vld [vmem:[#allocation3 + $0x123] sm:$0xff]
        %v3408 = vld [vmem:[#allocation3 + $0x12b] sm:$0xff]
        %v3409 = vld [vmem:[#allocation3 + $0x13b] sm:$0xff]
        %v3410 = vld [vmem:[#allocation3 + $0x143] sm:$0xff]
        %v3411 = vld [vmem:[#allocation3 + $0x153] sm:$0xff]
        %v3412 = vld [vmem:[#allocation3 + $0x15b] sm:$0xff]
        %v3413 = vld [vmem:[#allocation3 + $0x16b] sm:$0xff]
        %v3414 = vld [vmem:[#allocation3 + $0x173] sm:$0xff]
        %v3415 = vmax.f32 %v3351, %v3383
        %v3416 = vmax.f32 %v3352, %v3384
        %v3417 = vmax.f32 %v3353, %v3385
        %v3418 = vmax.f32 %v3354, %v3386
        %v3419 = vmax.f32 %v3355, %v3387
        %v3420 = vmax.f32 %v3356, %v3388
        %v3421 = vmax.f32 %v3357, %v3389
        %v3422 = vmax.f32 %v3358, %v3390
        %v3423 = vmax.f32 %v3359, %v3391
        %v3424 = vmax.f32 %v3360, %v3392
        %v3425 = vmax.f32 %v3361, %v3393
        %v3426 = vmax.f32 %v3362, %v3394
        %v3427 = vmax.f32 %v3363, %v3395
        %v3428 = vmax.f32 %v3364, %v3396
        %v3429 = vmax.f32 %v3365, %v3397
        %v3430 = vmax.f32 %v3366, %v3398
        %v3431 = vmax.f32 %v3367, %v3399
        %v3432 = vmax.f32 %v3368, %v3400
        %v3433 = vmax.f32 %v3369, %v3401
        %v3434 = vmax.f32 %v3370, %v3402
        %v3435 = vmax.f32 %v3371, %v3403
        %v3436 = vmax.f32 %v3372, %v3404
        %v3437 = vmax.f32 %v3373, %v3405
        %v3438 = vmax.f32 %v3374, %v3406
        %v3439 = vmax.f32 %v3375, %v3407
        %v3440 = vmax.f32 %v3376, %v3408
        %v3441 = vmax.f32 %v3377, %v3409
        %v3442 = vmax.f32 %v3378, %v3410
        %v3443 = vmax.f32 %v3379, %v3411
        %v3444 = vmax.f32 %v3380, %v3412
        %v3445 = vmax.f32 %v3381, %v3413
        %v3446 = vmax.f32 %v3382, %v3414
        %v3447 = vmax.f32 %v3319, %v3415
        %v3448 = vmax.f32 %v3320, %v3416
        %v3449 = vmax.f32 %v3321, %v3417
        %v3450 = vmax.f32 %v3322, %v3418
        %v3451 = vmax.f32 %v3323, %v3419
        %v3452 = vmax.f32 %v3324, %v3420
        %v3453 = vmax.f32 %v3325, %v3421
        %v3454 = vmax.f32 %v3326, %v3422
        %v3455 = vmax.f32 %v3327, %v3423
        %v3456 = vmax.f32 %v3328, %v3424
        %v3457 = vmax.f32 %v3329, %v3425
        %v3458 = vmax.f32 %v3330, %v3426
        %v3459 = vmax.f32 %v3331, %v3427
        %v3460 = vmax.f32 %v3332, %v3428
        %v3461 = vmax.f32 %v3333, %v3429
        %v3462 = vmax.f32 %v3334, %v3430
        %v3463 = vmax.f32 %v3335, %v3431
        %v3464 = vmax.f32 %v3336, %v3432
        %v3465 = vmax.f32 %v3337, %v3433
        %v3466 = vmax.f32 %v3338, %v3434
        %v3467 = vmax.f32 %v3339, %v3435
        %v3468 = vmax.f32 %v3340, %v3436
        %v3469 = vmax.f32 %v3341, %v3437
        %v3470 = vmax.f32 %v3342, %v3438
        %v3471 = vmax.f32 %v3343, %v3439
        %v3472 = vmax.f32 %v3344, %v3440
        %v3473 = vmax.f32 %v3345, %v3441
        %v3474 = vmax.f32 %v3346, %v3442
        %v3475 = vmax.f32 %v3347, %v3443
        %v3476 = vmax.f32 %v3348, %v3444
        %v3477 = vmax.f32 %v3349, %v3445
        %v3478 = vmax.f32 %v3350, %v3446
        %v3479 = vld [vmem:[#allocation3 + $0x4] sm:$0xff]
        %v3480 = vld [vmem:[#allocation3 + $0xc] sm:$0xff]
        %v3481 = vld [vmem:[#allocation3 + $0x1c] sm:$0xff]
        %v3482 = vld [vmem:[#allocation3 + $0x24] sm:$0xff]
        %v3483 = vld [vmem:[#allocation3 + $0x34] sm:$0xff]
        %v3484 = vld [vmem:[#allocation3 + $0x3c] sm:$0xff]
        %v3485 = vld [vmem:[#allocation3 + $0x4c] sm:$0xff]
        %v3486 = vld [vmem:[#allocation3 + $0x54] sm:$0xff]
        %v3487 = vld [vmem:[#allocation3 + $0x64] sm:$0xff]
        %v3488 = vld [vmem:[#allocation3 + $0x6c] sm:$0xff]
        %v3489 = vld [vmem:[#allocation3 + $0x7c] sm:$0xff]
        %v3490 = vld [vmem:[#allocation3 + $0x84] sm:$0xff]
        %v3491 = vld [vmem:[#allocation3 + $0x94] sm:$0xff]
        %v3492 = vld [vmem:[#allocation3 + $0x9c] sm:$0xff]
        %v3493 = vld [vmem:[#allocation3 + $0xac] sm:$0xff]
        %v3494 = vld [vmem:[#allocation3 + $0xb4] sm:$0xff]
        %v3495 = vld [vmem:[#allocation3 + $0xc4] sm:$0xff]
        %v3496 = vld [vmem:[#allocation3 + $0xcc] sm:$0xff]
        %v3497 = vld [vmem:[#allocation3 + $0xdc] sm:$0xff]
        %v3498 = vld [vmem:[#allocation3 + $0xe4] sm:$0xff]
        %v3499 = vld [vmem:[#allocation3 + $0xf4] sm:$0xff]
        %v3500 = vld [vmem:[#allocation3 + $0xfc] sm:$0xff]
        %v3501 = vld [vmem:[#allocation3 + $0x10c] sm:$0xff]
        %v3502 = vld [vmem:[#allocation3 + $0x114] sm:$0xff]
        %v3503 = vld [vmem:[#allocation3 + $0x124] sm:$0xff]
        %v3504 = vld [vmem:[#allocation3 + $0x12c] sm:$0xff]
        %v3505 = vld [vmem:[#allocation3 + $0x13c] sm:$0xff]
        %v3506 = vld [vmem:[#allocation3 + $0x144] sm:$0xff]
        %v3507 = vld [vmem:[#allocation3 + $0x154] sm:$0xff]
        %v3508 = vld [vmem:[#allocation3 + $0x15c] sm:$0xff]
        %v3509 = vld [vmem:[#allocation3 + $0x16c] sm:$0xff]
        %v3510 = vld [vmem:[#allocation3 + $0x174] sm:$0xff]
        %v3511 = vmax.f32 %v3447, %v3479
        %v3512 = vmax.f32 %v3448, %v3480
        %v3513 = vmax.f32 %v3449, %v3481
        %v3514 = vmax.f32 %v3450, %v3482
        %v3515 = vmax.f32 %v3451, %v3483
        %v3516 = vmax.f32 %v3452, %v3484
        %v3517 = vmax.f32 %v3453, %v3485
        %v3518 = vmax.f32 %v3454, %v3486
        %v3519 = vmax.f32 %v3455, %v3487
        %v3520 = vmax.f32 %v3456, %v3488
        %v3521 = vmax.f32 %v3457, %v3489
        %v3522 = vmax.f32 %v3458, %v3490
        %v3523 = vmax.f32 %v3459, %v3491
        %v3524 = vmax.f32 %v3460, %v3492
        %v3525 = vmax.f32 %v3461, %v3493
        %v3526 = vmax.f32 %v3462, %v3494
        %v3527 = vmax.f32 %v3463, %v3495
        %v3528 = vmax.f32 %v3464, %v3496
        %v3529 = vmax.f32 %v3465, %v3497
        %v3530 = vmax.f32 %v3466, %v3498
        %v3531 = vmax.f32 %v3467, %v3499
        %v3532 = vmax.f32 %v3468, %v3500
        %v3533 = vmax.f32 %v3469, %v3501
        %v3534 = vmax.f32 %v3470, %v3502
        %v3535 = vmax.f32 %v3471, %v3503
        %v3536 = vmax.f32 %v3472, %v3504
        %v3537 = vmax.f32 %v3473, %v3505
        %v3538 = vmax.f32 %v3474, %v3506
        %v3539 = vmax.f32 %v3475, %v3507
        %v3540 = vmax.f32 %v3476, %v3508
        %v3541 = vmax.f32 %v3477, %v3509
        %v3542 = vmax.f32 %v3478, %v3510
        %v3543 = vpack.c.bf16 %v3512, %v3511
        %v3544 = vpack.c.bf16 %v3514, %v3513
        %v3545 = vpack.c.bf16 %v3516, %v3515
        %v3546 = vpack.c.bf16 %v3518, %v3517
        %v3547 = vpack.c.bf16 %v3520, %v3519
        %v3548 = vpack.c.bf16 %v3522, %v3521
        %v3549 = vpack.c.bf16 %v3524, %v3523
        %v3550 = vpack.c.bf16 %v3526, %v3525
        %v3551 = vpack.c.bf16 %v3528, %v3527
        %v3552 = vpack.c.bf16 %v3530, %v3529
        %v3553 = vpack.c.bf16 %v3532, %v3531
        %v3554 = vpack.c.bf16 %v3534, %v3533
        %v3555 = vpack.c.bf16 %v3536, %v3535
        %v3556 = vpack.c.bf16 %v3538, %v3537
        %v3557 = vpack.c.bf16 %v3540, %v3539
        %v3558 = vpack.c.bf16 %v3542, %v3541
        %s3559 = scalar_lea.vmem [#allocation10], 3
        %v3560 = vld [vmem:[%s3559] sm:$0x1]
        %v3562 = vsel %vm854, %v3543, 0
        %v3565 = vsel %vm854, %v3544, 0
        %v3568 = vsel %vm854, %v3545, 0
        %v3571 = vsel %vm854, %v3546, 0
        %v3574 = vsel %vm854, %v3547, 0
        %v3577 = vsel %vm854, %v3548, 0
        %v3580 = vsel %vm854, %v3549, 0
        %v3583 = vsel %vm854, %v3550, 0
        %v3586 = vsel %vm854, %v3551, 0
        %v3589 = vsel %vm854, %v3552, 0
        %v3592 = vsel %vm854, %v3553, 0
        %v3595 = vsel %vm854, %v3554, 0
        %v3598 = vsel %vm854, %v3555, 0
        %v3601 = vsel %vm854, %v3556, 0
        %v3604 = vsel %vm854, %v3557, 0
        %v3607 = vsel %vm854, %v3558, 0
        %v3610 = vsel %vm1624, %v3560, 0
        %3612 = vmatprep.subr.bf16.mxu0 0
        %3613 = vmatpush1.bf16.msra.mxu0 %v3610
        %3614 = vmatprep.subr.bf16.mxu0 0
        %3615 = vmatpush1.bf16.msra.mxu0 0
        %3616 = vmatprep.subr.bf16.mxu0 0
        %3617 = vmatpush1.bf16.msra.mxu0 0
        %3618 = vmatprep.subr.bf16.mxu0 0
        %3619 = vmatpush1.bf16.msra.mxu0 0
        %3620 = vmatprep.subr.bf16.mxu0 0
        %3621 = vmatpush1.bf16.msra.mxu0 0
        %3622 = vmatprep.subr.bf16.mxu0 0
        %3623 = vmatpush1.bf16.msra.mxu0 0
        %3624 = vmatprep.subr.bf16.mxu0 0
        %3625 = vmatpush1.bf16.msra.mxu0 0
        %3626 = vmatprep.subr.bf16.mxu0 0
        %3627 = vmatpush1.bf16.msra.mxu0 0
        %3628 = vmatprep.subr.bf16.mxu0 0
        %3629 = vmatpush1.bf16.msra.mxu0 0
        %3630 = vmatprep.subr.bf16.mxu0 0
        %3631 = vmatpush1.bf16.msra.mxu0 0
        %3632 = vmatprep.subr.bf16.mxu0 0
        %3633 = vmatpush1.bf16.msra.mxu0 0
        %3634 = vmatprep.subr.bf16.mxu0 0
        %3635 = vmatpush1.bf16.msra.mxu0 0
        %3636 = vmatprep.subr.bf16.mxu0 0
        %3637 = vmatpush1.bf16.msra.mxu0 0
        %3638 = vmatprep.subr.bf16.mxu0 0
        %3639 = vmatpush1.bf16.msra.mxu0 0
        %3640 = vmatprep.subr.bf16.mxu0 0
        %3641 = vmatpush1.bf16.msra.mxu0 0
        %3642 = vmatprep.subr.bf16.mxu0 0
        %3643 = vmatpush1.bf16.msra.mxu0 0
        %3644 = vmatprep.mubr.bf16.mxu0 0
        %3645 = vmatmul.mubr.bf16.gmra.mrb[0].mxu0 %v3562
        %v3646 = vpop.f32.mrb[0].mxu0
        %v3647 = vadd.f32 0.0, %v3646
        %v3648 = vpop.f32.mrb[0].mxu0
        %v3649 = vpop.f32.mrb[0].mxu0
        %v3650 = vadd.f32 0.0, %v3649
        %v3651 = vpop.f32.mrb[0].mxu0
        %3652 = vmatprep.mubr.bf16.mxu0 0
        %3653 = vmatmul.mubr.bf16.gmra.mrb[0].mxu0 %v3565
        %v3654 = vpop.f32.mrb[0].mxu0
        %v3655 = vadd.f32 0.0, %v3654
        %v3656 = vpop.f32.mrb[0].mxu0
        %v3657 = vpop.f32.mrb[0].mxu0
        %v3658 = vadd.f32 0.0, %v3657
        %v3659 = vpop.f32.mrb[0].mxu0
        %3660 = vmatprep.mubr.bf16.mxu0 0
        %3661 = vmatmul.mubr.bf16.gmra.mrb[0].mxu0 %v3568
        %v3662 = vpop.f32.mrb[0].mxu0
        %v3663 = vadd.f32 0.0, %v3662
        %v3664 = vpop.f32.mrb[0].mxu0
        %v3665 = vpop.f32.mrb[0].mxu0
        %v3666 = vadd.f32 0.0, %v3665
        %v3667 = vpop.f32.mrb[0].mxu0
        %3668 = vmatprep.mubr.bf16.mxu0 0
        %3669 = vmatmul.mubr.bf16.gmra.mrb[0].mxu0 %v3571
        %v3670 = vpop.f32.mrb[0].mxu0
        %v3671 = vadd.f32 0.0, %v3670
        %v3672 = vpop.f32.mrb[0].mxu0
        %v3673 = vpop.f32.mrb[0].mxu0
        %v3674 = vadd.f32 0.0, %v3673
        %v3675 = vpop.f32.mrb[0].mxu0
        %3676 = vmatprep.mubr.bf16.mxu0 0
        %3677 = vmatmul.mubr.bf16.gmra.mrb[0].mxu0 %v3574
        %v3678 = vpop.f32.mrb[0].mxu0
        %v3679 = vadd.f32 0.0, %v3678
        %v3680 = vpop.f32.mrb[0].mxu0
        %v3681 = vpop.f32.mrb[0].mxu0
        %v3682 = vadd.f32 0.0, %v3681
        %v3683 = vpop.f32.mrb[0].mxu0
        %3684 = vmatprep.mubr.bf16.mxu0 0
        %3685 = vmatmul.mubr.bf16.gmra.mrb[0].mxu0 %v3577
        %v3686 = vpop.f32.mrb[0].mxu0
        %v3687 = vadd.f32 0.0, %v3686
        %v3688 = vpop.f32.mrb[0].mxu0
        %v3689 = vpop.f32.mrb[0].mxu0
        %v3690 = vadd.f32 0.0, %v3689
        %v3691 = vpop.f32.mrb[0].mxu0
        %3692 = vmatprep.mubr.bf16.mxu0 0
        %3693 = vmatmul.mubr.bf16.gmra.mrb[0].mxu0 %v3580
        %v3694 = vpop.f32.mrb[0].mxu0
        %v3695 = vadd.f32 0.0, %v3694
        %v3696 = vpop.f32.mrb[0].mxu0
        %v3697 = vpop.f32.mrb[0].mxu0
        %v3698 = vadd.f32 0.0, %v3697
        %v3699 = vpop.f32.mrb[0].mxu0
        %3700 = vmatprep.mubr.bf16.mxu0 0
        %3701 = vmatmul.mubr.bf16.gmra.mrb[0].mxu0 %v3583
        %v3702 = vpop.f32.mrb[0].mxu0
        %v3703 = vadd.f32 0.0, %v3702
        %v3704 = vpop.f32.mrb[0].mxu0
        %v3705 = vpop.f32.mrb[0].mxu0
        %v3706 = vadd.f32 0.0, %v3705
        %v3707 = vpop.f32.mrb[0].mxu0
        %3708 = vmatprep.mubr.bf16.mxu0 0
        %3709 = vmatmul.mubr.bf16.gmra.mrb[0].mxu0 %v3586
        %v3710 = vpop.f32.mrb[0].mxu0
        %v3711 = vadd.f32 0.0, %v3710
        %v3712 = vpop.f32.mrb[0].mxu0
        %v3713 = vpop.f32.mrb[0].mxu0
        %v3714 = vadd.f32 0.0, %v3713
        %v3715 = vpop.f32.mrb[0].mxu0
        %3716 = vmatprep.mubr.bf16.mxu0 0
        %3717 = vmatmul.mubr.bf16.gmra.mrb[0].mxu0 %v3589
        %v3718 = vpop.f32.mrb[0].mxu0
        %v3719 = vadd.f32 0.0, %v3718
        %v3720 = vpop.f32.mrb[0].mxu0
        %v3721 = vpop.f32.mrb[0].mxu0
        %v3722 = vadd.f32 0.0, %v3721
        %v3723 = vpop.f32.mrb[0].mxu0
        %3724 = vmatprep.mubr.bf16.mxu0 0
        %3725 = vmatmul.mubr.bf16.gmra.mrb[0].mxu0 %v3592
        %v3726 = vpop.f32.mrb[0].mxu0
        %v3727 = vadd.f32 0.0, %v3726
        %v3728 = vpop.f32.mrb[0].mxu0
        %v3729 = vpop.f32.mrb[0].mxu0
        %v3730 = vadd.f32 0.0, %v3729
        %v3731 = vpop.f32.mrb[0].mxu0
        %3732 = vmatprep.mubr.bf16.mxu0 0
        %3733 = vmatmul.mubr.bf16.gmra.mrb[0].mxu0 %v3595
        %v3734 = vpop.f32.mrb[0].mxu0
        %v3735 = vadd.f32 0.0, %v3734
        %v3736 = vpop.f32.mrb[0].mxu0
        %v3737 = vpop.f32.mrb[0].mxu0
        %v3738 = vadd.f32 0.0, %v3737
        %v3739 = vpop.f32.mrb[0].mxu0
        %3740 = vmatprep.mubr.bf16.mxu0 0
        %3741 = vmatmul.mubr.bf16.gmra.mrb[0].mxu0 %v3598
        %v3742 = vpop.f32.mrb[0].mxu0
        %v3743 = vadd.f32 0.0, %v3742
        %v3744 = vpop.f32.mrb[0].mxu0
        %v3745 = vpop.f32.mrb[0].mxu0
        %v3746 = vadd.f32 0.0, %v3745
        %v3747 = vpop.f32.mrb[0].mxu0
        %3748 = vmatprep.mubr.bf16.mxu0 0
        %3749 = vmatmul.mubr.bf16.gmra.mrb[0].mxu0 %v3601
        %v3750 = vpop.f32.mrb[0].mxu0
        %v3751 = vadd.f32 0.0, %v3750
        %v3752 = vpop.f32.mrb[0].mxu0
        %v3753 = vpop.f32.mrb[0].mxu0
        %v3754 = vadd.f32 0.0, %v3753
        %v3755 = vpop.f32.mrb[0].mxu0
        %3756 = vmatprep.mubr.bf16.mxu0 0
        %3757 = vmatmul.mubr.bf16.gmra.mrb[0].mxu0 %v3604
        %v3758 = vpop.f32.mrb[0].mxu0
        %v3759 = vadd.f32 0.0, %v3758
        %v3760 = vpop.f32.mrb[0].mxu0
        %v3761 = vpop.f32.mrb[0].mxu0
        %v3762 = vadd.f32 0.0, %v3761
        %v3763 = vpop.f32.mrb[0].mxu0
        %3764 = vmatprep.mubr.bf16.mxu0 0
        %3765 = vmatmul.mubr.bf16.gmra.mrb[0].mxu0 %v3607
        %v3766 = vpop.f32.mrb[0].mxu0
        %v3767 = vadd.f32 0.0, %v3766
        %v3768 = vpop.f32.mrb[0].mxu0
        %v3769 = vpop.f32.mrb[0].mxu0
        %v3770 = vadd.f32 0.0, %v3769
        %v3771 = vpop.f32.mrb[0].mxu0
        %3772 = vdwg.mxu0
        %v3773 = vadd.f32 %v2871, %v3647
        %v3774 = vadd.f32 %v2872, %v3650
        %v3775 = vadd.f32 %v2873, %v3655
        %v3776 = vadd.f32 %v2874, %v3658
        %v3777 = vadd.f32 %v2875, %v3663
        %v3778 = vadd.f32 %v2876, %v3666
        %v3779 = vadd.f32 %v2877, %v3671
        %v3780 = vadd.f32 %v2878, %v3674
        %v3781 = vadd.f32 %v2879, %v3679
        %v3782 = vadd.f32 %v2880, %v3682
        %v3783 = vadd.f32 %v2881, %v3687
        %v3784 = vadd.f32 %v2882, %v3690
        %v3785 = vadd.f32 %v2883, %v3695
        %v3786 = vadd.f32 %v2884, %v3698
        %v3787 = vadd.f32 %v2885, %v3703
        %v3788 = vadd.f32 %v2886, %v3706
        %v3789 = vadd.f32 %v2887, %v3711
        %v3790 = vadd.f32 %v2888, %v3714
        %v3791 = vadd.f32 %v2889, %v3719
        %v3792 = vadd.f32 %v2890, %v3722
        %v3793 = vadd.f32 %v2891, %v3727
        %v3794 = vadd.f32 %v2892, %v3730
        %v3795 = vadd.f32 %v2893, %v3735
        %v3796 = vadd.f32 %v2894, %v3738
        %v3797 = vadd.f32 %v2895, %v3743
        %v3798 = vadd.f32 %v2896, %v3746
        %v3799 = vadd.f32 %v2897, %v3751
        %v3800 = vadd.f32 %v2898, %v3754
        %v3801 = vadd.f32 %v2899, %v3759
        %v3802 = vadd.f32 %v2900, %v3762
        %v3803 = vadd.f32 %v2901, %v3767
        %v3804 = vadd.f32 %v2902, %v3770
        %v3805 = vld [vmem:[#allocation12] sm:$0x1]
        %v3807 = vlaneseq
        %v3808 = vshrl.u32 %v3807, 7
        %v3809 = vsub.s32 0, %v3808
        %v3810 = vrot.slane %v3805, %v3809
        %v3812 = vadd.f32 %v3773, %v3810
        %v3813 = vadd.f32 %v3774, %v3810
        %v3814 = vadd.f32 %v3775, %v3810
        %v3815 = vadd.f32 %v3776, %v3810
        %v3816 = vadd.f32 %v3777, %v3810
        %v3817 = vadd.f32 %v3778, %v3810
        %v3818 = vadd.f32 %v3779, %v3810
        %v3819 = vadd.f32 %v3780, %v3810
        %v3820 = vadd.f32 %v3781, %v3810
        %v3821 = vadd.f32 %v3782, %v3810
        %v3822 = vadd.f32 %v3783, %v3810
        %v3823 = vadd.f32 %v3784, %v3810
        %v3824 = vadd.f32 %v3785, %v3810
        %v3825 = vadd.f32 %v3786, %v3810
        %v3826 = vadd.f32 %v3787, %v3810
        %v3827 = vadd.f32 %v3788, %v3810
        %v3828 = vadd.f32 %v3789, %v3810
        %v3829 = vadd.f32 %v3790, %v3810
        %v3830 = vadd.f32 %v3791, %v3810
        %v3831 = vadd.f32 %v3792, %v3810
        %v3832 = vadd.f32 %v3793, %v3810
        %v3833 = vadd.f32 %v3794, %v3810
        %v3834 = vadd.f32 %v3795, %v3810
        %v3835 = vadd.f32 %v3796, %v3810
        %v3836 = vadd.f32 %v3797, %v3810
        %v3837 = vadd.f32 %v3798, %v3810
        %v3838 = vadd.f32 %v3799, %v3810
        %v3839 = vadd.f32 %v3800, %v3810
        %v3840 = vadd.f32 %v3801, %v3810
        %v3841 = vadd.f32 %v3802, %v3810
        %v3842 = vadd.f32 %v3803, %v3810
        %v3843 = vadd.f32 %v3804, %v3810
        %v3844 = vxor.u32 %v3812, 2147483648
        %v3845 = vxor.u32 %v3813, 2147483648
        %v3846 = vxor.u32 %v3814, 2147483648
        %v3847 = vxor.u32 %v3815, 2147483648
        %v3848 = vxor.u32 %v3816, 2147483648
        %v3849 = vxor.u32 %v3817, 2147483648
        %v3850 = vxor.u32 %v3818, 2147483648
        %v3851 = vxor.u32 %v3819, 2147483648
        %v3852 = vxor.u32 %v3820, 2147483648
        %v3853 = vxor.u32 %v3821, 2147483648
        %v3854 = vxor.u32 %v3822, 2147483648
        %v3855 = vxor.u32 %v3823, 2147483648
        %v3856 = vxor.u32 %v3824, 2147483648
        %v3857 = vxor.u32 %v3825, 2147483648
        %v3858 = vxor.u32 %v3826, 2147483648
        %v3859 = vxor.u32 %v3827, 2147483648
        %v3860 = vxor.u32 %v3828, 2147483648
        %v3861 = vxor.u32 %v3829, 2147483648
        %v3862 = vxor.u32 %v3830, 2147483648
        %v3863 = vxor.u32 %v3831, 2147483648
        %v3864 = vxor.u32 %v3832, 2147483648
        %v3865 = vxor.u32 %v3833, 2147483648
        %v3866 = vxor.u32 %v3834, 2147483648
        %v3867 = vxor.u32 %v3835, 2147483648
        %v3868 = vxor.u32 %v3836, 2147483648
        %v3869 = vxor.u32 %v3837, 2147483648
        %v3870 = vxor.u32 %v3838, 2147483648
        %v3871 = vxor.u32 %v3839, 2147483648
        %v3872 = vxor.u32 %v3840, 2147483648
        %v3873 = vxor.u32 %v3841, 2147483648
        %v3874 = vxor.u32 %v3842, 2147483648
        %v3875 = vxor.u32 %v3843, 2147483648
        %v3876 = vmul.f32 %v3844, 1.442695
        %v3877 = vpow.pop %v3876
        %v3878 = vmul.f32 %v3845, 1.442695
        %v3879 = vpow.pop %v3878
        %v3880 = vmul.f32 %v3846, 1.442695
        %v3881 = vpow.pop %v3880
        %v3882 = vmul.f32 %v3847, 1.442695
        %v3883 = vpow.pop %v3882
        %v3884 = vmul.f32 %v3848, 1.442695
        %v3885 = vpow.pop %v3884
        %v3886 = vmul.f32 %v3849, 1.442695
        %v3887 = vpow.pop %v3886
        %v3888 = vmul.f32 %v3850, 1.442695
        %v3889 = vpow.pop %v3888
        %v3890 = vmul.f32 %v3851, 1.442695
        %v3891 = vpow.pop %v3890
        %v3892 = vmul.f32 %v3852, 1.442695
        %v3893 = vpow.pop %v3892
        %v3894 = vmul.f32 %v3853, 1.442695
        %v3895 = vpow.pop %v3894
        %v3896 = vmul.f32 %v3854, 1.442695
        %v3897 = vpow.pop %v3896
        %v3898 = vmul.f32 %v3855, 1.442695
        %v3899 = vpow.pop %v3898
        %v3900 = vmul.f32 %v3856, 1.442695
        %v3901 = vpow.pop %v3900
        %v3902 = vmul.f32 %v3857, 1.442695
        %v3903 = vpow.pop %v3902
        %v3904 = vmul.f32 %v3858, 1.442695
        %v3905 = vpow.pop %v3904
        %v3906 = vmul.f32 %v3859, 1.442695
        %v3907 = vpow.pop %v3906
        %v3908 = vmul.f32 %v3860, 1.442695
        %v3909 = vpow.pop %v3908
        %v3910 = vmul.f32 %v3861, 1.442695
        %v3911 = vpow.pop %v3910
        %v3912 = vmul.f32 %v3862, 1.442695
        %v3913 = vpow.pop %v3912
        %v3914 = vmul.f32 %v3863, 1.442695
        %v3915 = vpow.pop %v3914
        %v3916 = vmul.f32 %v3864, 1.442695
        %v3917 = vpow.pop %v3916
        %v3918 = vmul.f32 %v3865, 1.442695
        %v3919 = vpow.pop %v3918
        %v3920 = vmul.f32 %v3866, 1.442695
        %v3921 = vpow.pop %v3920
        %v3922 = vmul.f32 %v3867, 1.442695
        %v3923 = vpow.pop %v3922
        %v3924 = vmul.f32 %v3868, 1.442695
        %v3925 = vpow.pop %v3924
        %v3926 = vmul.f32 %v3869, 1.442695
        %v3927 = vpow.pop %v3926
        %v3928 = vmul.f32 %v3870, 1.442695
        %v3929 = vpow.pop %v3928
        %v3930 = vmul.f32 %v3871, 1.442695
        %v3931 = vpow.pop %v3930
        %v3932 = vmul.f32 %v3872, 1.442695
        %v3933 = vpow.pop %v3932
        %v3934 = vmul.f32 %v3873, 1.442695
        %v3935 = vpow.pop %v3934
        %v3936 = vmul.f32 %v3874, 1.442695
        %v3937 = vpow.pop %v3936
        %v3938 = vmul.f32 %v3875, 1.442695
        %v3939 = vpow.pop %v3938
        %v3940 = vadd.f32 %v3877, 1.0
        %v3941 = vadd.f32 %v3879, 1.0
        %v3942 = vadd.f32 %v3881, 1.0
        %v3943 = vadd.f32 %v3883, 1.0
        %v3944 = vadd.f32 %v3885, 1.0
        %v3945 = vadd.f32 %v3887, 1.0
        %v3946 = vadd.f32 %v3889, 1.0
        %v3947 = vadd.f32 %v3891, 1.0
        %v3948 = vadd.f32 %v3893, 1.0
        %v3949 = vadd.f32 %v3895, 1.0
        %v3950 = vadd.f32 %v3897, 1.0
        %v3951 = vadd.f32 %v3899, 1.0
        %v3952 = vadd.f32 %v3901, 1.0
        %v3953 = vadd.f32 %v3903, 1.0
        %v3954 = vadd.f32 %v3905, 1.0
        %v3955 = vadd.f32 %v3907, 1.0
        %v3956 = vadd.f32 %v3909, 1.0
        %v3957 = vadd.f32 %v3911, 1.0
        %v3958 = vadd.f32 %v3913, 1.0
        %v3959 = vadd.f32 %v3915, 1.0
        %v3960 = vadd.f32 %v3917, 1.0
        %v3961 = vadd.f32 %v3919, 1.0
        %v3962 = vadd.f32 %v3921, 1.0
        %v3963 = vadd.f32 %v3923, 1.0
        %v3964 = vadd.f32 %v3925, 1.0
        %v3965 = vadd.f32 %v3927, 1.0
        %v3966 = vadd.f32 %v3929, 1.0
        %v3967 = vadd.f32 %v3931, 1.0
        %v3968 = vadd.f32 %v3933, 1.0
        %v3969 = vadd.f32 %v3935, 1.0
        %v3970 = vadd.f32 %v3937, 1.0
        %v3971 = vadd.f32 %v3939, 1.0
        %v3972 = vrcp.pop %v3940
        %v3973 = vmul.f32 1.0, %v3972
        %v3974 = vrcp.pop %v3941
        %v3975 = vmul.f32 1.0, %v3974
        %v3976 = vrcp.pop %v3942
        %v3977 = vmul.f32 1.0, %v3976
        %v3978 = vrcp.pop %v3943
        %v3979 = vmul.f32 1.0, %v3978
        %v3980 = vrcp.pop %v3944
        %v3981 = vmul.f32 1.0, %v3980
        %v3982 = vrcp.pop %v3945
        %v3983 = vmul.f32 1.0, %v3982
        %v3984 = vrcp.pop %v3946
        %v3985 = vmul.f32 1.0, %v3984
        %v3986 = vrcp.pop %v3947
        %v3987 = vmul.f32 1.0, %v3986
        %v3988 = vrcp.pop %v3948
        %v3989 = vmul.f32 1.0, %v3988
        %v3990 = vrcp.pop %v3949
        %v3991 = vmul.f32 1.0, %v3990
        %v3992 = vrcp.pop %v3950
        %v3993 = vmul.f32 1.0, %v3992
        %v3994 = vrcp.pop %v3951
        %v3995 = vmul.f32 1.0, %v3994
        %v3996 = vrcp.pop %v3952
        %v3997 = vmul.f32 1.0, %v3996
        %v3998 = vrcp.pop %v3953
        %v3999 = vmul.f32 1.0, %v3998
        %v4000 = vrcp.pop %v3954
        %v4001 = vmul.f32 1.0, %v4000
        %v4002 = vrcp.pop %v3955
        %v4003 = vmul.f32 1.0, %v4002
        %v4004 = vrcp.pop %v3956
        %v4005 = vmul.f32 1.0, %v4004
        %v4006 = vrcp.pop %v3957
        %v4007 = vmul.f32 1.0, %v4006
        %v4008 = vrcp.pop %v3958
        %v4009 = vmul.f32 1.0, %v4008
        %v4010 = vrcp.pop %v3959
        %v4011 = vmul.f32 1.0, %v4010
        %v4012 = vrcp.pop %v3960
        %v4013 = vmul.f32 1.0, %v4012
        %v4014 = vrcp.pop %v3961
        %v4015 = vmul.f32 1.0, %v4014
        %v4016 = vrcp.pop %v3962
        %v4017 = vmul.f32 1.0, %v4016
        %v4018 = vrcp.pop %v3963
        %v4019 = vmul.f32 1.0, %v4018
        %v4020 = vrcp.pop %v3964
        %v4021 = vmul.f32 1.0, %v4020
        %v4022 = vrcp.pop %v3965
        %v4023 = vmul.f32 1.0, %v4022
        %v4024 = vrcp.pop %v3966
        %v4025 = vmul.f32 1.0, %v4024
        %v4026 = vrcp.pop %v3967
        %v4027 = vmul.f32 1.0, %v4026
        %v4028 = vrcp.pop %v3968
        %v4029 = vmul.f32 1.0, %v4028
        %v4030 = vrcp.pop %v3969
        %v4031 = vmul.f32 1.0, %v4030
        %v4032 = vrcp.pop %v3970
        %v4033 = vmul.f32 1.0, %v4032
        %v4034 = vrcp.pop %v3971
        %v4035 = vmul.f32 1.0, %v4034
        %v4036 = vmul.f32 %v3812, %v3973
        %v4037 = vmul.f32 %v3813, %v3975
        %v4038 = vmul.f32 %v3814, %v3977
        %v4039 = vmul.f32 %v3815, %v3979
        %v4040 = vmul.f32 %v3816, %v3981
        %v4041 = vmul.f32 %v3817, %v3983
        %v4042 = vmul.f32 %v3818, %v3985
        %v4043 = vmul.f32 %v3819, %v3987
        %v4044 = vmul.f32 %v3820, %v3989
        %v4045 = vmul.f32 %v3821, %v3991
        %v4046 = vmul.f32 %v3822, %v3993
        %v4047 = vmul.f32 %v3823, %v3995
        %v4048 = vmul.f32 %v3824, %v3997
        %v4049 = vmul.f32 %v3825, %v3999
        %v4050 = vmul.f32 %v3826, %v4001
        %v4051 = vmul.f32 %v3827, %v4003
        %v4052 = vmul.f32 %v3828, %v4005
        %v4053 = vmul.f32 %v3829, %v4007
        %v4054 = vmul.f32 %v3830, %v4009
        %v4055 = vmul.f32 %v3831, %v4011
        %v4056 = vmul.f32 %v3832, %v4013
        %v4057 = vmul.f32 %v3833, %v4015
        %v4058 = vmul.f32 %v3834, %v4017
        %v4059 = vmul.f32 %v3835, %v4019
        %v4060 = vmul.f32 %v3836, %v4021
        %v4061 = vmul.f32 %v3837, %v4023
        %v4062 = vmul.f32 %v3838, %v4025
        %v4063 = vmul.f32 %v3839, %v4027
        %v4064 = vmul.f32 %v3840, %v4029
        %v4065 = vmul.f32 %v3841, %v4031
        %v4066 = vmul.f32 %v3842, %v4033
        %v4067 = vmul.f32 %v3843, %v4035
        %vm4068 = vcmask 64512
        %4069 = vst.msk [vmem:[%s294] sm:$0xff] %vm4068, %v4036
        %4070 = vst.msk [vmem:[%s294 + $0x8] sm:$0xff] %vm4068, %v4037
        %4071 = vst.msk [vmem:[%s294 + $0x10] sm:$0xff] %vm4068, %v4038
        %4072 = vst.msk [vmem:[%s294 + $0x18] sm:$0xff] %vm4068, %v4039
        %4073 = vst.msk [vmem:[%s294 + $0x20] sm:$0xff] %vm4068, %v4040
        %4074 = vst.msk [vmem:[%s294 + $0x28] sm:$0xff] %vm4068, %v4041
        %4075 = vst.msk [vmem:[%s294 + $0x30] sm:$0xff] %vm4068, %v4042
        %4076 = vst.msk [vmem:[%s294 + $0x38] sm:$0xff] %vm4068, %v4043
        %4077 = vst.msk [vmem:[%s294 + $0x40] sm:$0xff] %vm4068, %v4044
        %4078 = vst.msk [vmem:[%s294 + $0x48] sm:$0xff] %vm4068, %v4045
        %4079 = vst.msk [vmem:[%s294 + $0x50] sm:$0xff] %vm4068, %v4046
        %4080 = vst.msk [vmem:[%s294 + $0x58] sm:$0xff] %vm4068, %v4047
        %4081 = vst.msk [vmem:[%s294 + $0x60] sm:$0xff] %vm4068, %v4048
        %4082 = vst.msk [vmem:[%s294 + $0x68] sm:$0xff] %vm4068, %v4049
        %4083 = vst.msk [vmem:[%s294 + $0x70] sm:$0xff] %vm4068, %v4050
        %4084 = vst.msk [vmem:[%s294 + $0x78] sm:$0xff] %vm4068, %v4051
        %4085 = vst.msk [vmem:[%s294 + $0x80] sm:$0xff] %vm4068, %v4052
        %4086 = vst.msk [vmem:[%s294 + $0x88] sm:$0xff] %vm4068, %v4053
        %4087 = vst.msk [vmem:[%s294 + $0x90] sm:$0xff] %vm4068, %v4054
        %4088 = vst.msk [vmem:[%s294 + $0x98] sm:$0xff] %vm4068, %v4055
        %4089 = vst.msk [vmem:[%s294 + $0xa0] sm:$0xff] %vm4068, %v4056
        %4090 = vst.msk [vmem:[%s294 + $0xa8] sm:$0xff] %vm4068, %v4057
        %4091 = vst.msk [vmem:[%s294 + $0xb0] sm:$0xff] %vm4068, %v4058
        %4092 = vst.msk [vmem:[%s294 + $0xb8] sm:$0xff] %vm4068, %v4059
        %4093 = vst.msk [vmem:[%s294 + $0xc0] sm:$0xff] %vm4068, %v4060
        %4094 = vst.msk [vmem:[%s294 + $0xc8] sm:$0xff] %vm4068, %v4061
        %4095 = vst.msk [vmem:[%s294 + $0xd0] sm:$0xff] %vm4068, %v4062
        %4096 = vst.msk [vmem:[%s294 + $0xd8] sm:$0xff] %vm4068, %v4063
        %4097 = vst.msk [vmem:[%s294 + $0xe0] sm:$0xff] %vm4068, %v4064
        %4098 = vst.msk [vmem:[%s294 + $0xe8] sm:$0xff] %vm4068, %v4065
        %4099 = vst.msk [vmem:[%s294 + $0xf0] sm:$0xff] %vm4068, %v4066
        %4100 = vst.msk [vmem:[%s294 + $0xf8] sm:$0xff] %vm4068, %v4067
        %s4101 = sand.u32 %s142, 1
        %s4102 = scalar_lea.sflag [#allocation6], %s4101
        %s4103 = sand.u32 %s142, 1
        %s4104 = smul.addr %s4103, 256
        %s4105 = scalar_lea.vmem [#allocation13], %s4104
        // Predicated region
        $region61: #{spp_forward.1} parent=39 // pred_check
          %p4106 = pneg %p152
        $region62: #{spp_forward.1} parent=39 // pred_check_branch
          %4108 = sbr.rel (%p4106) target = $region64
        $region63: #{spp_forward.1} parent=39 // pred_region
          %s4110 = ssub.s32 4096, 4096
          %4111 = vsyncadd %s4102, %s4110
          %s4112 = smul.addr %s24, 32
          %s4113 = smul.addr %s4112, 128
          %s4114 = scalar_lea.hbm %s5, %s4113
          %s4115 = sshll.u32 %s4105, 4
          %s4116 = int_to_ptr.vmem [resolvable:$true] %s4115
          %4121 = dma.vmem_to_hbm [thread:$0]  %s4116, 4096, %s4114, %s4102, 128, 128, 8
        $region64: #{spp_forward.1} parent=39 // pred_fallthru
          _
      $region40: #{spp_forward.1} parent=5 // pred_fallthru
        _
      %p4122 = scmp.le.s32.totalorder 2, %s19
      // Predicated region
      $region65: #{spp_forward.1} parent=5 // pred_check
        %p4123 = pneg %p4122
      $region66: #{spp_forward.1} parent=5 // pred_check_branch
        %4125 = sbr.rel (%p4123) target = $region68
      $region67: #{spp_forward.1} parent=5 // pred_region
        %s4126 = ssub.s32 %s19, 2
        // Predicated region
        $region69: #{spp_forward.1} parent=67 // pred_check
          %p4127 = pneg %p158
        $region70: #{spp_forward.1} parent=67 // pred_check_branch
          %4129 = sbr.rel (%p4127) target = $region72
        $region71: #{spp_forward.1} parent=67 // pred_region
          %s4130 = sand.u32 %s143, 1
          %s4131 = scalar_lea.sflag [#allocation6], %s4130
          %s4132 = sand.u32 %s143, 1
          %s4133 = smul.addr %s4132, 256
          %s4134 = scalar_lea.vmem [#allocation13], %s4133
          %4135 = dma.done %s4131, 4096
        $region72: #{spp_forward.1} parent=67 // pred_fallthru
          _
      $region68: #{spp_forward.1} parent=5 // pred_fallthru
        _
    $region6: #{spp_forward.1} parent=1 // loop_footer
      %s23 = sadd.s32 1, %s19
    $region7: #{spp_forward.1} parent=1 // loop_footer_branch
      %18 = sbr.rel target = $region3
    $region8: #{spp_forward.1} parent=1 // loop_exit
      _
    %4136 = vsyncpa [#allocation5], 1
    %s4137 = scalar_lea.sflag [#allocation5], 1
    %4138 = vsyncpa %s4137, 1
    %4139 = vsyncpa [#allocation8], 1
    %4140 = vsyncpa [#allocation11], 1
    %4141 = vsyncpa [#allocation6], 1
    %s4142 = scalar_lea.sflag [#allocation6], 1
    %4143 = vsyncpa %s4142, 1

</llo_original>
